<compile_context>
chip_gen: v7x
topology: tpu7x:2x2x1
jax: 0.10.0
libtpu: 0.0.40
codegen_flags: <defaults>
</compile_context>

<pallas_src>
import jax
import jax.numpy as jnp
from jax.experimental import pallas as pl
from jax.experimental.pallas import tpu as pltpu

EPS = 1e-5
C_MAX = 128   # widest channel count; size of the packed bias/gamma/beta array

# encoder: Conv1d(1,32,9,s2,p4) / Conv1d(32,64,7,s2,p3) / Conv1d(64,128,5,s2,p2)
ENC_CFG = [(1, 32, 9, 2, 4), (32, 64, 7, 2, 3), (64, 128, 5, 2, 2)]
# decoder: ConvT(128,64,5,s2,p2,op1) / ConvT(64,32,7,s2,p3,op1) / ConvT(32,1,9,s2,p4,op1)
DEC_CFG = [(128, 64, 5, 2, 2, 1), (64, 32, 7, 2, 3, 1), (32, 1, 9, 2, 4, 1)]


# --------------------------- layer plan & constants --------------------------- #

def _layer_plan(L):
    plan, l_in = [], L
    for (c_in, c_out, k, s, p) in ENC_CFG:
        l_out = (l_in + 2 * p - k) // s + 1
        plan.append(dict(kind="conv", k=k, s=s, p=p, c_in=c_in, c_out=c_out,
                         l_in=l_in, l_out=l_out, bn=True))
        l_in = l_out
    for idx, (c_in, c_out, k, s, p, op) in enumerate(DEC_CFG):
        l_out = (l_in - 1) * s - 2 * p + k + op
        plan.append(dict(kind="convT", k=k, s=s, p=p, op=op, c_in=c_in, c_out=c_out,
                         l_in=l_in, l_out=l_out, bn=(idx < 2)))
        l_in = l_out
    return plan


def _selection_matrix(lp, n_batch):
    """Batch-folded 0/1 matrix T (N*l_in, k*N*l_out).  Column (t, n, j) picks the input sample
    (n, i) feeding tap t of output position j of batch element n.  An all-zero column encodes
    zero padding / dilation zeros / output padding."""
    l_in, l_out, k = lp["l_in"], lp["l_out"], lp["k"]
    rows = jnp.arange(n_batch * l_in, dtype=jnp.int32)[:, None]
    n_r, i = rows // l_in, rows % l_in
    cols = jnp.arange(k * n_batch * l_out, dtype=jnp.int32)[None, :]
    t = cols // (n_batch * l_out)
    rem = cols % (n_batch * l_out)
    n_c, j = rem // l_out, rem % l_out
    if lp["kind"] == "conv":                       # y[j] += x[s*j + t - p] * w[t]
        hit = i == lp["s"] * j + t - lp["p"]
    else:                                          # ConvT == dilate(s) + pad(k-1-p) + flipped conv
        q = lp["k"] - 1 - lp["p"]
        hit = i * lp["s"] == j + t - q
    return (hit & (n_r == n_c)).astype(jnp.bfloat16)


# ------------------------------- fused kernel -------------------------------- #

def _make_kernel(plan, n_batch):
    n_layers = len(plan)

    def kernel(x_ref, *refs):
        t_refs = refs[:n_layers]
        w_refs = refs[n_layers:2 * n_layers]
        bgb_ref = refs[2 * n_layers]
        o_ref = refs[2 * n_layers + 1]

        a = x_ref[...].astype(jnp.bfloat16)                       # (1, N*L), length on lanes
        for li, lp in enumerate(plan):
            k, c_out, l_out = lp["k"], lp["c_out"], lp["l_out"]
            nl_out = n_batch * l_out
            t_mat = t_refs[li][...]                               # (N*l_in, k*N*l_out) bf16
            w_mat = w_refs[li][...]                               # (c_out, k*c_in)     bf16

            # Gather all taps for the whole batch with one matmul (exact 0/1 gather).
            g = jnp.dot(a, t_mat, preferred_element_type=jnp.float32)      # (c_in, k*N*l_out)
            p_all = jnp.concatenate(
                [g[:, t * nl_out:(t + 1) * nl_out] for t in range(k)], axis=0
            ).astype(jnp.bfloat16)                                          # (k*c_in, N*l_out)

            y = jnp.dot(w_mat, p_all, preferred_element_type=jnp.float32)  # (c_out, N*l_out) f32
            b = bgb_ref[li, 0:c_out, 0:1]                                   # (c_out, 1)
            if lp["bn"]:
                gam = bgb_ref[li, 0:c_out, 1:2]
                bet = bgb_ref[li, 0:c_out, 2:3]
                y = jnp.maximum(y + b, 0.0)                                 # bias + ReLU
                inv_cnt = 1.0 / nl_out
                mean = jnp.sum(y, axis=1, keepdims=True) * inv_cnt          # one-pass stats
                var = jnp.sum(y * y, axis=1, keepdims=True) * inv_cnt - mean * mean
                var = jnp.maximum(var, 0.0)
                scale = gam * jax.lax.rsqrt(var + EPS)                      # folded BN affine
                shift = bet - mean * scale
                a = (y * scale + shift).astype(jnp.bfloat16)
            else:
                o_ref[...] = jnp.tanh(y + b)                                # (1, N*L) f32, lane-dense

    return kernel


def autoencoder_forward(x, params):
    n, L = x.shape
    plan = _layer_plan(L)
    t_mats = [_selection_matrix(lp, n) for lp in plan]
    l_final = plan[-1]["l_out"]
    x2 = x.astype(jnp.float32).reshape(1, n * L)                  # batch-major lane layout

    vmem = pl.BlockSpec(memory_space=pltpu.MemorySpace.VMEM)
    out = pl.pallas_call(
        _make_kernel(plan, n),
        out_shape=jax.ShapeDtypeStruct((1, n * l_final), jnp.float32),
        in_specs=[vmem] * (2 + 2 * len(plan)),
        out_specs=vmem,
    )(x2, *t_mats, *params["W"], params["bgb"])
    return out.reshape(n, l_final)


# ----------------------------- parameter setup -------------------------------- #

def init_params(key):
    """PyTorch-style init; returns raw f32 weights (for the reference) plus the kernel-ready
    bf16 weight matrices and the packed (6, 128, 3) bias/gamma/beta array."""
    keys = jax.random.split(key, 12)
    raw, w_list = [], []
    bgb = jnp.zeros((6, C_MAX, 3), jnp.float32)
    ki = 0
    for li, (c_in, c_out, k, _s, _p) in enumerate(ENC_CFG):
        bound = 1.0 / (c_in * k) ** 0.5
        w = jax.random.uniform(keys[ki], (c_out, c_in, k), jnp.float32, -bound, bound)
        b = jax.random.uniform(keys[ki + 1], (c_out,), jnp.float32, -bound, bound)
        ki += 2
        raw.append((w, b))
        # column (t*c_in + ci) of W_flat = weight[co, ci, t]
        w_list.append(jnp.transpose(w, (0, 2, 1)).reshape(c_out, k * c_in).astype(jnp.bfloat16))
        bgb = bgb.at[li, :c_out, 0].set(b)
        bgb = bgb.at[li, :c_out, 1].set(1.0)          # gamma=1, beta=0 (fresh BatchNorm1d)
    for di, (c_in, c_out, k, _s, _p, _op) in enumerate(DEC_CFG):
        li = 3 + di
        bound = 1.0 / (c_out * k) ** 0.5              # ConvTranspose fan_in = C_out * k
        w = jax.random.uniform(keys[ki], (c_in, c_out, k), jnp.float32, -bound, bound)
        b = jax.random.uniform(keys[ki + 1], (c_out,), jnp.float32, -bound, bound)
        ki += 2
        raw.append((w, b))
        # equivalent-conv (flipped) weight: column (t*c_in + ci) = weight[ci, co, k-1-t]
        w_list.append(jnp.transpose(w[:, :, ::-1], (1, 2, 0))
                      .reshape(c_out, k * c_in).astype(jnp.bfloat16))
        bgb = bgb.at[li, :c_out, 0].set(b)
        if di < 2:
            bgb = bgb.at[li, :c_out, 1].set(1.0)
    return {"raw": raw, "W": w_list, "bgb": bgb}


# -------------------------- pure-JAX f32 reference ---------------------------- #

def _ref_im2col(x_nlc, k, stride, pad):
    n, l, c = x_nlc.shape
    xp = jnp.pad(x_nlc, ((0, 0), (pad, pad), (0, 0)))
    l_out = (l + 2 * pad - k) // stride + 1
    cols = [xp[:, t:t + stride * l_out:stride, :] for t in range(k)]
    return jnp.stack(cols, axis=2).reshape(n, l_out, k * c)


def _ref_forward(x, raw):
    h = x.astype(jnp.float32)[:, :, None]                         # (N, L, 1)
    for (c_in, c_out, k, s, p), (w, b) in zip(ENC_CFG, raw[:3]):
        wm = jnp.transpose(w, (2, 1, 0)).reshape(k * c_in, c_out)
        y = _ref_im2col(h, k, s, p) @ wm + b
        y = jnp.maximum(y, 0.0)
        m = y.mean(axis=(0, 1))
        v = ((y - m) ** 2).mean(axis=(0, 1))
        h = (y - m) * jax.lax.rsqrt(v + EPS)
    for idx, ((c_in, c_out, k, s, p, op), (w, b)) in enumerate(zip(DEC_CFG, raw[3:])):
        n, l, c = h.shape
        d = jnp.zeros((n, (l - 1) * s + 1 + op, c), h.dtype).at[:, ::s, :].set(h)
        wm = jnp.transpose(w[:, :, ::-1], (2, 0, 1)).reshape(k * c_in, c_out)
        y = _ref_im2col(d, k, 1, k - 1 - p) @ wm + b
        if idx < 2:
            y = jnp.maximum(y, 0.0)
            m = y.mean(axis=(0, 1))
            v = ((y - m) ** 2).mean(axis=(0, 1))
            h = (y - m) * jax.lax.rsqrt(v + EPS)
        else:
            h = jnp.tanh(y)
    return h[:, :, 0]


# ----------------------------------- main -------------------------------------- #

if __name__ == "__main__":
    key = jax.random.PRNGKey(0)
    kx, kp = jax.random.split(key)
    N, L = 2, 128                        # 128 -> 64 -> 32 -> 16 -> 32 -> 64 -> 128
    x = jax.random.normal(kx, (N, L), jnp.float32)
    params = init_params(kp)

    y = jax.block_until_ready(jax.jit(autoencoder_forward)(x, params))
    assert y.shape == (N, L) and y.dtype == jnp.float32
    assert bool(jnp.all(jnp.isfinite(y)))
    assert bool(jnp.all(jnp.abs(y) <= 1.0))          # tanh output range (tanh kept in f32)

    y_ref = _ref_forward(x, params["raw"])           # f32 reference (kernel uses bf16 matmuls)
    err = float(jnp.max(jnp.abs(y - y_ref)))
    assert err < 0.2, f"mismatch vs f32 reference: {err}"
    print("KERNEL_OK")
</pallas_src>

<mosaic_0001>
module attributes {stable_mosaic.version = 11 : i64} {
  func.func @kernel(%arg0: memref<1x256xf32, #tpu.memory_space<vmem>>, %arg1: memref<256x1152xbf16, #tpu.memory_space<vmem>>, %arg2: memref<128x448xbf16, #tpu.memory_space<vmem>>, %arg3: memref<64x160xbf16, #tpu.memory_space<vmem>>, %arg4: memref<32x320xbf16, #tpu.memory_space<vmem>>, %arg5: memref<64x896xbf16, #tpu.memory_space<vmem>>, %arg6: memref<128x2304xbf16, #tpu.memory_space<vmem>>, %arg7: memref<32x9xbf16, #tpu.memory_space<vmem>>, %arg8: memref<64x224xbf16, #tpu.memory_space<vmem>>, %arg9: memref<128x320xbf16, #tpu.memory_space<vmem>>, %arg10: memref<64x640xbf16, #tpu.memory_space<vmem>>, %arg11: memref<32x448xbf16, #tpu.memory_space<vmem>>, %arg12: memref<1x288xbf16, #tpu.memory_space<vmem>>, %arg13: memref<6x128x3xf32, #tpu.memory_space<vmem>>, %arg14: memref<1x256xf32, #tpu.memory_space<vmem>>) attributes {dimension_semantics = [], scalar_prefetch = 0 : i64, scratch_operands = 0 : i64, tpu.core_type = #tpu.core_type<tc>} {
    %c0 = arith.constant 0 : index
    %c0_0 = arith.constant 0 : index
    %0 = vector.load %arg0[%c0, %c0_0] : memref<1x256xf32, #tpu.memory_space<vmem>>, vector<1x256xf32>
    %1 = arith.truncf %0 : vector<1x256xf32> to vector<1x256xbf16>
    %c0_1 = arith.constant 0 : index
    %c0_2 = arith.constant 0 : index
    %2 = vector.load %arg1[%c0_1, %c0_2] : memref<256x1152xbf16, #tpu.memory_space<vmem>>, vector<256x1152xbf16>
    %c0_3 = arith.constant 0 : index
    %c0_4 = arith.constant 0 : index
    %3 = vector.load %arg7[%c0_3, %c0_4] : memref<32x9xbf16, #tpu.memory_space<vmem>>, vector<32x9xbf16>
    %cst = arith.constant dense<0.000000e+00> : vector<1x1152xf32>
    %4 = tpu.matmul %1, %2, %cst {dimension_numbers = #tpu.dot_dimension_numbers<[1], [0], [0], [1], [0, 0, 1, 1], [], []>} : vector<1x256xbf16>, vector<256x1152xbf16>, vector<1x1152xf32> -> vector<1x1152xf32>
    %5 = vector.extract_strided_slice %4 {offsets = [0, 0], sizes = [1, 128], strides = [1, 1]} : vector<1x1152xf32> to vector<1x128xf32>
    %6 = vector.extract_strided_slice %4 {offsets = [0, 128], sizes = [1, 128], strides = [1, 1]} : vector<1x1152xf32> to vector<1x128xf32>
    %7 = vector.extract_strided_slice %4 {offsets = [0, 256], sizes = [1, 128], strides = [1, 1]} : vector<1x1152xf32> to vector<1x128xf32>
    %8 = vector.extract_strided_slice %4 {offsets = [0, 384], sizes = [1, 128], strides = [1, 1]} : vector<1x1152xf32> to vector<1x128xf32>
    %9 = vector.extract_strided_slice %4 {offsets = [0, 512], sizes = [1, 128], strides = [1, 1]} : vector<1x1152xf32> to vector<1x128xf32>
    %10 = vector.extract_strided_slice %4 {offsets = [0, 640], sizes = [1, 128], strides = [1, 1]} : vector<1x1152xf32> to vector<1x128xf32>
    %11 = vector.extract_strided_slice %4 {offsets = [0, 768], sizes = [1, 128], strides = [1, 1]} : vector<1x1152xf32> to vector<1x128xf32>
    %12 = vector.extract_strided_slice %4 {offsets = [0, 896], sizes = [1, 128], strides = [1, 1]} : vector<1x1152xf32> to vector<1x128xf32>
    %13 = vector.extract_strided_slice %4 {offsets = [0, 1024], sizes = [1, 128], strides = [1, 1]} : vector<1x1152xf32> to vector<1x128xf32>
    %14 = tpu.concatenate %5, %6, %7, %8, %9, %10, %11, %12, %13 in 0 : vector<1x128xf32>, vector<1x128xf32>, vector<1x128xf32>, vector<1x128xf32>, vector<1x128xf32>, vector<1x128xf32>, vector<1x128xf32>, vector<1x128xf32>, vector<1x128xf32> -> vector<9x128xf32>
    %15 = arith.truncf %14 : vector<9x128xf32> to vector<9x128xbf16>
    %cst_5 = arith.constant dense<0.000000e+00> : vector<32x128xf32>
    %16 = tpu.matmul %3, %15, %cst_5 {dimension_numbers = #tpu.dot_dimension_numbers<[1], [0], [0], [1], [0, 0, 1, 1], [], []>} : vector<32x9xbf16>, vector<9x128xbf16>, vector<32x128xf32> -> vector<32x128xf32>
    %c0_6 = arith.constant 0 : index
    %c0_7 = arith.constant 0 : index
    %c0_8 = arith.constant 0 : index
    %17 = vector.load %arg13[%c0_6, %c0_7, %c0_8] : memref<6x128x3xf32, #tpu.memory_space<vmem>>, vector<1x32x1xf32>
    %18 = vector.shape_cast %17 : vector<1x32x1xf32> to vector<32x1xf32>
    %c0_9 = arith.constant 0 : index
    %c0_10 = arith.constant 0 : index
    %c1 = arith.constant 1 : index
    %19 = vector.load %arg13[%c0_9, %c0_10, %c1] : memref<6x128x3xf32, #tpu.memory_space<vmem>>, vector<1x32x1xf32>
    %20 = vector.shape_cast %19 : vector<1x32x1xf32> to vector<32x1xf32>
    %c0_11 = arith.constant 0 : index
    %c0_12 = arith.constant 0 : index
    %c2 = arith.constant 2 : index
    %21 = vector.load %arg13[%c0_11, %c0_12, %c2] : memref<6x128x3xf32, #tpu.memory_space<vmem>>, vector<1x32x1xf32>
    %22 = vector.shape_cast %21 : vector<1x32x1xf32> to vector<32x1xf32>
    %23 = vector.broadcast %18 : vector<32x1xf32> to vector<32x128xf32>
    %24 = arith.addf %16, %23 : vector<32x128xf32>
    %cst_13 = arith.constant 0.000000e+00 : f32
    %25 = vector.broadcast %cst_13 : f32 to vector<32x128xf32>
    %26 = arith.maximumf %24, %25 : vector<32x128xf32>
    %cst_14 = arith.constant dense<0.000000e+00> : vector<32xf32>
    %27 = vector.multi_reduction <add>, %26, %cst_14 [1] : vector<32x128xf32> to vector<32xf32>
    %28 = vector.shape_cast %27 : vector<32xf32> to vector<32x1xf32>
    %cst_15 = arith.constant 7.812500e-03 : f32
    %29 = vector.broadcast %cst_15 : f32 to vector<32x1xf32>
    %30 = arith.mulf %28, %29 : vector<32x1xf32>
    %31 = arith.mulf %26, %26 : vector<32x128xf32>
    %cst_16 = arith.constant dense<0.000000e+00> : vector<32xf32>
    %32 = vector.multi_reduction <add>, %31, %cst_16 [1] : vector<32x128xf32> to vector<32xf32>
    %33 = vector.shape_cast %32 : vector<32xf32> to vector<32x1xf32>
    %cst_17 = arith.constant 7.812500e-03 : f32
    %34 = vector.broadcast %cst_17 : f32 to vector<32x1xf32>
    %35 = arith.mulf %33, %34 : vector<32x1xf32>
    %36 = arith.mulf %30, %30 : vector<32x1xf32>
    %37 = arith.subf %35, %36 : vector<32x1xf32>
    %cst_18 = arith.constant 0.000000e+00 : f32
    %38 = vector.broadcast %cst_18 : f32 to vector<32x1xf32>
    %39 = arith.maximumf %37, %38 : vector<32x1xf32>
    %cst_19 = arith.constant 9.99999974E-6 : f32
    %40 = vector.broadcast %cst_19 : f32 to vector<32x1xf32>
    %41 = arith.addf %39, %40 : vector<32x1xf32>
    %42 = math.rsqrt %41 : vector<32x1xf32>
    %43 = arith.mulf %20, %42 : vector<32x1xf32>
    %44 = arith.mulf %30, %43 : vector<32x1xf32>
    %45 = arith.subf %22, %44 : vector<32x1xf32>
    %46 = vector.broadcast %43 : vector<32x1xf32> to vector<32x128xf32>
    %47 = arith.mulf %26, %46 : vector<32x128xf32>
    %48 = vector.broadcast %45 : vector<32x1xf32> to vector<32x128xf32>
    %49 = arith.addf %47, %48 : vector<32x128xf32>
    %50 = arith.truncf %49 : vector<32x128xf32> to vector<32x128xbf16>
    %c0_20 = arith.constant 0 : index
    %c0_21 = arith.constant 0 : index
    %51 = vector.load %arg2[%c0_20, %c0_21] : memref<128x448xbf16, #tpu.memory_space<vmem>>, vector<128x448xbf16>
    %c0_22 = arith.constant 0 : index
    %c0_23 = arith.constant 0 : index
    %52 = vector.load %arg8[%c0_22, %c0_23] : memref<64x224xbf16, #tpu.memory_space<vmem>>, vector<64x224xbf16>
    %cst_24 = arith.constant dense<0.000000e+00> : vector<32x448xf32>
    %53 = tpu.matmul %50, %51, %cst_24 {dimension_numbers = #tpu.dot_dimension_numbers<[1], [0], [0], [1], [0, 0, 1, 1], [], []>} : vector<32x128xbf16>, vector<128x448xbf16>, vector<32x448xf32> -> vector<32x448xf32>
    %54 = vector.extract_strided_slice %53 {offsets = [0, 0], sizes = [32, 64], strides = [1, 1]} : vector<32x448xf32> to vector<32x64xf32>
    %55 = vector.extract_strided_slice %53 {offsets = [0, 64], sizes = [32, 64], strides = [1, 1]} : vector<32x448xf32> to vector<32x64xf32>
    %56 = vector.extract_strided_slice %53 {offsets = [0, 128], sizes = [32, 64], strides = [1, 1]} : vector<32x448xf32> to vector<32x64xf32>
    %57 = vector.extract_strided_slice %53 {offsets = [0, 192], sizes = [32, 64], strides = [1, 1]} : vector<32x448xf32> to vector<32x64xf32>
    %58 = vector.extract_strided_slice %53 {offsets = [0, 256], sizes = [32, 64], strides = [1, 1]} : vector<32x448xf32> to vector<32x64xf32>
    %59 = vector.extract_strided_slice %53 {offsets = [0, 320], sizes = [32, 64], strides = [1, 1]} : vector<32x448xf32> to vector<32x64xf32>
    %60 = vector.extract_strided_slice %53 {offsets = [0, 384], sizes = [32, 64], strides = [1, 1]} : vector<32x448xf32> to vector<32x64xf32>
    %61 = tpu.concatenate %54, %55, %56, %57, %58, %59, %60 in 0 : vector<32x64xf32>, vector<32x64xf32>, vector<32x64xf32>, vector<32x64xf32>, vector<32x64xf32>, vector<32x64xf32>, vector<32x64xf32> -> vector<224x64xf32>
    %62 = arith.truncf %61 : vector<224x64xf32> to vector<224x64xbf16>
    %cst_25 = arith.constant dense<0.000000e+00> : vector<64x64xf32>
    %63 = tpu.matmul %52, %62, %cst_25 {dimension_numbers = #tpu.dot_dimension_numbers<[1], [0], [0], [1], [0, 0, 1, 1], [], []>} : vector<64x224xbf16>, vector<224x64xbf16>, vector<64x64xf32> -> vector<64x64xf32>
    %c1_26 = arith.constant 1 : index
    %c0_27 = arith.constant 0 : index
    %c0_28 = arith.constant 0 : index
    %64 = vector.load %arg13[%c1_26, %c0_27, %c0_28] : memref<6x128x3xf32, #tpu.memory_space<vmem>>, vector<1x64x1xf32>
    %65 = vector.shape_cast %64 : vector<1x64x1xf32> to vector<64x1xf32>
    %c1_29 = arith.constant 1 : index
    %c0_30 = arith.constant 0 : index
    %c1_31 = arith.constant 1 : index
    %66 = vector.load %arg13[%c1_29, %c0_30, %c1_31] : memref<6x128x3xf32, #tpu.memory_space<vmem>>, vector<1x64x1xf32>
    %67 = vector.shape_cast %66 : vector<1x64x1xf32> to vector<64x1xf32>
    %c1_32 = arith.constant 1 : index
    %c0_33 = arith.constant 0 : index
    %c2_34 = arith.constant 2 : index
    %68 = vector.load %arg13[%c1_32, %c0_33, %c2_34] : memref<6x128x3xf32, #tpu.memory_space<vmem>>, vector<1x64x1xf32>
    %69 = vector.shape_cast %68 : vector<1x64x1xf32> to vector<64x1xf32>
    %70 = vector.broadcast %65 : vector<64x1xf32> to vector<64x64xf32>
    %71 = arith.addf %63, %70 : vector<64x64xf32>
    %cst_35 = arith.constant 0.000000e+00 : f32
    %72 = vector.broadcast %cst_35 : f32 to vector<64x64xf32>
    %73 = arith.maximumf %71, %72 : vector<64x64xf32>
    %cst_36 = arith.constant dense<0.000000e+00> : vector<64xf32>
    %74 = vector.multi_reduction <add>, %73, %cst_36 [1] : vector<64x64xf32> to vector<64xf32>
    %75 = vector.shape_cast %74 : vector<64xf32> to vector<64x1xf32>
    %cst_37 = arith.constant 1.562500e-02 : f32
    %76 = vector.broadcast %cst_37 : f32 to vector<64x1xf32>
    %77 = arith.mulf %75, %76 : vector<64x1xf32>
    %78 = arith.mulf %73, %73 : vector<64x64xf32>
    %cst_38 = arith.constant dense<0.000000e+00> : vector<64xf32>
    %79 = vector.multi_reduction <add>, %78, %cst_38 [1] : vector<64x64xf32> to vector<64xf32>
    %80 = vector.shape_cast %79 : vector<64xf32> to vector<64x1xf32>
    %cst_39 = arith.constant 1.562500e-02 : f32
    %81 = vector.broadcast %cst_39 : f32 to vector<64x1xf32>
    %82 = arith.mulf %80, %81 : vector<64x1xf32>
    %83 = arith.mulf %77, %77 : vector<64x1xf32>
    %84 = arith.subf %82, %83 : vector<64x1xf32>
    %cst_40 = arith.constant 0.000000e+00 : f32
    %85 = vector.broadcast %cst_40 : f32 to vector<64x1xf32>
    %86 = arith.maximumf %84, %85 : vector<64x1xf32>
    %cst_41 = arith.constant 9.99999974E-6 : f32
    %87 = vector.broadcast %cst_41 : f32 to vector<64x1xf32>
    %88 = arith.addf %86, %87 : vector<64x1xf32>
    %89 = math.rsqrt %88 : vector<64x1xf32>
    %90 = arith.mulf %67, %89 : vector<64x1xf32>
    %91 = arith.mulf %77, %90 : vector<64x1xf32>
    %92 = arith.subf %69, %91 : vector<64x1xf32>
    %93 = vector.broadcast %90 : vector<64x1xf32> to vector<64x64xf32>
    %94 = arith.mulf %73, %93 : vector<64x64xf32>
    %95 = vector.broadcast %92 : vector<64x1xf32> to vector<64x64xf32>
    %96 = arith.addf %94, %95 : vector<64x64xf32>
    %97 = arith.truncf %96 : vector<64x64xf32> to vector<64x64xbf16>
    %c0_42 = arith.constant 0 : index
    %c0_43 = arith.constant 0 : index
    %98 = vector.load %arg3[%c0_42, %c0_43] : memref<64x160xbf16, #tpu.memory_space<vmem>>, vector<64x160xbf16>
    %c0_44 = arith.constant 0 : index
    %c0_45 = arith.constant 0 : index
    %99 = vector.load %arg9[%c0_44, %c0_45] : memref<128x320xbf16, #tpu.memory_space<vmem>>, vector<128x320xbf16>
    %cst_46 = arith.constant dense<0.000000e+00> : vector<64x160xf32>
    %100 = tpu.matmul %97, %98, %cst_46 {dimension_numbers = #tpu.dot_dimension_numbers<[1], [0], [0], [1], [0, 0, 1, 1], [], []>} : vector<64x64xbf16>, vector<64x160xbf16>, vector<64x160xf32> -> vector<64x160xf32>
    %101 = vector.extract_strided_slice %100 {offsets = [0, 0], sizes = [64, 32], strides = [1, 1]} : vector<64x160xf32> to vector<64x32xf32>
    %102 = vector.extract_strided_slice %100 {offsets = [0, 32], sizes = [64, 32], strides = [1, 1]} : vector<64x160xf32> to vector<64x32xf32>
    %103 = vector.extract_strided_slice %100 {offsets = [0, 64], sizes = [64, 32], strides = [1, 1]} : vector<64x160xf32> to vector<64x32xf32>
    %104 = vector.extract_strided_slice %100 {offsets = [0, 96], sizes = [64, 32], strides = [1, 1]} : vector<64x160xf32> to vector<64x32xf32>
    %105 = vector.extract_strided_slice %100 {offsets = [0, 128], sizes = [64, 32], strides = [1, 1]} : vector<64x160xf32> to vector<64x32xf32>
    %106 = tpu.concatenate %101, %102, %103, %104, %105 in 0 : vector<64x32xf32>, vector<64x32xf32>, vector<64x32xf32>, vector<64x32xf32>, vector<64x32xf32> -> vector<320x32xf32>
    %107 = arith.truncf %106 : vector<320x32xf32> to vector<320x32xbf16>
    %cst_47 = arith.constant dense<0.000000e+00> : vector<128x32xf32>
    %108 = tpu.matmul %99, %107, %cst_47 {dimension_numbers = #tpu.dot_dimension_numbers<[1], [0], [0], [1], [0, 0, 1, 1], [], []>} : vector<128x320xbf16>, vector<320x32xbf16>, vector<128x32xf32> -> vector<128x32xf32>
    %c2_48 = arith.constant 2 : index
    %c0_49 = arith.constant 0 : index
    %c0_50 = arith.constant 0 : index
    %109 = vector.load %arg13[%c2_48, %c0_49, %c0_50] : memref<6x128x3xf32, #tpu.memory_space<vmem>>, vector<1x128x1xf32>
    %110 = vector.shape_cast %109 : vector<1x128x1xf32> to vector<128x1xf32>
    %c2_51 = arith.constant 2 : index
    %c0_52 = arith.constant 0 : index
    %c1_53 = arith.constant 1 : index
    %111 = vector.load %arg13[%c2_51, %c0_52, %c1_53] : memref<6x128x3xf32, #tpu.memory_space<vmem>>, vector<1x128x1xf32>
    %112 = vector.shape_cast %111 : vector<1x128x1xf32> to vector<128x1xf32>
    %c2_54 = arith.constant 2 : index
    %c0_55 = arith.constant 0 : index
    %c2_56 = arith.constant 2 : index
    %113 = vector.load %arg13[%c2_54, %c0_55, %c2_56] : memref<6x128x3xf32, #tpu.memory_space<vmem>>, vector<1x128x1xf32>
    %114 = vector.shape_cast %113 : vector<1x128x1xf32> to vector<128x1xf32>
    %115 = vector.broadcast %110 : vector<128x1xf32> to vector<128x32xf32>
    %116 = arith.addf %108, %115 : vector<128x32xf32>
    %cst_57 = arith.constant 0.000000e+00 : f32
    %117 = vector.broadcast %cst_57 : f32 to vector<128x32xf32>
    %118 = arith.maximumf %116, %117 : vector<128x32xf32>
    %cst_58 = arith.constant dense<0.000000e+00> : vector<128xf32>
    %119 = vector.multi_reduction <add>, %118, %cst_58 [1] : vector<128x32xf32> to vector<128xf32>
    %120 = vector.shape_cast %119 : vector<128xf32> to vector<128x1xf32>
    %cst_59 = arith.constant 3.125000e-02 : f32
    %121 = vector.broadcast %cst_59 : f32 to vector<128x1xf32>
    %122 = arith.mulf %120, %121 : vector<128x1xf32>
    %123 = arith.mulf %118, %118 : vector<128x32xf32>
    %cst_60 = arith.constant dense<0.000000e+00> : vector<128xf32>
    %124 = vector.multi_reduction <add>, %123, %cst_60 [1] : vector<128x32xf32> to vector<128xf32>
    %125 = vector.shape_cast %124 : vector<128xf32> to vector<128x1xf32>
    %cst_61 = arith.constant 3.125000e-02 : f32
    %126 = vector.broadcast %cst_61 : f32 to vector<128x1xf32>
    %127 = arith.mulf %125, %126 : vector<128x1xf32>
    %128 = arith.mulf %122, %122 : vector<128x1xf32>
    %129 = arith.subf %127, %128 : vector<128x1xf32>
    %cst_62 = arith.constant 0.000000e+00 : f32
    %130 = vector.broadcast %cst_62 : f32 to vector<128x1xf32>
    %131 = arith.maximumf %129, %130 : vector<128x1xf32>
    %cst_63 = arith.constant 9.99999974E-6 : f32
    %132 = vector.broadcast %cst_63 : f32 to vector<128x1xf32>
    %133 = arith.addf %131, %132 : vector<128x1xf32>
    %134 = math.rsqrt %133 : vector<128x1xf32>
    %135 = arith.mulf %112, %134 : vector<128x1xf32>
    %136 = arith.mulf %122, %135 : vector<128x1xf32>
    %137 = arith.subf %114, %136 : vector<128x1xf32>
    %138 = vector.broadcast %135 : vector<128x1xf32> to vector<128x32xf32>
    %139 = arith.mulf %118, %138 : vector<128x32xf32>
    %140 = vector.broadcast %137 : vector<128x1xf32> to vector<128x32xf32>
    %141 = arith.addf %139, %140 : vector<128x32xf32>
    %142 = arith.truncf %141 : vector<128x32xf32> to vector<128x32xbf16>
    %c0_64 = arith.constant 0 : index
    %c0_65 = arith.constant 0 : index
    %143 = vector.load %arg4[%c0_64, %c0_65] : memref<32x320xbf16, #tpu.memory_space<vmem>>, vector<32x320xbf16>
    %c0_66 = arith.constant 0 : index
    %c0_67 = arith.constant 0 : index
    %144 = vector.load %arg10[%c0_66, %c0_67] : memref<64x640xbf16, #tpu.memory_space<vmem>>, vector<64x640xbf16>
    %cst_68 = arith.constant dense<0.000000e+00> : vector<128x320xf32>
    %145 = tpu.matmul %142, %143, %cst_68 {dimension_numbers = #tpu.dot_dimension_numbers<[1], [0], [0], [1], [0, 0, 1, 1], [], []>} : vector<128x32xbf16>, vector<32x320xbf16>, vector<128x320xf32> -> vector<128x320xf32>
    %146 = vector.extract_strided_slice %145 {offsets = [0, 0], sizes = [128, 64], strides = [1, 1]} : vector<128x320xf32> to vector<128x64xf32>
    %147 = vector.extract_strided_slice %145 {offsets = [0, 64], sizes = [128, 64], strides = [1, 1]} : vector<128x320xf32> to vector<128x64xf32>
    %148 = vector.extract_strided_slice %145 {offsets = [0, 128], sizes = [128, 64], strides = [1, 1]} : vector<128x320xf32> to vector<128x64xf32>
    %149 = vector.extract_strided_slice %145 {offsets = [0, 192], sizes = [128, 64], strides = [1, 1]} : vector<128x320xf32> to vector<128x64xf32>
    %150 = vector.extract_strided_slice %145 {offsets = [0, 256], sizes = [128, 64], strides = [1, 1]} : vector<128x320xf32> to vector<128x64xf32>
    %151 = tpu.concatenate %146, %147, %148, %149, %150 in 0 : vector<128x64xf32>, vector<128x64xf32>, vector<128x64xf32>, vector<128x64xf32>, vector<128x64xf32> -> vector<640x64xf32>
    %152 = arith.truncf %151 : vector<640x64xf32> to vector<640x64xbf16>
    %cst_69 = arith.constant dense<0.000000e+00> : vector<64x64xf32>
    %153 = tpu.matmul %144, %152, %cst_69 {dimension_numbers = #tpu.dot_dimension_numbers<[1], [0], [0], [1], [0, 0, 1, 1], [], []>} : vector<64x640xbf16>, vector<640x64xbf16>, vector<64x64xf32> -> vector<64x64xf32>
    %c3 = arith.constant 3 : index
    %c0_70 = arith.constant 0 : index
    %c0_71 = arith.constant 0 : index
    %154 = vector.load %arg13[%c3, %c0_70, %c0_71] : memref<6x128x3xf32, #tpu.memory_space<vmem>>, vector<1x64x1xf32>
    %155 = vector.shape_cast %154 : vector<1x64x1xf32> to vector<64x1xf32>
    %c3_72 = arith.constant 3 : index
    %c0_73 = arith.constant 0 : index
    %c1_74 = arith.constant 1 : index
    %156 = vector.load %arg13[%c3_72, %c0_73, %c1_74] : memref<6x128x3xf32, #tpu.memory_space<vmem>>, vector<1x64x1xf32>
    %157 = vector.shape_cast %156 : vector<1x64x1xf32> to vector<64x1xf32>
    %c3_75 = arith.constant 3 : index
    %c0_76 = arith.constant 0 : index
    %c2_77 = arith.constant 2 : index
    %158 = vector.load %arg13[%c3_75, %c0_76, %c2_77] : memref<6x128x3xf32, #tpu.memory_space<vmem>>, vector<1x64x1xf32>
    %159 = vector.shape_cast %158 : vector<1x64x1xf32> to vector<64x1xf32>
    %160 = vector.broadcast %155 : vector<64x1xf32> to vector<64x64xf32>
    %161 = arith.addf %153, %160 : vector<64x64xf32>
    %cst_78 = arith.constant 0.000000e+00 : f32
    %162 = vector.broadcast %cst_78 : f32 to vector<64x64xf32>
    %163 = arith.maximumf %161, %162 : vector<64x64xf32>
    %cst_79 = arith.constant dense<0.000000e+00> : vector<64xf32>
    %164 = vector.multi_reduction <add>, %163, %cst_79 [1] : vector<64x64xf32> to vector<64xf32>
    %165 = vector.shape_cast %164 : vector<64xf32> to vector<64x1xf32>
    %cst_80 = arith.constant 1.562500e-02 : f32
    %166 = vector.broadcast %cst_80 : f32 to vector<64x1xf32>
    %167 = arith.mulf %165, %166 : vector<64x1xf32>
    %168 = arith.mulf %163, %163 : vector<64x64xf32>
    %cst_81 = arith.constant dense<0.000000e+00> : vector<64xf32>
    %169 = vector.multi_reduction <add>, %168, %cst_81 [1] : vector<64x64xf32> to vector<64xf32>
    %170 = vector.shape_cast %169 : vector<64xf32> to vector<64x1xf32>
    %cst_82 = arith.constant 1.562500e-02 : f32
    %171 = vector.broadcast %cst_82 : f32 to vector<64x1xf32>
    %172 = arith.mulf %170, %171 : vector<64x1xf32>
    %173 = arith.mulf %167, %167 : vector<64x1xf32>
    %174 = arith.subf %172, %173 : vector<64x1xf32>
    %cst_83 = arith.constant 0.000000e+00 : f32
    %175 = vector.broadcast %cst_83 : f32 to vector<64x1xf32>
    %176 = arith.maximumf %174, %175 : vector<64x1xf32>
    %cst_84 = arith.constant 9.99999974E-6 : f32
    %177 = vector.broadcast %cst_84 : f32 to vector<64x1xf32>
    %178 = arith.addf %176, %177 : vector<64x1xf32>
    %179 = math.rsqrt %178 : vector<64x1xf32>
    %180 = arith.mulf %157, %179 : vector<64x1xf32>
    %181 = arith.mulf %167, %180 : vector<64x1xf32>
    %182 = arith.subf %159, %181 : vector<64x1xf32>
    %183 = vector.broadcast %180 : vector<64x1xf32> to vector<64x64xf32>
    %184 = arith.mulf %163, %183 : vector<64x64xf32>
    %185 = vector.broadcast %182 : vector<64x1xf32> to vector<64x64xf32>
    %186 = arith.addf %184, %185 : vector<64x64xf32>
    %187 = arith.truncf %186 : vector<64x64xf32> to vector<64x64xbf16>
    %c0_85 = arith.constant 0 : index
    %c0_86 = arith.constant 0 : index
    %188 = vector.load %arg5[%c0_85, %c0_86] : memref<64x896xbf16, #tpu.memory_space<vmem>>, vector<64x896xbf16>
    %c0_87 = arith.constant 0 : index
    %c0_88 = arith.constant 0 : index
    %189 = vector.load %arg11[%c0_87, %c0_88] : memref<32x448xbf16, #tpu.memory_space<vmem>>, vector<32x448xbf16>
    %cst_89 = arith.constant dense<0.000000e+00> : vector<64x896xf32>
    %190 = tpu.matmul %187, %188, %cst_89 {dimension_numbers = #tpu.dot_dimension_numbers<[1], [0], [0], [1], [0, 0, 1, 1], [], []>} : vector<64x64xbf16>, vector<64x896xbf16>, vector<64x896xf32> -> vector<64x896xf32>
    %191 = vector.extract_strided_slice %190 {offsets = [0, 0], sizes = [64, 128], strides = [1, 1]} : vector<64x896xf32> to vector<64x128xf32>
    %192 = vector.extract_strided_slice %190 {offsets = [0, 128], sizes = [64, 128], strides = [1, 1]} : vector<64x896xf32> to vector<64x128xf32>
    %193 = vector.extract_strided_slice %190 {offsets = [0, 256], sizes = [64, 128], strides = [1, 1]} : vector<64x896xf32> to vector<64x128xf32>
    %194 = vector.extract_strided_slice %190 {offsets = [0, 384], sizes = [64, 128], strides = [1, 1]} : vector<64x896xf32> to vector<64x128xf32>
    %195 = vector.extract_strided_slice %190 {offsets = [0, 512], sizes = [64, 128], strides = [1, 1]} : vector<64x896xf32> to vector<64x128xf32>
    %196 = vector.extract_strided_slice %190 {offsets = [0, 640], sizes = [64, 128], strides = [1, 1]} : vector<64x896xf32> to vector<64x128xf32>
    %197 = vector.extract_strided_slice %190 {offsets = [0, 768], sizes = [64, 128], strides = [1, 1]} : vector<64x896xf32> to vector<64x128xf32>
    %198 = tpu.concatenate %191, %192, %193, %194, %195, %196, %197 in 0 : vector<64x128xf32>, vector<64x128xf32>, vector<64x128xf32>, vector<64x128xf32>, vector<64x128xf32>, vector<64x128xf32>, vector<64x128xf32> -> vector<448x128xf32>
    %199 = arith.truncf %198 : vector<448x128xf32> to vector<448x128xbf16>
    %cst_90 = arith.constant dense<0.000000e+00> : vector<32x128xf32>
    %200 = tpu.matmul %189, %199, %cst_90 {dimension_numbers = #tpu.dot_dimension_numbers<[1], [0], [0], [1], [0, 0, 1, 1], [], []>} : vector<32x448xbf16>, vector<448x128xbf16>, vector<32x128xf32> -> vector<32x128xf32>
    %c4 = arith.constant 4 : index
    %c0_91 = arith.constant 0 : index
    %c0_92 = arith.constant 0 : index
    %201 = vector.load %arg13[%c4, %c0_91, %c0_92] : memref<6x128x3xf32, #tpu.memory_space<vmem>>, vector<1x32x1xf32>
    %202 = vector.shape_cast %201 : vector<1x32x1xf32> to vector<32x1xf32>
    %c4_93 = arith.constant 4 : index
    %c0_94 = arith.constant 0 : index
    %c1_95 = arith.constant 1 : index
    %203 = vector.load %arg13[%c4_93, %c0_94, %c1_95] : memref<6x128x3xf32, #tpu.memory_space<vmem>>, vector<1x32x1xf32>
    %204 = vector.shape_cast %203 : vector<1x32x1xf32> to vector<32x1xf32>
    %c4_96 = arith.constant 4 : index
    %c0_97 = arith.constant 0 : index
    %c2_98 = arith.constant 2 : index
    %205 = vector.load %arg13[%c4_96, %c0_97, %c2_98] : memref<6x128x3xf32, #tpu.memory_space<vmem>>, vector<1x32x1xf32>
    %206 = vector.shape_cast %205 : vector<1x32x1xf32> to vector<32x1xf32>
    %207 = vector.broadcast %202 : vector<32x1xf32> to vector<32x128xf32>
    %208 = arith.addf %200, %207 : vector<32x128xf32>
    %cst_99 = arith.constant 0.000000e+00 : f32
    %209 = vector.broadcast %cst_99 : f32 to vector<32x128xf32>
    %210 = arith.maximumf %208, %209 : vector<32x128xf32>
    %cst_100 = arith.constant dense<0.000000e+00> : vector<32xf32>
    %211 = vector.multi_reduction <add>, %210, %cst_100 [1] : vector<32x128xf32> to vector<32xf32>
    %212 = vector.shape_cast %211 : vector<32xf32> to vector<32x1xf32>
    %cst_101 = arith.constant 7.812500e-03 : f32
    %213 = vector.broadcast %cst_101 : f32 to vector<32x1xf32>
    %214 = arith.mulf %212, %213 : vector<32x1xf32>
    %215 = arith.mulf %210, %210 : vector<32x128xf32>
    %cst_102 = arith.constant dense<0.000000e+00> : vector<32xf32>
    %216 = vector.multi_reduction <add>, %215, %cst_102 [1] : vector<32x128xf32> to vector<32xf32>
    %217 = vector.shape_cast %216 : vector<32xf32> to vector<32x1xf32>
    %cst_103 = arith.constant 7.812500e-03 : f32
    %218 = vector.broadcast %cst_103 : f32 to vector<32x1xf32>
    %219 = arith.mulf %217, %218 : vector<32x1xf32>
    %220 = arith.mulf %214, %214 : vector<32x1xf32>
    %221 = arith.subf %219, %220 : vector<32x1xf32>
    %cst_104 = arith.constant 0.000000e+00 : f32
    %222 = vector.broadcast %cst_104 : f32 to vector<32x1xf32>
    %223 = arith.maximumf %221, %222 : vector<32x1xf32>
    %cst_105 = arith.constant 9.99999974E-6 : f32
    %224 = vector.broadcast %cst_105 : f32 to vector<32x1xf32>
    %225 = arith.addf %223, %224 : vector<32x1xf32>
    %226 = math.rsqrt %225 : vector<32x1xf32>
    %227 = arith.mulf %204, %226 : vector<32x1xf32>
    %228 = arith.mulf %214, %227 : vector<32x1xf32>
    %229 = arith.subf %206, %228 : vector<32x1xf32>
    %230 = vector.broadcast %227 : vector<32x1xf32> to vector<32x128xf32>
    %231 = arith.mulf %210, %230 : vector<32x128xf32>
    %232 = vector.broadcast %229 : vector<32x1xf32> to vector<32x128xf32>
    %233 = arith.addf %231, %232 : vector<32x128xf32>
    %234 = arith.truncf %233 : vector<32x128xf32> to vector<32x128xbf16>
    %c0_106 = arith.constant 0 : index
    %c0_107 = arith.constant 0 : index
    %235 = vector.load %arg6[%c0_106, %c0_107] : memref<128x2304xbf16, #tpu.memory_space<vmem>>, vector<128x2304xbf16>
    %c0_108 = arith.constant 0 : index
    %c0_109 = arith.constant 0 : index
    %236 = vector.load %arg12[%c0_108, %c0_109] : memref<1x288xbf16, #tpu.memory_space<vmem>>, vector<1x288xbf16>
    %cst_110 = arith.constant dense<0.000000e+00> : vector<32x2304xf32>
    %237 = tpu.matmul %234, %235, %cst_110 {dimension_numbers = #tpu.dot_dimension_numbers<[1], [0], [0], [1], [0, 0, 1, 1], [], []>} : vector<32x128xbf16>, vector<128x2304xbf16>, vector<32x2304xf32> -> vector<32x2304xf32>
    %238 = vector.extract_strided_slice %237 {offsets = [0, 0], sizes = [32, 256], strides = [1, 1]} : vector<32x2304xf32> to vector<32x256xf32>
    %239 = vector.extract_strided_slice %237 {offsets = [0, 256], sizes = [32, 256], strides = [1, 1]} : vector<32x2304xf32> to vector<32x256xf32>
    %240 = vector.extract_strided_slice %237 {offsets = [0, 512], sizes = [32, 256], strides = [1, 1]} : vector<32x2304xf32> to vector<32x256xf32>
    %241 = vector.extract_strided_slice %237 {offsets = [0, 768], sizes = [32, 256], strides = [1, 1]} : vector<32x2304xf32> to vector<32x256xf32>
    %242 = vector.extract_strided_slice %237 {offsets = [0, 1024], sizes = [32, 256], strides = [1, 1]} : vector<32x2304xf32> to vector<32x256xf32>
    %243 = vector.extract_strided_slice %237 {offsets = [0, 1280], sizes = [32, 256], strides = [1, 1]} : vector<32x2304xf32> to vector<32x256xf32>
    %244 = vector.extract_strided_slice %237 {offsets = [0, 1536], sizes = [32, 256], strides = [1, 1]} : vector<32x2304xf32> to vector<32x256xf32>
    %245 = vector.extract_strided_slice %237 {offsets = [0, 1792], sizes = [32, 256], strides = [1, 1]} : vector<32x2304xf32> to vector<32x256xf32>
    %246 = vector.extract_strided_slice %237 {offsets = [0, 2048], sizes = [32, 256], strides = [1, 1]} : vector<32x2304xf32> to vector<32x256xf32>
    %247 = tpu.concatenate %238, %239, %240, %241, %242, %243, %244, %245, %246 in 0 : vector<32x256xf32>, vector<32x256xf32>, vector<32x256xf32>, vector<32x256xf32>, vector<32x256xf32>, vector<32x256xf32>, vector<32x256xf32>, vector<32x256xf32>, vector<32x256xf32> -> vector<288x256xf32>
    %248 = arith.truncf %247 : vector<288x256xf32> to vector<288x256xbf16>
    %cst_111 = arith.constant dense<0.000000e+00> : vector<1x256xf32>
    %249 = tpu.matmul %236, %248, %cst_111 {dimension_numbers = #tpu.dot_dimension_numbers<[1], [0], [0], [1], [0, 0, 1, 1], [], []>} : vector<1x288xbf16>, vector<288x256xbf16>, vector<1x256xf32> -> vector<1x256xf32>
    %c5 = arith.constant 5 : index
    %c0_112 = arith.constant 0 : index
    %c0_113 = arith.constant 0 : index
    %250 = vector.load %arg13[%c5, %c0_112, %c0_113] : memref<6x128x3xf32, #tpu.memory_space<vmem>>, vector<1x1x1xf32>
    %251 = vector.shape_cast %250 : vector<1x1x1xf32> to vector<1x1xf32>
    %252 = vector.broadcast %251 : vector<1x1xf32> to vector<1x256xf32>
    %253 = arith.addf %249, %252 : vector<1x256xf32>
    %254 = math.tanh %253 : vector<1x256xf32>
    %c0_114 = arith.constant 0 : index
    %c0_115 = arith.constant 0 : index
    %255 = vector.load %arg14[%c0_114, %c0_115] : memref<1x256xf32, #tpu.memory_space<vmem>>, vector<1x256xf32>
    tpu.vector_store %arg14[%c0_114, %c0_115], %254 {strides = array<i32>} : memref<1x256xf32, #tpu.memory_space<vmem>>, vector<1x256xf32>,
    return
  }
}

</mosaic_0001>

<llo_original>
// kernel: autoencoder_forward.1
$region0: #{autoencoder_forward.1}
  #allocation0 [shape = 'u32[]', space=smem, size = 0x4, offset = 0x4, fixed_abs, tag = 'smem constant byte address 0x4 - core index']
  #allocation1 [shape = 'u32[144,128]{1,0:T(1,128)}', space=vmem, size = 0x12000, scoped, tag = 'internal scratch']
  %s0 = inlined_call_operand.vmem [shape: f32[1,256], index: 0, kind: input, shape index: {}]
  %s1 = inlined_call_operand.vmem [shape: bf16[256,1152], index: 1, kind: input, shape index: {}]
  %s2 = inlined_call_operand.vmem [shape: bf16[128,448], index: 2, kind: input, shape index: {}]
  %s3 = inlined_call_operand.vmem [shape: bf16[64,160], index: 3, kind: input, shape index: {}]
  %s4 = inlined_call_operand.vmem [shape: bf16[32,320], index: 4, kind: input, shape index: {}]
  %s5 = inlined_call_operand.vmem [shape: bf16[64,896], index: 5, kind: input, shape index: {}]
  %s6 = inlined_call_operand.vmem [shape: bf16[128,2304], index: 6, kind: input, shape index: {}]
  %s7 = inlined_call_operand.vmem [shape: bf16[32,9], index: 7, kind: input, shape index: {}]
  %s8 = inlined_call_operand.vmem [shape: bf16[64,224], index: 8, kind: input, shape index: {}]
  %s9 = inlined_call_operand.vmem [shape: bf16[128,320], index: 9, kind: input, shape index: {}]
  %s10 = inlined_call_operand.vmem [shape: bf16[64,640], index: 10, kind: input, shape index: {}]
  %s11 = inlined_call_operand.vmem [shape: bf16[32,448], index: 11, kind: input, shape index: {}]
  %s12 = inlined_call_operand.vmem [shape: bf16[1,288], index: 12, kind: input, shape index: {}]
  %s13 = inlined_call_operand.vmem [shape: f32[6,128,3], index: 13, kind: input, shape index: {}]
  %s14 = inlined_call_operand.hbm [shape: f32[1,256], index: 14, kind: output, shape index: {}]
  %s15 = sld [smem:[#allocation0]]
  $region66: #{autoencoder_forward.1} parent=0
    _
  %s17 = ssub.s32 1, %s15
  %s18 = scalar_select 0, %s17, %s15
  $region1: #{autoencoder_forward.1} parent=0
    #allocation2 [shape = 'u8[1024]{0}', space=vmem, size = 0x400, scoped, tag = 'output window, operand 0, single buffered']
    #allocation3 [shape = 's32[1]{0}', space=sflag, size = 0x4, scoped, tag = 'scoped memory for autoencoder_forward.1']
    %19 = vsyncpa [#allocation3], 0
    // Predicated region
    $region2: #{autoencoder_forward.1} parent=1 // pred_check
      _
    $region3: #{autoencoder_forward.1} parent=1 // pred_check_branch
      %21 = sbr.rel (0) target = $region5
    $region4: #{autoencoder_forward.1} parent=1 // pred_region
      _
    $region5: #{autoencoder_forward.1} parent=1 // pred_fallthru
      _
    // Predicated region
    $region6: #{autoencoder_forward.1} parent=1 // pred_check
      _
    $region7: #{autoencoder_forward.1} parent=1 // pred_check_branch
      %23 = sbr.rel (0) target = $region9
    $region8: #{autoencoder_forward.1} parent=1 // pred_region
      _
    $region9: #{autoencoder_forward.1} parent=1 // pred_fallthru
      _
    // Predicated region
    $region10: #{autoencoder_forward.1} parent=1 // pred_check
      _
    $region11: #{autoencoder_forward.1} parent=1 // pred_check_branch
      %25 = sbr.rel (0) target = $region13
    $region12: #{autoencoder_forward.1} parent=1 // pred_region
      _
    $region13: #{autoencoder_forward.1} parent=1 // pred_fallthru
      _
    // Predicated region
    $region14: #{autoencoder_forward.1} parent=1 // pred_check
      _
    $region15: #{autoencoder_forward.1} parent=1 // pred_check_branch
      %27 = sbr.rel (0) target = $region17
    $region16: #{autoencoder_forward.1} parent=1 // pred_region
      _
    $region17: #{autoencoder_forward.1} parent=1 // pred_fallthru
      _
    // Predicated region
    $region18: #{autoencoder_forward.1} parent=1 // pred_check
      _
    $region19: #{autoencoder_forward.1} parent=1 // pred_check_branch
      %29 = sbr.rel (0) target = $region21
    $region20: #{autoencoder_forward.1} parent=1 // pred_region
      _
    $region21: #{autoencoder_forward.1} parent=1 // pred_fallthru
      _
    // Predicated region
    $region22: #{autoencoder_forward.1} parent=1 // pred_check
      _
    $region23: #{autoencoder_forward.1} parent=1 // pred_check_branch
      %31 = sbr.rel (0) target = $region25
    $region24: #{autoencoder_forward.1} parent=1 // pred_region
      _
    $region25: #{autoencoder_forward.1} parent=1 // pred_fallthru
      _
    // Predicated region
    $region26: #{autoencoder_forward.1} parent=1 // pred_check
      _
    $region27: #{autoencoder_forward.1} parent=1 // pred_check_branch
      %33 = sbr.rel (0) target = $region29
    $region28: #{autoencoder_forward.1} parent=1 // pred_region
      _
    $region29: #{autoencoder_forward.1} parent=1 // pred_fallthru
      _
    // Predicated region
    $region30: #{autoencoder_forward.1} parent=1 // pred_check
      _
    $region31: #{autoencoder_forward.1} parent=1 // pred_check_branch
      %35 = sbr.rel (0) target = $region33
    $region32: #{autoencoder_forward.1} parent=1 // pred_region
      _
    $region33: #{autoencoder_forward.1} parent=1 // pred_fallthru
      _
    // Predicated region
    $region34: #{autoencoder_forward.1} parent=1 // pred_check
      _
    $region35: #{autoencoder_forward.1} parent=1 // pred_check_branch
      %37 = sbr.rel (0) target = $region37
    $region36: #{autoencoder_forward.1} parent=1 // pred_region
      _
    $region37: #{autoencoder_forward.1} parent=1 // pred_fallthru
      _
    // Predicated region
    $region38: #{autoencoder_forward.1} parent=1 // pred_check
      _
    $region39: #{autoencoder_forward.1} parent=1 // pred_check_branch
      %39 = sbr.rel (0) target = $region41
    $region40: #{autoencoder_forward.1} parent=1 // pred_region
      _
    $region41: #{autoencoder_forward.1} parent=1 // pred_fallthru
      _
    // Predicated region
    $region42: #{autoencoder_forward.1} parent=1 // pred_check
      _
    $region43: #{autoencoder_forward.1} parent=1 // pred_check_branch
      %41 = sbr.rel (0) target = $region45
    $region44: #{autoencoder_forward.1} parent=1 // pred_region
      _
    $region45: #{autoencoder_forward.1} parent=1 // pred_fallthru
      _
    // Predicated region
    $region46: #{autoencoder_forward.1} parent=1 // pred_check
      _
    $region47: #{autoencoder_forward.1} parent=1 // pred_check_branch
      %43 = sbr.rel (0) target = $region49
    $region48: #{autoencoder_forward.1} parent=1 // pred_region
      _
    $region49: #{autoencoder_forward.1} parent=1 // pred_fallthru
      _
    // Predicated region
    $region50: #{autoencoder_forward.1} parent=1 // pred_check
      _
    $region51: #{autoencoder_forward.1} parent=1 // pred_check_branch
      %45 = sbr.rel (0) target = $region53
    $region52: #{autoencoder_forward.1} parent=1 // pred_region
      _
    $region53: #{autoencoder_forward.1} parent=1 // pred_fallthru
      _
    // Predicated region
    $region54: #{autoencoder_forward.1} parent=1 // pred_check
      _
    $region55: #{autoencoder_forward.1} parent=1 // pred_check_branch
      %47 = sbr.rel (0) target = $region57
    $region56: #{autoencoder_forward.1} parent=1 // pred_region
      _
    $region57: #{autoencoder_forward.1} parent=1 // pred_fallthru
      _
    %v49 = vld [vmem:[%s0] sm:$0x3]
    %v51 = vlaneseq
    %v52 = vshrl.u32 %v51, 7
    %v53 = vsub.s32 0, %v52
    %v54 = vrot.slane %v49, %v53
    %v55 = vlaneseq
    %v56 = vshrl.u32 %v55, 7
    %v57 = vsub.s32 1, %v56
    %v58 = vrot.slane %v49, %v57
    %v61 = vpack.c.bf16 %v54, %v54
    %v62 = vpack.c.bf16 %v58, %v58
    %v63 = vld [vmem:[%s1] sm:$0xff]
    %v64 = vld [vmem:[%s1 + $0x8] sm:$0xff]
    %v65 = vld [vmem:[%s1 + $0x10] sm:$0xff]
    %v66 = vld [vmem:[%s1 + $0x18] sm:$0xff]
    %v67 = vld [vmem:[%s1 + $0x20] sm:$0xf]
    %v68 = vld [vmem:[%s1 + $0x24] sm:$0xff]
    %v69 = vld [vmem:[%s1 + $0x2c] sm:$0xff]
    %v70 = vld [vmem:[%s1 + $0x34] sm:$0xff]
    %v71 = vld [vmem:[%s1 + $0x3c] sm:$0xff]
    %v72 = vld [vmem:[%s1 + $0x44] sm:$0xf]
    %v73 = vld [vmem:[%s1 + $0x48] sm:$0xff]
    %v74 = vld [vmem:[%s1 + $0x50] sm:$0xff]
    %v75 = vld [vmem:[%s1 + $0x58] sm:$0xff]
    %v76 = vld [vmem:[%s1 + $0x60] sm:$0xff]
    %v77 = vld [vmem:[%s1 + $0x68] sm:$0xf]
    %v78 = vld [vmem:[%s1 + $0x6c] sm:$0xff]
    %v79 = vld [vmem:[%s1 + $0x74] sm:$0xff]
    %v80 = vld [vmem:[%s1 + $0x7c] sm:$0xff]
    %v81 = vld [vmem:[%s1 + $0x84] sm:$0xff]
    %v82 = vld [vmem:[%s1 + $0x8c] sm:$0xf]
    %v83 = vld [vmem:[%s1 + $0x90] sm:$0xff]
    %v84 = vld [vmem:[%s1 + $0x98] sm:$0xff]
    %v85 = vld [vmem:[%s1 + $0xa0] sm:$0xff]
    %v86 = vld [vmem:[%s1 + $0xa8] sm:$0xff]
    %v87 = vld [vmem:[%s1 + $0xb0] sm:$0xf]
    %v88 = vld [vmem:[%s1 + $0xb4] sm:$0xff]
    %v89 = vld [vmem:[%s1 + $0xbc] sm:$0xff]
    %v90 = vld [vmem:[%s1 + $0xc4] sm:$0xff]
    %v91 = vld [vmem:[%s1 + $0xcc] sm:$0xff]
    %v92 = vld [vmem:[%s1 + $0xd4] sm:$0xf]
    %v93 = vld [vmem:[%s1 + $0xd8] sm:$0xff]
    %v94 = vld [vmem:[%s1 + $0xe0] sm:$0xff]
    %v95 = vld [vmem:[%s1 + $0xe8] sm:$0xff]
    %v96 = vld [vmem:[%s1 + $0xf0] sm:$0xff]
    %v97 = vld [vmem:[%s1 + $0xf8] sm:$0xf]
    %v98 = vld [vmem:[%s1 + $0xfc] sm:$0xff]
    %v99 = vld [vmem:[%s1 + $0x104] sm:$0xff]
    %v100 = vld [vmem:[%s1 + $0x10c] sm:$0xff]
    %v101 = vld [vmem:[%s1 + $0x114] sm:$0xff]
    %v102 = vld [vmem:[%s1 + $0x11c] sm:$0xf]
    %v103 = vld [vmem:[%s1 + $0x120] sm:$0xff]
    %v104 = vld [vmem:[%s1 + $0x128] sm:$0xff]
    %v105 = vld [vmem:[%s1 + $0x130] sm:$0xff]
    %v106 = vld [vmem:[%s1 + $0x138] sm:$0xff]
    %v107 = vld [vmem:[%s1 + $0x140] sm:$0xf]
    %v108 = vld [vmem:[%s1 + $0x144] sm:$0xff]
    %v109 = vld [vmem:[%s1 + $0x14c] sm:$0xff]
    %v110 = vld [vmem:[%s1 + $0x154] sm:$0xff]
    %v111 = vld [vmem:[%s1 + $0x15c] sm:$0xff]
    %v112 = vld [vmem:[%s1 + $0x164] sm:$0xf]
    %v113 = vld [vmem:[%s1 + $0x168] sm:$0xff]
    %v114 = vld [vmem:[%s1 + $0x170] sm:$0xff]
    %v115 = vld [vmem:[%s1 + $0x178] sm:$0xff]
    %v116 = vld [vmem:[%s1 + $0x180] sm:$0xff]
    %v117 = vld [vmem:[%s1 + $0x188] sm:$0xf]
    %v118 = vld [vmem:[%s1 + $0x18c] sm:$0xff]
    %v119 = vld [vmem:[%s1 + $0x194] sm:$0xff]
    %v120 = vld [vmem:[%s1 + $0x19c] sm:$0xff]
    %v121 = vld [vmem:[%s1 + $0x1a4] sm:$0xff]
    %v122 = vld [vmem:[%s1 + $0x1ac] sm:$0xf]
    %v123 = vld [vmem:[%s1 + $0x1b0] sm:$0xff]
    %v124 = vld [vmem:[%s1 + $0x1b8] sm:$0xff]
    %v125 = vld [vmem:[%s1 + $0x1c0] sm:$0xff]
    %v126 = vld [vmem:[%s1 + $0x1c8] sm:$0xff]
    %v127 = vld [vmem:[%s1 + $0x1d0] sm:$0xf]
    %v128 = vld [vmem:[%s1 + $0x1d4] sm:$0xff]
    %v129 = vld [vmem:[%s1 + $0x1dc] sm:$0xff]
    %v130 = vld [vmem:[%s1 + $0x1e4] sm:$0xff]
    %v131 = vld [vmem:[%s1 + $0x1ec] sm:$0xff]
    %v132 = vld [vmem:[%s1 + $0x1f4] sm:$0xf]
    %v133 = vld [vmem:[%s1 + $0x1f8] sm:$0xff]
    %v134 = vld [vmem:[%s1 + $0x200] sm:$0xff]
    %v135 = vld [vmem:[%s1 + $0x208] sm:$0xff]
    %v136 = vld [vmem:[%s1 + $0x210] sm:$0xff]
    %v137 = vld [vmem:[%s1 + $0x218] sm:$0xf]
    %v138 = vld [vmem:[%s1 + $0x21c] sm:$0xff]
    %v139 = vld [vmem:[%s1 + $0x224] sm:$0xff]
    %v140 = vld [vmem:[%s1 + $0x22c] sm:$0xff]
    %v141 = vld [vmem:[%s1 + $0x234] sm:$0xff]
    %v142 = vld [vmem:[%s1 + $0x23c] sm:$0xf]
    %v143 = vld [vmem:[%s1 + $0x240] sm:$0xff]
    %v144 = vld [vmem:[%s1 + $0x248] sm:$0xff]
    %v145 = vld [vmem:[%s1 + $0x250] sm:$0xff]
    %v146 = vld [vmem:[%s1 + $0x258] sm:$0xff]
    %v147 = vld [vmem:[%s1 + $0x260] sm:$0xf]
    %v148 = vld [vmem:[%s1 + $0x264] sm:$0xff]
    %v149 = vld [vmem:[%s1 + $0x26c] sm:$0xff]
    %v150 = vld [vmem:[%s1 + $0x274] sm:$0xff]
    %v151 = vld [vmem:[%s1 + $0x27c] sm:$0xff]
    %v152 = vld [vmem:[%s1 + $0x284] sm:$0xf]
    %v153 = vld [vmem:[%s1 + $0x288] sm:$0xff]
    %v154 = vld [vmem:[%s1 + $0x290] sm:$0xff]
    %v155 = vld [vmem:[%s1 + $0x298] sm:$0xff]
    %v156 = vld [vmem:[%s1 + $0x2a0] sm:$0xff]
    %v157 = vld [vmem:[%s1 + $0x2a8] sm:$0xf]
    %v158 = vld [vmem:[%s1 + $0x2ac] sm:$0xff]
    %v159 = vld [vmem:[%s1 + $0x2b4] sm:$0xff]
    %v160 = vld [vmem:[%s1 + $0x2bc] sm:$0xff]
    %v161 = vld [vmem:[%s1 + $0x2c4] sm:$0xff]
    %v162 = vld [vmem:[%s1 + $0x2cc] sm:$0xf]
    %v163 = vld [vmem:[%s1 + $0x2d0] sm:$0xff]
    %v164 = vld [vmem:[%s1 + $0x2d8] sm:$0xff]
    %v165 = vld [vmem:[%s1 + $0x2e0] sm:$0xff]
    %v166 = vld [vmem:[%s1 + $0x2e8] sm:$0xff]
    %v167 = vld [vmem:[%s1 + $0x2f0] sm:$0xf]
    %v168 = vld [vmem:[%s1 + $0x2f4] sm:$0xff]
    %v169 = vld [vmem:[%s1 + $0x2fc] sm:$0xff]
    %v170 = vld [vmem:[%s1 + $0x304] sm:$0xff]
    %v171 = vld [vmem:[%s1 + $0x30c] sm:$0xff]
    %v172 = vld [vmem:[%s1 + $0x314] sm:$0xf]
    %v173 = vld [vmem:[%s1 + $0x318] sm:$0xff]
    %v174 = vld [vmem:[%s1 + $0x320] sm:$0xff]
    %v175 = vld [vmem:[%s1 + $0x328] sm:$0xff]
    %v176 = vld [vmem:[%s1 + $0x330] sm:$0xff]
    %v177 = vld [vmem:[%s1 + $0x338] sm:$0xf]
    %v178 = vld [vmem:[%s1 + $0x33c] sm:$0xff]
    %v179 = vld [vmem:[%s1 + $0x344] sm:$0xff]
    %v180 = vld [vmem:[%s1 + $0x34c] sm:$0xff]
    %v181 = vld [vmem:[%s1 + $0x354] sm:$0xff]
    %v182 = vld [vmem:[%s1 + $0x35c] sm:$0xf]
    %v183 = vld [vmem:[%s1 + $0x360] sm:$0xff]
    %v184 = vld [vmem:[%s1 + $0x368] sm:$0xff]
    %v185 = vld [vmem:[%s1 + $0x370] sm:$0xff]
    %v186 = vld [vmem:[%s1 + $0x378] sm:$0xff]
    %v187 = vld [vmem:[%s1 + $0x380] sm:$0xf]
    %v188 = vld [vmem:[%s1 + $0x384] sm:$0xff]
    %v189 = vld [vmem:[%s1 + $0x38c] sm:$0xff]
    %v190 = vld [vmem:[%s1 + $0x394] sm:$0xff]
    %v191 = vld [vmem:[%s1 + $0x39c] sm:$0xff]
    %v192 = vld [vmem:[%s1 + $0x3a4] sm:$0xf]
    %v193 = vld [vmem:[%s1 + $0x3a8] sm:$0xff]
    %v194 = vld [vmem:[%s1 + $0x3b0] sm:$0xff]
    %v195 = vld [vmem:[%s1 + $0x3b8] sm:$0xff]
    %v196 = vld [vmem:[%s1 + $0x3c0] sm:$0xff]
    %v197 = vld [vmem:[%s1 + $0x3c8] sm:$0xf]
    %v198 = vld [vmem:[%s1 + $0x3cc] sm:$0xff]
    %v199 = vld [vmem:[%s1 + $0x3d4] sm:$0xff]
    %v200 = vld [vmem:[%s1 + $0x3dc] sm:$0xff]
    %v201 = vld [vmem:[%s1 + $0x3e4] sm:$0xff]
    %v202 = vld [vmem:[%s1 + $0x3ec] sm:$0xf]
    %v203 = vld [vmem:[%s1 + $0x3f0] sm:$0xff]
    %v204 = vld [vmem:[%s1 + $0x3f8] sm:$0xff]
    %v205 = vld [vmem:[%s1 + $0x400] sm:$0xff]
    %v206 = vld [vmem:[%s1 + $0x408] sm:$0xff]
    %v207 = vld [vmem:[%s1 + $0x410] sm:$0xf]
    %v208 = vld [vmem:[%s1 + $0x414] sm:$0xff]
    %v209 = vld [vmem:[%s1 + $0x41c] sm:$0xff]
    %v210 = vld [vmem:[%s1 + $0x424] sm:$0xff]
    %v211 = vld [vmem:[%s1 + $0x42c] sm:$0xff]
    %v212 = vld [vmem:[%s1 + $0x434] sm:$0xf]
    %v213 = vld [vmem:[%s1 + $0x438] sm:$0xff]
    %v214 = vld [vmem:[%s1 + $0x440] sm:$0xff]
    %v215 = vld [vmem:[%s1 + $0x448] sm:$0xff]
    %v216 = vld [vmem:[%s1 + $0x450] sm:$0xff]
    %v217 = vld [vmem:[%s1 + $0x458] sm:$0xf]
    %v218 = vld [vmem:[%s1 + $0x45c] sm:$0xff]
    %v219 = vld [vmem:[%s1 + $0x464] sm:$0xff]
    %v220 = vld [vmem:[%s1 + $0x46c] sm:$0xff]
    %v221 = vld [vmem:[%s1 + $0x474] sm:$0xff]
    %v222 = vld [vmem:[%s1 + $0x47c] sm:$0xf]
    %v223 = vld [vmem:[%s7] sm:$0xf]
    %v224 = vld [vmem:[%s7 + $0x4] sm:$0xf]
    %v225 = vld [vmem:[%s7 + $0x8] sm:$0xf]
    %v226 = vld [vmem:[%s7 + $0xc] sm:$0xf]
    %v387 = vunpack.c.l.b16 %v63
    %v388 = vunpack.c.h.b16 %v63
    %v389 = vunpack.c.l.b16 %v64
    %v390 = vunpack.c.h.b16 %v64
    %v391 = vunpack.c.l.b16 %v65
    %v392 = vunpack.c.h.b16 %v65
    %v393 = vunpack.c.l.b16 %v66
    %v394 = vunpack.c.h.b16 %v66
    %v395 = vunpack.c.l.b16 %v67
    %v396 = vunpack.c.l.b16 %v68
    %v397 = vunpack.c.h.b16 %v68
    %v398 = vunpack.c.l.b16 %v69
    %v399 = vunpack.c.h.b16 %v69
    %v400 = vunpack.c.l.b16 %v70
    %v401 = vunpack.c.h.b16 %v70
    %v402 = vunpack.c.l.b16 %v71
    %v403 = vunpack.c.h.b16 %v71
    %v404 = vunpack.c.l.b16 %v72
    %v405 = vunpack.c.l.b16 %v73
    %v406 = vunpack.c.h.b16 %v73
    %v407 = vunpack.c.l.b16 %v74
    %v408 = vunpack.c.h.b16 %v74
    %v409 = vunpack.c.l.b16 %v75
    %v410 = vunpack.c.h.b16 %v75
    %v411 = vunpack.c.l.b16 %v76
    %v412 = vunpack.c.h.b16 %v76
    %v413 = vunpack.c.l.b16 %v77
    %v414 = vunpack.c.l.b16 %v78
    %v415 = vunpack.c.h.b16 %v78
    %v416 = vunpack.c.l.b16 %v79
    %v417 = vunpack.c.h.b16 %v79
    %v418 = vunpack.c.l.b16 %v80
    %v419 = vunpack.c.h.b16 %v80
    %v420 = vunpack.c.l.b16 %v81
    %v421 = vunpack.c.h.b16 %v81
    %v422 = vunpack.c.l.b16 %v82
    %v423 = vunpack.c.l.b16 %v83
    %v424 = vunpack.c.h.b16 %v83
    %v425 = vunpack.c.l.b16 %v84
    %v426 = vunpack.c.h.b16 %v84
    %v427 = vunpack.c.l.b16 %v85
    %v428 = vunpack.c.h.b16 %v85
    %v429 = vunpack.c.l.b16 %v86
    %v430 = vunpack.c.h.b16 %v86
    %v431 = vunpack.c.l.b16 %v87
    %v432 = vunpack.c.l.b16 %v88
    %v433 = vunpack.c.h.b16 %v88
    %v434 = vunpack.c.l.b16 %v89
    %v435 = vunpack.c.h.b16 %v89
    %v436 = vunpack.c.l.b16 %v90
    %v437 = vunpack.c.h.b16 %v90
    %v438 = vunpack.c.l.b16 %v91
    %v439 = vunpack.c.h.b16 %v91
    %v440 = vunpack.c.l.b16 %v92
    %v441 = vunpack.c.l.b16 %v93
    %v442 = vunpack.c.h.b16 %v93
    %v443 = vunpack.c.l.b16 %v94
    %v444 = vunpack.c.h.b16 %v94
    %v445 = vunpack.c.l.b16 %v95
    %v446 = vunpack.c.h.b16 %v95
    %v447 = vunpack.c.l.b16 %v96
    %v448 = vunpack.c.h.b16 %v96
    %v449 = vunpack.c.l.b16 %v97
    %v450 = vunpack.c.l.b16 %v98
    %v451 = vunpack.c.h.b16 %v98
    %v452 = vunpack.c.l.b16 %v99
    %v453 = vunpack.c.h.b16 %v99
    %v454 = vunpack.c.l.b16 %v100
    %v455 = vunpack.c.h.b16 %v100
    %v456 = vunpack.c.l.b16 %v101
    %v457 = vunpack.c.h.b16 %v101
    %v458 = vunpack.c.l.b16 %v102
    %v459 = vunpack.c.l.b16 %v103
    %v460 = vunpack.c.h.b16 %v103
    %v461 = vunpack.c.l.b16 %v104
    %v462 = vunpack.c.h.b16 %v104
    %v463 = vunpack.c.l.b16 %v105
    %v464 = vunpack.c.h.b16 %v105
    %v465 = vunpack.c.l.b16 %v106
    %v466 = vunpack.c.h.b16 %v106
    %v467 = vunpack.c.l.b16 %v107
    %v468 = vunpack.c.l.b16 %v108
    %v469 = vunpack.c.h.b16 %v108
    %v470 = vunpack.c.l.b16 %v109
    %v471 = vunpack.c.h.b16 %v109
    %v472 = vunpack.c.l.b16 %v110
    %v473 = vunpack.c.h.b16 %v110
    %v474 = vunpack.c.l.b16 %v111
    %v475 = vunpack.c.h.b16 %v111
    %v476 = vunpack.c.l.b16 %v112
    %v477 = vunpack.c.l.b16 %v113
    %v478 = vunpack.c.h.b16 %v113
    %v479 = vunpack.c.l.b16 %v114
    %v480 = vunpack.c.h.b16 %v114
    %v481 = vunpack.c.l.b16 %v115
    %v482 = vunpack.c.h.b16 %v115
    %v483 = vunpack.c.l.b16 %v116
    %v484 = vunpack.c.h.b16 %v116
    %v485 = vunpack.c.l.b16 %v117
    %v486 = vunpack.c.l.b16 %v118
    %v487 = vunpack.c.h.b16 %v118
    %v488 = vunpack.c.l.b16 %v119
    %v489 = vunpack.c.h.b16 %v119
    %v490 = vunpack.c.l.b16 %v120
    %v491 = vunpack.c.h.b16 %v120
    %v492 = vunpack.c.l.b16 %v121
    %v493 = vunpack.c.h.b16 %v121
    %v494 = vunpack.c.l.b16 %v122
    %v495 = vunpack.c.l.b16 %v123
    %v496 = vunpack.c.h.b16 %v123
    %v497 = vunpack.c.l.b16 %v124
    %v498 = vunpack.c.h.b16 %v124
    %v499 = vunpack.c.l.b16 %v125
    %v500 = vunpack.c.h.b16 %v125
    %v501 = vunpack.c.l.b16 %v126
    %v502 = vunpack.c.h.b16 %v126
    %v503 = vunpack.c.l.b16 %v127
    %v504 = vunpack.c.l.b16 %v128
    %v505 = vunpack.c.h.b16 %v128
    %v506 = vunpack.c.l.b16 %v129
    %v507 = vunpack.c.h.b16 %v129
    %v508 = vunpack.c.l.b16 %v130
    %v509 = vunpack.c.h.b16 %v130
    %v510 = vunpack.c.l.b16 %v131
    %v511 = vunpack.c.h.b16 %v131
    %v512 = vunpack.c.l.b16 %v132
    %v513 = vunpack.c.l.b16 %v133
    %v514 = vunpack.c.h.b16 %v133
    %v515 = vunpack.c.l.b16 %v134
    %v516 = vunpack.c.h.b16 %v134
    %v517 = vunpack.c.l.b16 %v135
    %v518 = vunpack.c.h.b16 %v135
    %v519 = vunpack.c.l.b16 %v136
    %v520 = vunpack.c.h.b16 %v136
    %v521 = vunpack.c.l.b16 %v137
    %v522 = vunpack.c.l.b16 %v138
    %v523 = vunpack.c.h.b16 %v138
    %v524 = vunpack.c.l.b16 %v139
    %v525 = vunpack.c.h.b16 %v139
    %v526 = vunpack.c.l.b16 %v140
    %v527 = vunpack.c.h.b16 %v140
    %v528 = vunpack.c.l.b16 %v141
    %v529 = vunpack.c.h.b16 %v141
    %v530 = vunpack.c.l.b16 %v142
    %v531 = vunpack.c.l.b16 %v143
    %v532 = vunpack.c.h.b16 %v143
    %v533 = vunpack.c.l.b16 %v144
    %v534 = vunpack.c.h.b16 %v144
    %v535 = vunpack.c.l.b16 %v145
    %v536 = vunpack.c.h.b16 %v145
    %v537 = vunpack.c.l.b16 %v146
    %v538 = vunpack.c.h.b16 %v146
    %v539 = vunpack.c.l.b16 %v147
    %v540 = vunpack.c.l.b16 %v148
    %v541 = vunpack.c.h.b16 %v148
    %v542 = vunpack.c.l.b16 %v149
    %v543 = vunpack.c.h.b16 %v149
    %v544 = vunpack.c.l.b16 %v150
    %v545 = vunpack.c.h.b16 %v150
    %v546 = vunpack.c.l.b16 %v151
    %v547 = vunpack.c.h.b16 %v151
    %v548 = vunpack.c.l.b16 %v152
    %v549 = vunpack.c.l.b16 %v153
    %v550 = vunpack.c.h.b16 %v153
    %v551 = vunpack.c.l.b16 %v154
    %v552 = vunpack.c.h.b16 %v154
    %v553 = vunpack.c.l.b16 %v155
    %v554 = vunpack.c.h.b16 %v155
    %v555 = vunpack.c.l.b16 %v156
    %v556 = vunpack.c.h.b16 %v156
    %v557 = vunpack.c.l.b16 %v157
    %v558 = vunpack.c.l.b16 %v158
    %v559 = vunpack.c.h.b16 %v158
    %v560 = vunpack.c.l.b16 %v159
    %v561 = vunpack.c.h.b16 %v159
    %v562 = vunpack.c.l.b16 %v160
    %v563 = vunpack.c.h.b16 %v160
    %v564 = vunpack.c.l.b16 %v161
    %v565 = vunpack.c.h.b16 %v161
    %v566 = vunpack.c.l.b16 %v162
    %v567 = vunpack.c.l.b16 %v163
    %v568 = vunpack.c.h.b16 %v163
    %v569 = vunpack.c.l.b16 %v164
    %v570 = vunpack.c.h.b16 %v164
    %v571 = vunpack.c.l.b16 %v165
    %v572 = vunpack.c.h.b16 %v165
    %v573 = vunpack.c.l.b16 %v166
    %v574 = vunpack.c.h.b16 %v166
    %v575 = vunpack.c.l.b16 %v167
    %v576 = vunpack.c.l.b16 %v168
    %v577 = vunpack.c.h.b16 %v168
    %v578 = vunpack.c.l.b16 %v169
    %v579 = vunpack.c.h.b16 %v169
    %v580 = vunpack.c.l.b16 %v170
    %v581 = vunpack.c.h.b16 %v170
    %v582 = vunpack.c.l.b16 %v171
    %v583 = vunpack.c.h.b16 %v171
    %v584 = vunpack.c.l.b16 %v172
    %v585 = vunpack.c.l.b16 %v173
    %v586 = vunpack.c.h.b16 %v173
    %v587 = vunpack.c.l.b16 %v174
    %v588 = vunpack.c.h.b16 %v174
    %v589 = vunpack.c.l.b16 %v175
    %v590 = vunpack.c.h.b16 %v175
    %v591 = vunpack.c.l.b16 %v176
    %v592 = vunpack.c.h.b16 %v176
    %v593 = vunpack.c.l.b16 %v177
    %v594 = vunpack.c.l.b16 %v178
    %v595 = vunpack.c.h.b16 %v178
    %v596 = vunpack.c.l.b16 %v179
    %v597 = vunpack.c.h.b16 %v179
    %v598 = vunpack.c.l.b16 %v180
    %v599 = vunpack.c.h.b16 %v180
    %v600 = vunpack.c.l.b16 %v181
    %v601 = vunpack.c.h.b16 %v181
    %v602 = vunpack.c.l.b16 %v182
    %v603 = vunpack.c.l.b16 %v183
    %v604 = vunpack.c.h.b16 %v183
    %v605 = vunpack.c.l.b16 %v184
    %v606 = vunpack.c.h.b16 %v184
    %v607 = vunpack.c.l.b16 %v185
    %v608 = vunpack.c.h.b16 %v185
    %v609 = vunpack.c.l.b16 %v186
    %v610 = vunpack.c.h.b16 %v186
    %v611 = vunpack.c.l.b16 %v187
    %v612 = vunpack.c.l.b16 %v188
    %v613 = vunpack.c.h.b16 %v188
    %v614 = vunpack.c.l.b16 %v189
    %v615 = vunpack.c.h.b16 %v189
    %v616 = vunpack.c.l.b16 %v190
    %v617 = vunpack.c.h.b16 %v190
    %v618 = vunpack.c.l.b16 %v191
    %v619 = vunpack.c.h.b16 %v191
    %v620 = vunpack.c.l.b16 %v192
    %v621 = vunpack.c.l.b16 %v193
    %v622 = vunpack.c.h.b16 %v193
    %v623 = vunpack.c.l.b16 %v194
    %v624 = vunpack.c.h.b16 %v194
    %v625 = vunpack.c.l.b16 %v195
    %v626 = vunpack.c.h.b16 %v195
    %v627 = vunpack.c.l.b16 %v196
    %v628 = vunpack.c.h.b16 %v196
    %v629 = vunpack.c.l.b16 %v197
    %v630 = vunpack.c.l.b16 %v198
    %v631 = vunpack.c.h.b16 %v198
    %v632 = vunpack.c.l.b16 %v199
    %v633 = vunpack.c.h.b16 %v199
    %v634 = vunpack.c.l.b16 %v200
    %v635 = vunpack.c.h.b16 %v200
    %v636 = vunpack.c.l.b16 %v201
    %v637 = vunpack.c.h.b16 %v201
    %v638 = vunpack.c.l.b16 %v202
    %v639 = vunpack.c.l.b16 %v203
    %v640 = vunpack.c.h.b16 %v203
    %v641 = vunpack.c.l.b16 %v204
    %v642 = vunpack.c.h.b16 %v204
    %v643 = vunpack.c.l.b16 %v205
    %v644 = vunpack.c.h.b16 %v205
    %v645 = vunpack.c.l.b16 %v206
    %v646 = vunpack.c.h.b16 %v206
    %v647 = vunpack.c.l.b16 %v207
    %v648 = vunpack.c.l.b16 %v208
    %v649 = vunpack.c.h.b16 %v208
    %v650 = vunpack.c.l.b16 %v209
    %v651 = vunpack.c.h.b16 %v209
    %v652 = vunpack.c.l.b16 %v210
    %v653 = vunpack.c.h.b16 %v210
    %v654 = vunpack.c.l.b16 %v211
    %v655 = vunpack.c.h.b16 %v211
    %v656 = vunpack.c.l.b16 %v212
    %v657 = vunpack.c.l.b16 %v213
    %v658 = vunpack.c.h.b16 %v213
    %v659 = vunpack.c.l.b16 %v214
    %v660 = vunpack.c.h.b16 %v214
    %v661 = vunpack.c.l.b16 %v215
    %v662 = vunpack.c.h.b16 %v215
    %v663 = vunpack.c.l.b16 %v216
    %v664 = vunpack.c.h.b16 %v216
    %v665 = vunpack.c.l.b16 %v217
    %v666 = vunpack.c.l.b16 %v218
    %v667 = vunpack.c.h.b16 %v218
    %v668 = vunpack.c.l.b16 %v219
    %v669 = vunpack.c.h.b16 %v219
    %v670 = vunpack.c.l.b16 %v220
    %v671 = vunpack.c.h.b16 %v220
    %v672 = vunpack.c.l.b16 %v221
    %v673 = vunpack.c.h.b16 %v221
    %v674 = vunpack.c.l.b16 %v222
    %v675 = vpack.c.b16 %v396, %v387
    %v676 = vpack.c.b16 %v397, %v388
    %v677 = vpack.c.b16 %v398, %v389
    %v678 = vpack.c.b16 %v399, %v390
    %v679 = vpack.c.b16 %v400, %v391
    %v680 = vpack.c.b16 %v401, %v392
    %v681 = vpack.c.b16 %v402, %v393
    %v682 = vpack.c.b16 %v403, %v394
    %v683 = vpack.c.b16 %v404, %v395
    %v684 = vpack.c.b16 %v414, %v405
    %v685 = vpack.c.b16 %v415, %v406
    %v686 = vpack.c.b16 %v416, %v407
    %v687 = vpack.c.b16 %v417, %v408
    %v688 = vpack.c.b16 %v418, %v409
    %v689 = vpack.c.b16 %v419, %v410
    %v690 = vpack.c.b16 %v420, %v411
    %v691 = vpack.c.b16 %v421, %v412
    %v692 = vpack.c.b16 %v422, %v413
    %v693 = vpack.c.b16 %v432, %v423
    %v694 = vpack.c.b16 %v433, %v424
    %v695 = vpack.c.b16 %v434, %v425
    %v696 = vpack.c.b16 %v435, %v426
    %v697 = vpack.c.b16 %v436, %v427
    %v698 = vpack.c.b16 %v437, %v428
    %v699 = vpack.c.b16 %v438, %v429
    %v700 = vpack.c.b16 %v439, %v430
    %v701 = vpack.c.b16 %v440, %v431
    %v702 = vpack.c.b16 %v450, %v441
    %v703 = vpack.c.b16 %v451, %v442
    %v704 = vpack.c.b16 %v452, %v443
    %v705 = vpack.c.b16 %v453, %v444
    %v706 = vpack.c.b16 %v454, %v445
    %v707 = vpack.c.b16 %v455, %v446
    %v708 = vpack.c.b16 %v456, %v447
    %v709 = vpack.c.b16 %v457, %v448
    %v710 = vpack.c.b16 %v458, %v449
    %v711 = vpack.c.b16 %v468, %v459
    %v712 = vpack.c.b16 %v469, %v460
    %v713 = vpack.c.b16 %v470, %v461
    %v714 = vpack.c.b16 %v471, %v462
    %v715 = vpack.c.b16 %v472, %v463
    %v716 = vpack.c.b16 %v473, %v464
    %v717 = vpack.c.b16 %v474, %v465
    %v718 = vpack.c.b16 %v475, %v466
    %v719 = vpack.c.b16 %v476, %v467
    %v720 = vpack.c.b16 %v486, %v477
    %v721 = vpack.c.b16 %v487, %v478
    %v722 = vpack.c.b16 %v488, %v479
    %v723 = vpack.c.b16 %v489, %v480
    %v724 = vpack.c.b16 %v490, %v481
    %v725 = vpack.c.b16 %v491, %v482
    %v726 = vpack.c.b16 %v492, %v483
    %v727 = vpack.c.b16 %v493, %v484
    %v728 = vpack.c.b16 %v494, %v485
    %v729 = vpack.c.b16 %v504, %v495
    %v730 = vpack.c.b16 %v505, %v496
    %v731 = vpack.c.b16 %v506, %v497
    %v732 = vpack.c.b16 %v507, %v498
    %v733 = vpack.c.b16 %v508, %v499
    %v734 = vpack.c.b16 %v509, %v500
    %v735 = vpack.c.b16 %v510, %v501
    %v736 = vpack.c.b16 %v511, %v502
    %v737 = vpack.c.b16 %v512, %v503
    %v738 = vpack.c.b16 %v522, %v513
    %v739 = vpack.c.b16 %v523, %v514
    %v740 = vpack.c.b16 %v524, %v515
    %v741 = vpack.c.b16 %v525, %v516
    %v742 = vpack.c.b16 %v526, %v517
    %v743 = vpack.c.b16 %v527, %v518
    %v744 = vpack.c.b16 %v528, %v519
    %v745 = vpack.c.b16 %v529, %v520
    %v746 = vpack.c.b16 %v530, %v521
    %v747 = vpack.c.b16 %v540, %v531
    %v748 = vpack.c.b16 %v541, %v532
    %v749 = vpack.c.b16 %v542, %v533
    %v750 = vpack.c.b16 %v543, %v534
    %v751 = vpack.c.b16 %v544, %v535
    %v752 = vpack.c.b16 %v545, %v536
    %v753 = vpack.c.b16 %v546, %v537
    %v754 = vpack.c.b16 %v547, %v538
    %v755 = vpack.c.b16 %v548, %v539
    %v756 = vpack.c.b16 %v558, %v549
    %v757 = vpack.c.b16 %v559, %v550
    %v758 = vpack.c.b16 %v560, %v551
    %v759 = vpack.c.b16 %v561, %v552
    %v760 = vpack.c.b16 %v562, %v553
    %v761 = vpack.c.b16 %v563, %v554
    %v762 = vpack.c.b16 %v564, %v555
    %v763 = vpack.c.b16 %v565, %v556
    %v764 = vpack.c.b16 %v566, %v557
    %v765 = vpack.c.b16 %v576, %v567
    %v766 = vpack.c.b16 %v577, %v568
    %v767 = vpack.c.b16 %v578, %v569
    %v768 = vpack.c.b16 %v579, %v570
    %v769 = vpack.c.b16 %v580, %v571
    %v770 = vpack.c.b16 %v581, %v572
    %v771 = vpack.c.b16 %v582, %v573
    %v772 = vpack.c.b16 %v583, %v574
    %v773 = vpack.c.b16 %v584, %v575
    %v774 = vpack.c.b16 %v594, %v585
    %v775 = vpack.c.b16 %v595, %v586
    %v776 = vpack.c.b16 %v596, %v587
    %v777 = vpack.c.b16 %v597, %v588
    %v778 = vpack.c.b16 %v598, %v589
    %v779 = vpack.c.b16 %v599, %v590
    %v780 = vpack.c.b16 %v600, %v591
    %v781 = vpack.c.b16 %v601, %v592
    %v782 = vpack.c.b16 %v602, %v593
    %v783 = vpack.c.b16 %v612, %v603
    %v784 = vpack.c.b16 %v613, %v604
    %v785 = vpack.c.b16 %v614, %v605
    %v786 = vpack.c.b16 %v615, %v606
    %v787 = vpack.c.b16 %v616, %v607
    %v788 = vpack.c.b16 %v617, %v608
    %v789 = vpack.c.b16 %v618, %v609
    %v790 = vpack.c.b16 %v619, %v610
    %v791 = vpack.c.b16 %v620, %v611
    %v792 = vpack.c.b16 %v630, %v621
    %v793 = vpack.c.b16 %v631, %v622
    %v794 = vpack.c.b16 %v632, %v623
    %v795 = vpack.c.b16 %v633, %v624
    %v796 = vpack.c.b16 %v634, %v625
    %v797 = vpack.c.b16 %v635, %v626
    %v798 = vpack.c.b16 %v636, %v627
    %v799 = vpack.c.b16 %v637, %v628
    %v800 = vpack.c.b16 %v638, %v629
    %v801 = vpack.c.b16 %v648, %v639
    %v802 = vpack.c.b16 %v649, %v640
    %v803 = vpack.c.b16 %v650, %v641
    %v804 = vpack.c.b16 %v651, %v642
    %v805 = vpack.c.b16 %v652, %v643
    %v806 = vpack.c.b16 %v653, %v644
    %v807 = vpack.c.b16 %v654, %v645
    %v808 = vpack.c.b16 %v655, %v646
    %v809 = vpack.c.b16 %v656, %v647
    %v810 = vpack.c.b16 %v666, %v657
    %v811 = vpack.c.b16 %v667, %v658
    %v812 = vpack.c.b16 %v668, %v659
    %v813 = vpack.c.b16 %v669, %v660
    %v814 = vpack.c.b16 %v670, %v661
    %v815 = vpack.c.b16 %v671, %v662
    %v816 = vpack.c.b16 %v672, %v663
    %v817 = vpack.c.b16 %v673, %v664
    %v818 = vpack.c.b16 %v674, %v665
    %963 = vmatprep.subr.bf16.mxu0 %v676
    %964 = vmatpush1.bf16.msra.mxu0 %v675
    %965 = vmatprep.subr.bf16.mxu0 %v685
    %966 = vmatpush1.bf16.msra.mxu0 %v684
    %967 = vmatprep.subr.bf16.mxu0 %v694
    %968 = vmatpush1.bf16.msra.mxu0 %v693
    %969 = vmatprep.subr.bf16.mxu0 %v703
    %970 = vmatpush1.bf16.msra.mxu0 %v702
    %971 = vmatprep.subr.bf16.mxu0 %v712
    %972 = vmatpush1.bf16.msra.mxu0 %v711
    %973 = vmatprep.subr.bf16.mxu0 %v721
    %974 = vmatpush1.bf16.msra.mxu0 %v720
    %975 = vmatprep.subr.bf16.mxu0 %v730
    %976 = vmatpush1.bf16.msra.mxu0 %v729
    %977 = vmatprep.subr.bf16.mxu0 %v739
    %978 = vmatpush1.bf16.msra.mxu0 %v738
    %979 = vmatprep.subr.bf16.mxu0 %v748
    %980 = vmatpush1.bf16.msra.mxu0 %v747
    %981 = vmatprep.subr.bf16.mxu0 %v757
    %982 = vmatpush1.bf16.msra.mxu0 %v756
    %983 = vmatprep.subr.bf16.mxu0 %v766
    %984 = vmatpush1.bf16.msra.mxu0 %v765
    %985 = vmatprep.subr.bf16.mxu0 %v775
    %986 = vmatpush1.bf16.msra.mxu0 %v774
    %987 = vmatprep.subr.bf16.mxu0 %v784
    %988 = vmatpush1.bf16.msra.mxu0 %v783
    %989 = vmatprep.subr.bf16.mxu0 %v793
    %990 = vmatpush1.bf16.msra.mxu0 %v792
    %991 = vmatprep.subr.bf16.mxu0 %v802
    %992 = vmatpush1.bf16.msra.mxu0 %v801
    %993 = vmatprep.subr.bf16.mxu0 %v811
    %994 = vmatpush1.bf16.msra.mxu0 %v810
    %995 = vmatprep.mubr.bf16.mxu0 %v62
    %996 = vmatmul.mubr.bf16.gmra.mrb[0].mxu0 %v61
    %v997 = vpop.f32.mrb[0].mxu0
    %v998 = vadd.f32 0.0, %v997
    %v999 = vpop.f32.mrb[0].mxu0
    %v1000 = vadd.f32 0.0, %v999
    %v1001 = vpop.f32.mrb[0].mxu0
    %v1002 = vpop.f32.mrb[0].mxu0
    %1003 = vdwg.mxu0
    %1004 = vmatprep.subr.bf16.mxu0 %v678
    %1005 = vmatpush1.bf16.msra.mxu0 %v677
    %1006 = vmatprep.subr.bf16.mxu0 %v687
    %1007 = vmatpush1.bf16.msra.mxu0 %v686
    %1008 = vmatprep.subr.bf16.mxu0 %v696
    %1009 = vmatpush1.bf16.msra.mxu0 %v695
    %1010 = vmatprep.subr.bf16.mxu0 %v705
    %1011 = vmatpush1.bf16.msra.mxu0 %v704
    %1012 = vmatprep.subr.bf16.mxu0 %v714
    %1013 = vmatpush1.bf16.msra.mxu0 %v713
    %1014 = vmatprep.subr.bf16.mxu0 %v723
    %1015 = vmatpush1.bf16.msra.mxu0 %v722
    %1016 = vmatprep.subr.bf16.mxu0 %v732
    %1017 = vmatpush1.bf16.msra.mxu0 %v731
    %1018 = vmatprep.subr.bf16.mxu0 %v741
    %1019 = vmatpush1.bf16.msra.mxu0 %v740
    %1020 = vmatprep.subr.bf16.mxu0 %v750
    %1021 = vmatpush1.bf16.msra.mxu0 %v749
    %1022 = vmatprep.subr.bf16.mxu0 %v759
    %1023 = vmatpush1.bf16.msra.mxu0 %v758
    %1024 = vmatprep.subr.bf16.mxu0 %v768
    %1025 = vmatpush1.bf16.msra.mxu0 %v767
    %1026 = vmatprep.subr.bf16.mxu0 %v777
    %1027 = vmatpush1.bf16.msra.mxu0 %v776
    %1028 = vmatprep.subr.bf16.mxu0 %v786
    %1029 = vmatpush1.bf16.msra.mxu0 %v785
    %1030 = vmatprep.subr.bf16.mxu0 %v795
    %1031 = vmatpush1.bf16.msra.mxu0 %v794
    %1032 = vmatprep.subr.bf16.mxu0 %v804
    %1033 = vmatpush1.bf16.msra.mxu0 %v803
    %1034 = vmatprep.subr.bf16.mxu0 %v813
    %1035 = vmatpush1.bf16.msra.mxu0 %v812
    %1036 = vmatprep.mubr.bf16.mxu0 %v62
    %1037 = vmatmul.mubr.bf16.gmra.mrb[0].mxu0 %v61
    %v1038 = vpop.f32.mrb[0].mxu0
    %v1039 = vadd.f32 0.0, %v1038
    %v1040 = vpop.f32.mrb[0].mxu0
    %v1041 = vadd.f32 0.0, %v1040
    %v1042 = vpop.f32.mrb[0].mxu0
    %v1043 = vpop.f32.mrb[0].mxu0
    %1044 = vdwg.mxu0
    %1045 = vmatprep.subr.bf16.mxu0 %v680
    %1046 = vmatpush1.bf16.msra.mxu0 %v679
    %1047 = vmatprep.subr.bf16.mxu0 %v689
    %1048 = vmatpush1.bf16.msra.mxu0 %v688
    %1049 = vmatprep.subr.bf16.mxu0 %v698
    %1050 = vmatpush1.bf16.msra.mxu0 %v697
    %1051 = vmatprep.subr.bf16.mxu0 %v707
    %1052 = vmatpush1.bf16.msra.mxu0 %v706
    %1053 = vmatprep.subr.bf16.mxu0 %v716
    %1054 = vmatpush1.bf16.msra.mxu0 %v715
    %1055 = vmatprep.subr.bf16.mxu0 %v725
    %1056 = vmatpush1.bf16.msra.mxu0 %v724
    %1057 = vmatprep.subr.bf16.mxu0 %v734
    %1058 = vmatpush1.bf16.msra.mxu0 %v733
    %1059 = vmatprep.subr.bf16.mxu0 %v743
    %1060 = vmatpush1.bf16.msra.mxu0 %v742
    %1061 = vmatprep.subr.bf16.mxu0 %v752
    %1062 = vmatpush1.bf16.msra.mxu0 %v751
    %1063 = vmatprep.subr.bf16.mxu0 %v761
    %1064 = vmatpush1.bf16.msra.mxu0 %v760
    %1065 = vmatprep.subr.bf16.mxu0 %v770
    %1066 = vmatpush1.bf16.msra.mxu0 %v769
    %1067 = vmatprep.subr.bf16.mxu0 %v779
    %1068 = vmatpush1.bf16.msra.mxu0 %v778
    %1069 = vmatprep.subr.bf16.mxu0 %v788
    %1070 = vmatpush1.bf16.msra.mxu0 %v787
    %1071 = vmatprep.subr.bf16.mxu0 %v797
    %1072 = vmatpush1.bf16.msra.mxu0 %v796
    %1073 = vmatprep.subr.bf16.mxu0 %v806
    %1074 = vmatpush1.bf16.msra.mxu0 %v805
    %1075 = vmatprep.subr.bf16.mxu0 %v815
    %1076 = vmatpush1.bf16.msra.mxu0 %v814
    %1077 = vmatprep.mubr.bf16.mxu0 %v62
    %1078 = vmatmul.mubr.bf16.gmra.mrb[0].mxu0 %v61
    %v1079 = vpop.f32.mrb[0].mxu0
    %v1080 = vadd.f32 0.0, %v1079
    %v1081 = vpop.f32.mrb[0].mxu0
    %v1082 = vadd.f32 0.0, %v1081
    %v1083 = vpop.f32.mrb[0].mxu0
    %v1084 = vpop.f32.mrb[0].mxu0
    %1085 = vdwg.mxu0
    %1086 = vmatprep.subr.bf16.mxu0 %v682
    %1087 = vmatpush1.bf16.msra.mxu0 %v681
    %1088 = vmatprep.subr.bf16.mxu0 %v691
    %1089 = vmatpush1.bf16.msra.mxu0 %v690
    %1090 = vmatprep.subr.bf16.mxu0 %v700
    %1091 = vmatpush1.bf16.msra.mxu0 %v699
    %1092 = vmatprep.subr.bf16.mxu0 %v709
    %1093 = vmatpush1.bf16.msra.mxu0 %v708
    %1094 = vmatprep.subr.bf16.mxu0 %v718
    %1095 = vmatpush1.bf16.msra.mxu0 %v717
    %1096 = vmatprep.subr.bf16.mxu0 %v727
    %1097 = vmatpush1.bf16.msra.mxu0 %v726
    %1098 = vmatprep.subr.bf16.mxu0 %v736
    %1099 = vmatpush1.bf16.msra.mxu0 %v735
    %1100 = vmatprep.subr.bf16.mxu0 %v745
    %1101 = vmatpush1.bf16.msra.mxu0 %v744
    %1102 = vmatprep.subr.bf16.mxu0 %v754
    %1103 = vmatpush1.bf16.msra.mxu0 %v753
    %1104 = vmatprep.subr.bf16.mxu0 %v763
    %1105 = vmatpush1.bf16.msra.mxu0 %v762
    %1106 = vmatprep.subr.bf16.mxu0 %v772
    %1107 = vmatpush1.bf16.msra.mxu0 %v771
    %1108 = vmatprep.subr.bf16.mxu0 %v781
    %1109 = vmatpush1.bf16.msra.mxu0 %v780
    %1110 = vmatprep.subr.bf16.mxu0 %v790
    %1111 = vmatpush1.bf16.msra.mxu0 %v789
    %1112 = vmatprep.subr.bf16.mxu0 %v799
    %1113 = vmatpush1.bf16.msra.mxu0 %v798
    %1114 = vmatprep.subr.bf16.mxu0 %v808
    %1115 = vmatpush1.bf16.msra.mxu0 %v807
    %1116 = vmatprep.subr.bf16.mxu0 %v817
    %1117 = vmatpush1.bf16.msra.mxu0 %v816
    %1118 = vmatprep.mubr.bf16.mxu0 %v62
    %1119 = vmatmul.mubr.bf16.gmra.mrb[0].mxu0 %v61
    %v1120 = vpop.f32.mrb[0].mxu0
    %v1121 = vadd.f32 0.0, %v1120
    %v1122 = vpop.f32.mrb[0].mxu0
    %v1123 = vadd.f32 0.0, %v1122
    %v1124 = vpop.f32.mrb[0].mxu0
    %v1125 = vpop.f32.mrb[0].mxu0
    %1126 = vdwg.mxu0
    %1127 = vmatprep.subr.bf16.mxu0 0
    %1128 = vmatpush1.bf16.msra.mxu0 %v683
    %1129 = vmatprep.subr.bf16.mxu0 0
    %1130 = vmatpush1.bf16.msra.mxu0 %v692
    %1131 = vmatprep.subr.bf16.mxu0 0
    %1132 = vmatpush1.bf16.msra.mxu0 %v701
    %1133 = vmatprep.subr.bf16.mxu0 0
    %1134 = vmatpush1.bf16.msra.mxu0 %v710
    %1135 = vmatprep.subr.bf16.mxu0 0
    %1136 = vmatpush1.bf16.msra.mxu0 %v719
    %1137 = vmatprep.subr.bf16.mxu0 0
    %1138 = vmatpush1.bf16.msra.mxu0 %v728
    %1139 = vmatprep.subr.bf16.mxu0 0
    %1140 = vmatpush1.bf16.msra.mxu0 %v737
    %1141 = vmatprep.subr.bf16.mxu0 0
    %1142 = vmatpush1.bf16.msra.mxu0 %v746
    %1143 = vmatprep.subr.bf16.mxu0 0
    %1144 = vmatpush1.bf16.msra.mxu0 %v755
    %1145 = vmatprep.subr.bf16.mxu0 0
    %1146 = vmatpush1.bf16.msra.mxu0 %v764
    %1147 = vmatprep.subr.bf16.mxu0 0
    %1148 = vmatpush1.bf16.msra.mxu0 %v773
    %1149 = vmatprep.subr.bf16.mxu0 0
    %1150 = vmatpush1.bf16.msra.mxu0 %v782
    %1151 = vmatprep.subr.bf16.mxu0 0
    %1152 = vmatpush1.bf16.msra.mxu0 %v791
    %1153 = vmatprep.subr.bf16.mxu0 0
    %1154 = vmatpush1.bf16.msra.mxu0 %v800
    %1155 = vmatprep.subr.bf16.mxu0 0
    %1156 = vmatpush1.bf16.msra.mxu0 %v809
    %1157 = vmatprep.subr.bf16.mxu0 0
    %1158 = vmatpush1.bf16.msra.mxu0 %v818
    %1159 = vmatprep.mubr.bf16.mxu0 %v62
    %1160 = vmatmul.mubr.bf16.gmra.mrb[0].mxu0 %v61
    %v1161 = vpop.f32.mrb[0].mxu0
    %v1162 = vadd.f32 0.0, %v1161
    %v1163 = vpop.f32.mrb[0].mxu0
    %v1164 = vpop.f32.mrb[0].mxu0
    %v1165 = vpop.f32.mrb[0].mxu0
    %1166 = vdwg.mxu0
    %v1168 = vrot.slane %v1000, 7
    %v1171 = vrot.slane %v1039, 6
    %v1174 = vrot.slane %v1041, 5
    %v1177 = vrot.slane %v1080, 4
    %v1180 = vrot.slane %v1082, 3
    %v1183 = vrot.slane %v1121, 2
    %v1186 = vrot.slane %v1123, 1
    %vm1188 = vcmask 1040384
    %v1189 = vsel %vm1188, %v998, %v1168
    %vm1190 = vcmask 1041408
    %v1191 = vsel %vm1190, %v1189, %v1171
    %vm1192 = vcmask 1042432
    %v1193 = vsel %vm1192, %v1191, %v1174
    %vm1194 = vcmask 1043456
    %v1195 = vsel %vm1194, %v1193, %v1177
    %vm1196 = vcmask 1044480
    %v1197 = vsel %vm1196, %v1195, %v1180
    %vm1198 = vcmask 1045504
    %v1199 = vsel %vm1198, %v1197, %v1183
    %vm1200 = vcmask 1046528
    %v1201 = vsel %vm1200, %v1199, %v1186
    %v1202 = vpack.c.bf16 %v1162, %v1201
    %v1203 = vld [vmem:[%s13] sm:$0xff]
    %v1204 = vld [vmem:[%s13 + $0x8] sm:$0xff]
    %v1205 = vld [vmem:[%s13 + $0x10] sm:$0xff]
    %v1206 = vld [vmem:[%s13 + $0x18] sm:$0xff]
    %1208 = vset.pattern.permute.xlu0 0
    %1209 = vperm.xlu0 %1208, %v1203
    %v1210 = vpop.permute.xlu0 %1209
    %1213 = vset.pattern.permute.xlu0 0
    %1214 = vperm.xlu0 %1213, %v1204
    %v1215 = vpop.permute.xlu0 %1214
    %1218 = vset.pattern.permute.xlu0 0
    %1219 = vperm.xlu0 %1218, %v1205
    %v1220 = vpop.permute.xlu0 %1219
    %1223 = vset.pattern.permute.xlu0 0
    %1224 = vperm.xlu0 %1223, %v1206
    %v1225 = vpop.permute.xlu0 %1224
    %v1231 = vunpack.c.l.b16 %v223
    %v1232 = vunpack.c.l.b16 %v224
    %v1233 = vunpack.c.l.b16 %v225
    %v1234 = vunpack.c.l.b16 %v226
    %v1235 = vpack.c.b16 %v1232, %v1231
    %v1236 = vpack.c.b16 %v1234, %v1233
    %vm1237 = vcmask 72704
    %v1239 = vsel %vm1237, %v1235, 0
    %v1242 = vsel %vm1237, %v1236, 0
    %v1244 = vsel %vm1194, 4294967295, 65535
    %v1245 = vsel %vm1196, %v1244, 0
    %v1247 = vand.u32 %v1202, %v1245
    %1249 = vmatprep.subr.bf16.mxu0 0
    %1250 = vmatpush1.bf16.msra.mxu0 %v1247
    %1251 = vmatprep.subr.bf16.mxu0 0
    %1252 = vmatpush1.bf16.msra.mxu0 0
    %1253 = vmatprep.subr.bf16.mxu0 0
    %1254 = vmatpush1.bf16.msra.mxu0 0
    %1255 = vmatprep.subr.bf16.mxu0 0
    %1256 = vmatpush1.bf16.msra.mxu0 0
    %1257 = vmatprep.subr.bf16.mxu0 0
    %1258 = vmatpush1.bf16.msra.mxu0 0
    %1259 = vmatprep.subr.bf16.mxu0 0
    %1260 = vmatpush1.bf16.msra.mxu0 0
    %1261 = vmatprep.subr.bf16.mxu0 0
    %1262 = vmatpush1.bf16.msra.mxu0 0
    %1263 = vmatprep.subr.bf16.mxu0 0
    %1264 = vmatpush1.bf16.msra.mxu0 0
    %1265 = vmatprep.subr.bf16.mxu0 0
    %1266 = vmatpush1.bf16.msra.mxu0 0
    %1267 = vmatprep.subr.bf16.mxu0 0
    %1268 = vmatpush1.bf16.msra.mxu0 0
    %1269 = vmatprep.subr.bf16.mxu0 0
    %1270 = vmatpush1.bf16.msra.mxu0 0
    %1271 = vmatprep.subr.bf16.mxu0 0
    %1272 = vmatpush1.bf16.msra.mxu0 0
    %1273 = vmatprep.subr.bf16.mxu0 0
    %1274 = vmatpush1.bf16.msra.mxu0 0
    %1275 = vmatprep.subr.bf16.mxu0 0
    %1276 = vmatpush1.bf16.msra.mxu0 0
    %1277 = vmatprep.subr.bf16.mxu0 0
    %1278 = vmatpush1.bf16.msra.mxu0 0
    %1279 = vmatprep.subr.bf16.mxu0 0
    %1280 = vmatpush1.bf16.msra.mxu0 0
    %1281 = vmatprep.mubr.bf16.mxu0 0
    %1282 = vmatmul.mubr.bf16.gmra.mrb[0].mxu0 %v1239
    %v1283 = vpop.f32.mrb[0].mxu0
    %v1284 = vadd.f32 %v1210, %v1283
    %v1285 = vpop.f32.mrb[0].mxu0
    %v1286 = vpop.f32.mrb[0].mxu0
    %v1287 = vadd.f32 %v1215, %v1286
    %v1288 = vpop.f32.mrb[0].mxu0
    %1289 = vmatprep.mubr.bf16.mxu0 0
    %1290 = vmatmul.mubr.bf16.gmra.mrb[0].mxu0 %v1242
    %v1291 = vpop.f32.mrb[0].mxu0
    %v1292 = vadd.f32 %v1220, %v1291
    %v1293 = vpop.f32.mrb[0].mxu0
    %v1294 = vpop.f32.mrb[0].mxu0
    %v1295 = vadd.f32 %v1225, %v1294
    %v1296 = vpop.f32.mrb[0].mxu0
    %1297 = vdwg.mxu0
    %v1298 = vmax.f32 %v1284, 0.0
    %v1299 = vmax.f32 %v1287, 0.0
    %v1300 = vmax.f32 %v1292, 0.0
    %v1301 = vmax.f32 %v1295, 0.0
    %1302 = vadd.xlane.f32.xlu0 %v1298
    %v1303 = vpop.xlane.xlu0 %1302
    %1304 = vadd.xlane.f32.xlu0 %v1299
    %v1305 = vpop.xlane.xlu0 %1304
    %1306 = vadd.xlane.f32.xlu0 %v1300
    %v1307 = vpop.xlane.xlu0 %1306
    %1308 = vadd.xlane.f32.xlu0 %v1301
    %v1309 = vpop.xlane.xlu0 %1308
    %v1310 = vmul.f32 %v1303, 0.0078125
    %v1311 = vmul.f32 %v1305, 0.0078125
    %v1312 = vmul.f32 %v1307, 0.0078125
    %v1313 = vmul.f32 %v1309, 0.0078125
    %v1314 = vmul.f32 %v1298, %v1298
    %v1315 = vmul.f32 %v1299, %v1299
    %v1316 = vmul.f32 %v1300, %v1300
    %v1317 = vmul.f32 %v1301, %v1301
    %1318 = vadd.xlane.f32.xlu0 %v1314
    %v1319 = vpop.xlane.xlu0 %1318
    %1320 = vadd.xlane.f32.xlu0 %v1315
    %v1321 = vpop.xlane.xlu0 %1320
    %1322 = vadd.xlane.f32.xlu0 %v1316
    %v1323 = vpop.xlane.xlu0 %1322
    %1324 = vadd.xlane.f32.xlu0 %v1317
    %v1325 = vpop.xlane.xlu0 %1324
    %v1326 = vmul.f32 %v1319, 0.0078125
    %v1327 = vmul.f32 %v1321, 0.0078125
    %v1328 = vmul.f32 %v1323, 0.0078125
    %v1329 = vmul.f32 %v1325, 0.0078125
    %v1330 = vmul.f32 %v1310, %v1310
    %v1331 = vmul.f32 %v1311, %v1311
    %v1332 = vmul.f32 %v1312, %v1312
    %v1333 = vmul.f32 %v1313, %v1313
    %v1334 = vsub.f32 %v1326, %v1330
    %v1335 = vsub.f32 %v1327, %v1331
    %v1336 = vsub.f32 %v1328, %v1332
    %v1337 = vsub.f32 %v1329, %v1333
    %v1338 = vmax.f32 %v1334, 0.0
    %v1339 = vmax.f32 %v1335, 0.0
    %v1340 = vmax.f32 %v1336, 0.0
    %v1341 = vmax.f32 %v1337, 0.0
    %v1342 = vadd.f32 %v1338, 1e-05
    %v1343 = vadd.f32 %v1339, 1e-05
    %v1344 = vadd.f32 %v1340, 1e-05
    %v1345 = vadd.f32 %v1341, 1e-05
    %v1346 = vrsqrt.pop %v1342
    %v1347 = vrsqrt.pop %v1343
    %v1348 = vrsqrt.pop %v1344
    %v1349 = vrsqrt.pop %v1345
    %v1350 = vmul.f32 %v1203, %v1346
    %v1351 = vmul.f32 %v1204, %v1347
    %v1352 = vmul.f32 %v1205, %v1348
    %v1353 = vmul.f32 %v1206, %v1349
    %v1354 = vmul.f32 %v1310, %v1350
    %v1355 = vmul.f32 %v1311, %v1351
    %v1356 = vmul.f32 %v1312, %v1352
    %v1357 = vmul.f32 %v1313, %v1353
    %1362 = vrot.lane.b32.xlu0 %v1354, 1
    %v1363 = vpop.permute.xlu0 %1362
    %1364 = vrot.lane.b32.xlu0 %v1355, 1
    %v1365 = vpop.permute.xlu0 %1364
    %1366 = vrot.lane.b32.xlu0 %v1356, 1
    %v1367 = vpop.permute.xlu0 %1366
    %1368 = vrot.lane.b32.xlu0 %v1357, 1
    %v1369 = vpop.permute.xlu0 %1368
    %v1374 = vsub.f32 %v1203, %v1363
    %v1375 = vsub.f32 %v1204, %v1365
    %v1376 = vsub.f32 %v1205, %v1367
    %v1377 = vsub.f32 %v1206, %v1369
    %1379 = vset.pattern.permute.xlu0 1
    %1380 = vperm.xlu0 %1379, %v1350
    %v1381 = vpop.permute.xlu0 %1380
    %1384 = vset.pattern.permute.xlu0 1
    %1385 = vperm.xlu0 %1384, %v1351
    %v1386 = vpop.permute.xlu0 %1385
    %1389 = vset.pattern.permute.xlu0 1
    %1390 = vperm.xlu0 %1389, %v1352
    %v1391 = vpop.permute.xlu0 %1390
    %1394 = vset.pattern.permute.xlu0 1
    %1395 = vperm.xlu0 %1394, %v1353
    %v1396 = vpop.permute.xlu0 %1395
    %v1398 = vmul.f32 %v1298, %v1381
    %v1399 = vmul.f32 %v1299, %v1386
    %v1400 = vmul.f32 %v1300, %v1391
    %v1401 = vmul.f32 %v1301, %v1396
    %1403 = vset.pattern.permute.xlu0 2
    %1404 = vperm.xlu0 %1403, %v1374
    %v1405 = vpop.permute.xlu0 %1404
    %1408 = vset.pattern.permute.xlu0 2
    %1409 = vperm.xlu0 %1408, %v1375
    %v1410 = vpop.permute.xlu0 %1409
    %1413 = vset.pattern.permute.xlu0 2
    %1414 = vperm.xlu0 %1413, %v1376
    %v1415 = vpop.permute.xlu0 %1414
    %1418 = vset.pattern.permute.xlu0 2
    %1419 = vperm.xlu0 %1418, %v1377
    %v1420 = vpop.permute.xlu0 %1419
    %v1422 = vadd.f32 %v1398, %v1405
    %v1423 = vadd.f32 %v1399, %v1410
    %v1424 = vadd.f32 %v1400, %v1415
    %v1425 = vadd.f32 %v1401, %v1420
    %v1426 = vpack.c.bf16 %v1423, %v1422
    %v1427 = vpack.c.bf16 %v1425, %v1424
    %v1428 = vld [vmem:[%s2] sm:$0xff]
    %v1429 = vld [vmem:[%s2 + $0x8] sm:$0xff]
    %v1430 = vld [vmem:[%s2 + $0x10] sm:$0xff]
    %v1431 = vld [vmem:[%s2 + $0x18] sm:$0xff]
    %v1432 = vld [vmem:[%s2 + $0x20] sm:$0xff]
    %v1433 = vld [vmem:[%s2 + $0x28] sm:$0xff]
    %v1434 = vld [vmem:[%s2 + $0x30] sm:$0xff]
    %v1435 = vld [vmem:[%s2 + $0x38] sm:$0xff]
    %v1436 = vld [vmem:[%s2 + $0x40] sm:$0xff]
    %v1437 = vld [vmem:[%s2 + $0x48] sm:$0xff]
    %v1438 = vld [vmem:[%s2 + $0x50] sm:$0xff]
    %v1439 = vld [vmem:[%s2 + $0x58] sm:$0xff]
    %v1440 = vld [vmem:[%s2 + $0x60] sm:$0xff]
    %v1441 = vld [vmem:[%s2 + $0x68] sm:$0xff]
    %v1442 = vld [vmem:[%s2 + $0x70] sm:$0xff]
    %v1443 = vld [vmem:[%s2 + $0x78] sm:$0xff]
    %v1444 = vld [vmem:[%s2 + $0x80] sm:$0xff]
    %v1445 = vld [vmem:[%s2 + $0x88] sm:$0xff]
    %v1446 = vld [vmem:[%s2 + $0x90] sm:$0xff]
    %v1447 = vld [vmem:[%s2 + $0x98] sm:$0xff]
    %v1448 = vld [vmem:[%s2 + $0xa0] sm:$0xff]
    %v1449 = vld [vmem:[%s2 + $0xa8] sm:$0xff]
    %v1450 = vld [vmem:[%s2 + $0xb0] sm:$0xff]
    %v1451 = vld [vmem:[%s2 + $0xb8] sm:$0xff]
    %v1452 = vld [vmem:[%s2 + $0xc0] sm:$0xff]
    %v1453 = vld [vmem:[%s2 + $0xc8] sm:$0xff]
    %v1454 = vld [vmem:[%s2 + $0xd0] sm:$0xff]
    %v1455 = vld [vmem:[%s2 + $0xd8] sm:$0xff]
    %v1456 = vld [vmem:[%s2 + $0xe0] sm:$0xff]
    %v1457 = vld [vmem:[%s2 + $0xe8] sm:$0xff]
    %v1458 = vld [vmem:[%s2 + $0xf0] sm:$0xff]
    %v1459 = vld [vmem:[%s2 + $0xf8] sm:$0xff]
    %v1460 = vld [vmem:[%s8] sm:$0xff]
    %v1461 = vld [vmem:[%s8 + $0x8] sm:$0xff]
    %v1462 = vld [vmem:[%s8 + $0x10] sm:$0xff]
    %v1463 = vld [vmem:[%s8 + $0x18] sm:$0xff]
    %v1464 = vld [vmem:[%s8 + $0x20] sm:$0xff]
    %v1465 = vld [vmem:[%s8 + $0x28] sm:$0xff]
    %v1466 = vld [vmem:[%s8 + $0x30] sm:$0xff]
    %v1467 = vld [vmem:[%s8 + $0x38] sm:$0xff]
    %v1500 = vunpack.c.l.b16 %v1428
    %v1501 = vunpack.c.h.b16 %v1428
    %v1502 = vunpack.c.l.b16 %v1429
    %v1503 = vunpack.c.h.b16 %v1429
    %v1504 = vunpack.c.l.b16 %v1430
    %v1505 = vunpack.c.h.b16 %v1430
    %v1506 = vunpack.c.l.b16 %v1431
    %v1507 = vunpack.c.h.b16 %v1431
    %v1508 = vunpack.c.l.b16 %v1432
    %v1509 = vunpack.c.h.b16 %v1432
    %v1510 = vunpack.c.l.b16 %v1433
    %v1511 = vunpack.c.h.b16 %v1433
    %v1512 = vunpack.c.l.b16 %v1434
    %v1513 = vunpack.c.h.b16 %v1434
    %v1514 = vunpack.c.l.b16 %v1435
    %v1515 = vunpack.c.h.b16 %v1435
    %v1516 = vunpack.c.l.b16 %v1436
    %v1517 = vunpack.c.h.b16 %v1436
    %v1518 = vunpack.c.l.b16 %v1437
    %v1519 = vunpack.c.h.b16 %v1437
    %v1520 = vunpack.c.l.b16 %v1438
    %v1521 = vunpack.c.h.b16 %v1438
    %v1522 = vunpack.c.l.b16 %v1439
    %v1523 = vunpack.c.h.b16 %v1439
    %v1524 = vunpack.c.l.b16 %v1440
    %v1525 = vunpack.c.h.b16 %v1440
    %v1526 = vunpack.c.l.b16 %v1441
    %v1527 = vunpack.c.h.b16 %v1441
    %v1528 = vunpack.c.l.b16 %v1442
    %v1529 = vunpack.c.h.b16 %v1442
    %v1530 = vunpack.c.l.b16 %v1443
    %v1531 = vunpack.c.h.b16 %v1443
    %v1532 = vunpack.c.l.b16 %v1444
    %v1533 = vunpack.c.h.b16 %v1444
    %v1534 = vunpack.c.l.b16 %v1445
    %v1535 = vunpack.c.h.b16 %v1445
    %v1536 = vunpack.c.l.b16 %v1446
    %v1537 = vunpack.c.h.b16 %v1446
    %v1538 = vunpack.c.l.b16 %v1447
    %v1539 = vunpack.c.h.b16 %v1447
    %v1540 = vunpack.c.l.b16 %v1448
    %v1541 = vunpack.c.h.b16 %v1448
    %v1542 = vunpack.c.l.b16 %v1449
    %v1543 = vunpack.c.h.b16 %v1449
    %v1544 = vunpack.c.l.b16 %v1450
    %v1545 = vunpack.c.h.b16 %v1450
    %v1546 = vunpack.c.l.b16 %v1451
    %v1547 = vunpack.c.h.b16 %v1451
    %v1548 = vunpack.c.l.b16 %v1452
    %v1549 = vunpack.c.h.b16 %v1452
    %v1550 = vunpack.c.l.b16 %v1453
    %v1551 = vunpack.c.h.b16 %v1453
    %v1552 = vunpack.c.l.b16 %v1454
    %v1553 = vunpack.c.h.b16 %v1454
    %v1554 = vunpack.c.l.b16 %v1455
    %v1555 = vunpack.c.h.b16 %v1455
    %v1556 = vunpack.c.l.b16 %v1456
    %v1557 = vunpack.c.h.b16 %v1456
    %v1558 = vunpack.c.l.b16 %v1457
    %v1559 = vunpack.c.h.b16 %v1457
    %v1560 = vunpack.c.l.b16 %v1458
    %v1561 = vunpack.c.h.b16 %v1458
    %v1562 = vunpack.c.l.b16 %v1459
    %v1563 = vunpack.c.h.b16 %v1459
    %v1564 = vpack.c.b16 %v1504, %v1500
    %v1565 = vpack.c.b16 %v1505, %v1501
    %v1566 = vpack.c.b16 %v1506, %v1502
    %v1567 = vpack.c.b16 %v1507, %v1503
    %v1568 = vpack.c.b16 %v1512, %v1508
    %v1569 = vpack.c.b16 %v1513, %v1509
    %v1570 = vpack.c.b16 %v1514, %v1510
    %v1571 = vpack.c.b16 %v1515, %v1511
    %v1572 = vpack.c.b16 %v1520, %v1516
    %v1573 = vpack.c.b16 %v1521, %v1517
    %v1574 = vpack.c.b16 %v1522, %v1518
    %v1575 = vpack.c.b16 %v1523, %v1519
    %v1576 = vpack.c.b16 %v1528, %v1524
    %v1577 = vpack.c.b16 %v1529, %v1525
    %v1578 = vpack.c.b16 %v1530, %v1526
    %v1579 = vpack.c.b16 %v1531, %v1527
    %v1580 = vpack.c.b16 %v1536, %v1532
    %v1581 = vpack.c.b16 %v1537, %v1533
    %v1582 = vpack.c.b16 %v1538, %v1534
    %v1583 = vpack.c.b16 %v1539, %v1535
    %v1584 = vpack.c.b16 %v1544, %v1540
    %v1585 = vpack.c.b16 %v1545, %v1541
    %v1586 = vpack.c.b16 %v1546, %v1542
    %v1587 = vpack.c.b16 %v1547, %v1543
    %v1588 = vpack.c.b16 %v1552, %v1548
    %v1589 = vpack.c.b16 %v1553, %v1549
    %v1590 = vpack.c.b16 %v1554, %v1550
    %v1591 = vpack.c.b16 %v1555, %v1551
    %v1592 = vpack.c.b16 %v1560, %v1556
    %v1593 = vpack.c.b16 %v1561, %v1557
    %v1594 = vpack.c.b16 %v1562, %v1558
    %v1595 = vpack.c.b16 %v1563, %v1559
    %1628 = vmatprep.subr.bf16.mxu0 %v1565
    %1629 = vmatpush1.bf16.msra.mxu0 %v1564
    %1630 = vmatprep.subr.bf16.mxu0 %v1569
    %1631 = vmatpush1.bf16.msra.mxu0 %v1568
    %1632 = vmatprep.subr.bf16.mxu0 %v1573
    %1633 = vmatpush1.bf16.msra.mxu0 %v1572
    %1634 = vmatprep.subr.bf16.mxu0 %v1577
    %1635 = vmatpush1.bf16.msra.mxu0 %v1576
    %1636 = vmatprep.subr.bf16.mxu0 %v1581
    %1637 = vmatpush1.bf16.msra.mxu0 %v1580
    %1638 = vmatprep.subr.bf16.mxu0 %v1585
    %1639 = vmatpush1.bf16.msra.mxu0 %v1584
    %1640 = vmatprep.subr.bf16.mxu0 %v1589
    %1641 = vmatpush1.bf16.msra.mxu0 %v1588
    %1642 = vmatprep.subr.bf16.mxu0 %v1593
    %1643 = vmatpush1.bf16.msra.mxu0 %v1592
    %1644 = vmatprep.subr.bf16.mxu0 0
    %1645 = vmatpush1.bf16.msra.mxu0 0
    %1646 = vmatprep.subr.bf16.mxu0 0
    %1647 = vmatpush1.bf16.msra.mxu0 0
    %1648 = vmatprep.subr.bf16.mxu0 0
    %1649 = vmatpush1.bf16.msra.mxu0 0
    %1650 = vmatprep.subr.bf16.mxu0 0
    %1651 = vmatpush1.bf16.msra.mxu0 0
    %1652 = vmatprep.subr.bf16.mxu0 0
    %1653 = vmatpush1.bf16.msra.mxu0 0
    %1654 = vmatprep.subr.bf16.mxu0 0
    %1655 = vmatpush1.bf16.msra.mxu0 0
    %1656 = vmatprep.subr.bf16.mxu0 0
    %1657 = vmatpush1.bf16.msra.mxu0 0
    %1658 = vmatprep.subr.bf16.mxu0 0
    %1659 = vmatpush1.bf16.msra.mxu0 0
    %1660 = vmatprep.mubr.bf16.mxu0 0
    %1661 = vmatmul.mubr.bf16.gmra.mrb[0].mxu0 %v1426
    %v1662 = vpop.f32.mrb[0].mxu0
    %v1663 = vadd.f32 0.0, %v1662
    %v1664 = vpop.f32.mrb[0].mxu0
    %v1665 = vadd.f32 0.0, %v1664
    %v1666 = vpop.f32.mrb[0].mxu0
    %v1667 = vadd.f32 0.0, %v1666
    %v1668 = vpop.f32.mrb[0].mxu0
    %v1669 = vadd.f32 0.0, %v1668
    %1670 = vmatprep.mubr.bf16.mxu0 0
    %1671 = vmatmul.mubr.bf16.gmra.mrb[0].mxu0 %v1427
    %v1672 = vpop.f32.mrb[0].mxu0
    %v1673 = vadd.f32 0.0, %v1672
    %v1674 = vpop.f32.mrb[0].mxu0
    %v1675 = vadd.f32 0.0, %v1674
    %v1676 = vpop.f32.mrb[0].mxu0
    %v1677 = vadd.f32 0.0, %v1676
    %v1678 = vpop.f32.mrb[0].mxu0
    %v1679 = vadd.f32 0.0, %v1678
    %1680 = vdwg.mxu0
    %1681 = vmatprep.subr.bf16.mxu0 %v1567
    %1682 = vmatpush1.bf16.msra.mxu0 %v1566
    %1683 = vmatprep.subr.bf16.mxu0 %v1571
    %1684 = vmatpush1.bf16.msra.mxu0 %v1570
    %1685 = vmatprep.subr.bf16.mxu0 %v1575
    %1686 = vmatpush1.bf16.msra.mxu0 %v1574
    %1687 = vmatprep.subr.bf16.mxu0 %v1579
    %1688 = vmatpush1.bf16.msra.mxu0 %v1578
    %1689 = vmatprep.subr.bf16.mxu0 %v1583
    %1690 = vmatpush1.bf16.msra.mxu0 %v1582
    %1691 = vmatprep.subr.bf16.mxu0 %v1587
    %1692 = vmatpush1.bf16.msra.mxu0 %v1586
    %1693 = vmatprep.subr.bf16.mxu0 %v1591
    %1694 = vmatpush1.bf16.msra.mxu0 %v1590
    %1695 = vmatprep.subr.bf16.mxu0 %v1595
    %1696 = vmatpush1.bf16.msra.mxu0 %v1594
    %1697 = vmatprep.subr.bf16.mxu0 0
    %1698 = vmatpush1.bf16.msra.mxu0 0
    %1699 = vmatprep.subr.bf16.mxu0 0
    %1700 = vmatpush1.bf16.msra.mxu0 0
    %1701 = vmatprep.subr.bf16.mxu0 0
    %1702 = vmatpush1.bf16.msra.mxu0 0
    %1703 = vmatprep.subr.bf16.mxu0 0
    %1704 = vmatpush1.bf16.msra.mxu0 0
    %1705 = vmatprep.subr.bf16.mxu0 0
    %1706 = vmatpush1.bf16.msra.mxu0 0
    %1707 = vmatprep.subr.bf16.mxu0 0
    %1708 = vmatpush1.bf16.msra.mxu0 0
    %1709 = vmatprep.subr.bf16.mxu0 0
    %1710 = vmatpush1.bf16.msra.mxu0 0
    %1711 = vmatprep.subr.bf16.mxu0 0
    %1712 = vmatpush1.bf16.msra.mxu0 0
    %1713 = vmatprep.mubr.bf16.mxu0 0
    %1714 = vmatmul.mubr.bf16.gmra.mrb[0].mxu0 %v1426
    %v1715 = vpop.f32.mrb[0].mxu0
    %v1716 = vadd.f32 0.0, %v1715
    %v1717 = vpop.f32.mrb[0].mxu0
    %v1718 = vadd.f32 0.0, %v1717
    %v1719 = vpop.f32.mrb[0].mxu0
    %v1720 = vadd.f32 0.0, %v1719
    %v1721 = vpop.f32.mrb[0].mxu0
    %v1722 = vadd.f32 0.0, %v1721
    %1723 = vmatprep.mubr.bf16.mxu0 0
    %1724 = vmatmul.mubr.bf16.gmra.mrb[0].mxu0 %v1427
    %v1725 = vpop.f32.mrb[0].mxu0
    %v1726 = vadd.f32 0.0, %v1725
    %v1727 = vpop.f32.mrb[0].mxu0
    %v1728 = vadd.f32 0.0, %v1727
    %v1729 = vpop.f32.mrb[0].mxu0
    %v1730 = vadd.f32 0.0, %v1729
    %v1731 = vpop.f32.mrb[0].mxu0
    %v1732 = vadd.f32 0.0, %v1731
    %1733 = vdwg.mxu0
    %1738 = vrot.lane.b32.xlu0 %v1663, 64
    %v1739 = vpop.permute.xlu0 %1738
    %1740 = vrot.lane.b32.xlu0 %v1667, 64
    %v1741 = vpop.permute.xlu0 %1740
    %1742 = vrot.lane.b32.xlu0 %v1673, 64
    %v1743 = vpop.permute.xlu0 %1742
    %1744 = vrot.lane.b32.xlu0 %v1677, 64
    %v1745 = vpop.permute.xlu0 %1744
    %1754 = vrot.lane.b32.xlu0 %v1665, 64
    %v1755 = vpop.permute.xlu0 %1754
    %1756 = vrot.lane.b32.xlu0 %v1669, 64
    %v1757 = vpop.permute.xlu0 %1756
    %1758 = vrot.lane.b32.xlu0 %v1675, 64
    %v1759 = vpop.permute.xlu0 %1758
    %1760 = vrot.lane.b32.xlu0 %v1679, 64
    %v1761 = vpop.permute.xlu0 %1760
    %1770 = vrot.lane.b32.xlu0 %v1716, 64
    %v1771 = vpop.permute.xlu0 %1770
    %1772 = vrot.lane.b32.xlu0 %v1720, 64
    %v1773 = vpop.permute.xlu0 %1772
    %1774 = vrot.lane.b32.xlu0 %v1726, 64
    %v1775 = vpop.permute.xlu0 %1774
    %1776 = vrot.lane.b32.xlu0 %v1730, 64
    %v1777 = vpop.permute.xlu0 %1776
    %v1782 = vpack.c.bf16 %v1667, %v1663
    %v1783 = vpack.c.bf16 %v1677, %v1673
    %v1784 = vpack.c.bf16 %v1741, %v1739
    %v1785 = vpack.c.bf16 %v1745, %v1743
    %v1786 = vpack.c.bf16 %v1669, %v1665
    %v1787 = vpack.c.bf16 %v1679, %v1675
    %v1788 = vpack.c.bf16 %v1757, %v1755
    %v1789 = vpack.c.bf16 %v1761, %v1759
    %v1790 = vpack.c.bf16 %v1720, %v1716
    %v1791 = vpack.c.bf16 %v1730, %v1726
    %v1792 = vpack.c.bf16 %v1773, %v1771
    %v1793 = vpack.c.bf16 %v1777, %v1775
    %v1794 = vpack.c.bf16 %v1722, %v1718
    %v1795 = vpack.c.bf16 %v1732, %v1728
    %s1796 = scalar_lea.vmem %s13, 128
    %v1797 = vld [vmem:[%s1796] sm:$0xff]
    %v1798 = vld [vmem:[%s1796 + $0x8] sm:$0xff]
    %v1799 = vld [vmem:[%s1796 + $0x10] sm:$0xff]
    %v1800 = vld [vmem:[%s1796 + $0x18] sm:$0xff]
    %v1801 = vld [vmem:[%s1796 + $0x20] sm:$0xff]
    %v1802 = vld [vmem:[%s1796 + $0x28] sm:$0xff]
    %v1803 = vld [vmem:[%s1796 + $0x30] sm:$0xff]
    %v1804 = vld [vmem:[%s1796 + $0x38] sm:$0xff]
    %1806 = vset.pattern.permute.xlu0 0
    %1807 = vperm.xlu0 %1806, %v1797
    %v1808 = vpop.permute.xlu0 %1807
    %1811 = vset.pattern.permute.xlu0 0
    %1812 = vperm.xlu0 %1811, %v1798
    %v1813 = vpop.permute.xlu0 %1812
    %1816 = vset.pattern.permute.xlu0 0
    %1817 = vperm.xlu0 %1816, %v1799
    %v1818 = vpop.permute.xlu0 %1817
    %1821 = vset.pattern.permute.xlu0 0
    %1822 = vperm.xlu0 %1821, %v1800
    %v1823 = vpop.permute.xlu0 %1822
    %1826 = vset.pattern.permute.xlu0 0
    %1827 = vperm.xlu0 %1826, %v1801
    %v1828 = vpop.permute.xlu0 %1827
    %1831 = vset.pattern.permute.xlu0 0
    %1832 = vperm.xlu0 %1831, %v1802
    %v1833 = vpop.permute.xlu0 %1832
    %1836 = vset.pattern.permute.xlu0 0
    %1837 = vperm.xlu0 %1836, %v1803
    %v1838 = vpop.permute.xlu0 %1837
    %1841 = vset.pattern.permute.xlu0 0
    %1842 = vperm.xlu0 %1841, %v1804
    %v1843 = vpop.permute.xlu0 %1842
    %v1853 = vunpack.c.l.b16 %v1460
    %v1854 = vunpack.c.h.b16 %v1460
    %v1855 = vunpack.c.l.b16 %v1461
    %v1856 = vunpack.c.h.b16 %v1461
    %v1857 = vunpack.c.l.b16 %v1462
    %v1858 = vunpack.c.h.b16 %v1462
    %v1859 = vunpack.c.l.b16 %v1463
    %v1860 = vunpack.c.h.b16 %v1463
    %v1861 = vunpack.c.l.b16 %v1464
    %v1862 = vunpack.c.h.b16 %v1464
    %v1863 = vunpack.c.l.b16 %v1465
    %v1864 = vunpack.c.h.b16 %v1465
    %v1865 = vunpack.c.l.b16 %v1466
    %v1866 = vunpack.c.h.b16 %v1466
    %v1867 = vunpack.c.l.b16 %v1467
    %v1868 = vunpack.c.h.b16 %v1467
    %v1869 = vpack.c.b16 %v1855, %v1853
    %v1870 = vpack.c.b16 %v1856, %v1854
    %v1871 = vpack.c.b16 %v1859, %v1857
    %v1872 = vpack.c.b16 %v1860, %v1858
    %v1873 = vpack.c.b16 %v1863, %v1861
    %v1874 = vpack.c.b16 %v1864, %v1862
    %v1875 = vpack.c.b16 %v1867, %v1865
    %v1876 = vpack.c.b16 %v1868, %v1866
    %vm1881 = vcmask 785408
    %v1883 = vsel %vm1881, %v1870, 0
    %v1886 = vsel %vm1881, %v1872, 0
    %v1889 = vsel %vm1881, %v1874, 0
    %v1892 = vsel %vm1881, %v1876, 0
    %1894 = vmatprep.subr.bf16.mxu0 0
    %1895 = vmatpush1.bf16.msra.mxu0 %v1782
    %1896 = vmatprep.subr.bf16.mxu0 0
    %1897 = vmatpush1.bf16.msra.mxu0 %v1783
    %1898 = vmatprep.subr.bf16.mxu0 0
    %1899 = vmatpush1.bf16.msra.mxu0 %v1784
    %1900 = vmatprep.subr.bf16.mxu0 0
    %1901 = vmatpush1.bf16.msra.mxu0 %v1785
    %1902 = vmatprep.subr.bf16.mxu0 0
    %1903 = vmatpush1.bf16.msra.mxu0 %v1786
    %1904 = vmatprep.subr.bf16.mxu0 0
    %1905 = vmatpush1.bf16.msra.mxu0 %v1787
    %1906 = vmatprep.subr.bf16.mxu0 0
    %1907 = vmatpush1.bf16.msra.mxu0 %v1788
    %1908 = vmatprep.subr.bf16.mxu0 0
    %1909 = vmatpush1.bf16.msra.mxu0 %v1789
    %1910 = vmatprep.subr.bf16.mxu0 0
    %1911 = vmatpush1.bf16.msra.mxu0 %v1790
    %1912 = vmatprep.subr.bf16.mxu0 0
    %1913 = vmatpush1.bf16.msra.mxu0 %v1791
    %1914 = vmatprep.subr.bf16.mxu0 0
    %1915 = vmatpush1.bf16.msra.mxu0 %v1792
    %1916 = vmatprep.subr.bf16.mxu0 0
    %1917 = vmatpush1.bf16.msra.mxu0 %v1793
    %1918 = vmatprep.subr.bf16.mxu0 0
    %1919 = vmatpush1.bf16.msra.mxu0 %v1794
    %1920 = vmatprep.subr.bf16.mxu0 0
    %1921 = vmatpush1.bf16.msra.mxu0 %v1795
    %1922 = vmatprep.subr.bf16.mxu0 0
    %1923 = vmatpush1.bf16.msra.mxu0 0
    %1924 = vmatprep.subr.bf16.mxu0 0
    %1925 = vmatpush1.bf16.msra.mxu0 0
    %1926 = vmatprep.mubr.bf16.mxu0 %v1883
    %1927 = vmatmul.mubr.bf16.gmra.mrb[0].mxu0 %v1869
    %v1928 = vpop.f32.mrb[0].mxu0
    %v1929 = vadd.f32 %v1808, %v1928
    %v1930 = vpop.f32.mrb[0].mxu0
    %v1931 = vpop.f32.mrb[0].mxu0
    %v1932 = vadd.f32 %v1813, %v1931
    %v1933 = vpop.f32.mrb[0].mxu0
    %1934 = vmatprep.mubr.bf16.mxu0 %v1886
    %1935 = vmatmul.mubr.bf16.gmra.mrb[0].mxu0 %v1871
    %v1936 = vpop.f32.mrb[0].mxu0
    %v1937 = vadd.f32 %v1818, %v1936
    %v1938 = vpop.f32.mrb[0].mxu0
    %v1939 = vpop.f32.mrb[0].mxu0
    %v1940 = vadd.f32 %v1823, %v1939
    %v1941 = vpop.f32.mrb[0].mxu0
    %1942 = vmatprep.mubr.bf16.mxu0 %v1889
    %1943 = vmatmul.mubr.bf16.gmra.mrb[0].mxu0 %v1873
    %v1944 = vpop.f32.mrb[0].mxu0
    %v1945 = vadd.f32 %v1828, %v1944
    %v1946 = vpop.f32.mrb[0].mxu0
    %v1947 = vpop.f32.mrb[0].mxu0
    %v1948 = vadd.f32 %v1833, %v1947
    %v1949 = vpop.f32.mrb[0].mxu0
    %1950 = vmatprep.mubr.bf16.mxu0 %v1892
    %1951 = vmatmul.mubr.bf16.gmra.mrb[0].mxu0 %v1875
    %v1952 = vpop.f32.mrb[0].mxu0
    %v1953 = vadd.f32 %v1838, %v1952
    %v1954 = vpop.f32.mrb[0].mxu0
    %v1955 = vpop.f32.mrb[0].mxu0
    %v1956 = vadd.f32 %v1843, %v1955
    %v1957 = vpop.f32.mrb[0].mxu0
    %1958 = vdwg.mxu0
    %v1959 = vmax.f32 %v1929, 0.0
    %v1960 = vmax.f32 %v1932, 0.0
    %v1961 = vmax.f32 %v1937, 0.0
    %v1962 = vmax.f32 %v1940, 0.0
    %v1963 = vmax.f32 %v1945, 0.0
    %v1964 = vmax.f32 %v1948, 0.0
    %v1965 = vmax.f32 %v1953, 0.0
    %v1966 = vmax.f32 %v1956, 0.0
    %vm1967 = vcmask 523264
    %v1968 = vsel %vm1967, %v1959, 0.0
    %1969 = vadd.xlane.f32.xlu0 %v1968
    %v1970 = vpop.xlane.xlu0 %1969
    %v1971 = vsel %vm1967, %v1960, 0.0
    %1972 = vadd.xlane.f32.xlu0 %v1971
    %v1973 = vpop.xlane.xlu0 %1972
    %v1974 = vsel %vm1967, %v1961, 0.0
    %1975 = vadd.xlane.f32.xlu0 %v1974
    %v1976 = vpop.xlane.xlu0 %1975
    %v1977 = vsel %vm1967, %v1962, 0.0
    %1978 = vadd.xlane.f32.xlu0 %v1977
    %v1979 = vpop.xlane.xlu0 %1978
    %v1980 = vsel %vm1967, %v1963, 0.0
    %1981 = vadd.xlane.f32.xlu0 %v1980
    %v1982 = vpop.xlane.xlu0 %1981
    %v1983 = vsel %vm1967, %v1964, 0.0
    %1984 = vadd.xlane.f32.xlu0 %v1983
    %v1985 = vpop.xlane.xlu0 %1984
    %v1986 = vsel %vm1967, %v1965, 0.0
    %1987 = vadd.xlane.f32.xlu0 %v1986
    %v1988 = vpop.xlane.xlu0 %1987
    %v1989 = vsel %vm1967, %v1966, 0.0
    %1990 = vadd.xlane.f32.xlu0 %v1989
    %v1991 = vpop.xlane.xlu0 %1990
    %v1992 = vmul.f32 %v1970, 0.015625
    %v1993 = vmul.f32 %v1973, 0.015625
    %v1994 = vmul.f32 %v1976, 0.015625
    %v1995 = vmul.f32 %v1979, 0.015625
    %v1996 = vmul.f32 %v1982, 0.015625
    %v1997 = vmul.f32 %v1985, 0.015625
    %v1998 = vmul.f32 %v1988, 0.015625
    %v1999 = vmul.f32 %v1991, 0.015625
    %v2000 = vmul.f32 %v1959, %v1959
    %v2001 = vmul.f32 %v1960, %v1960
    %v2002 = vmul.f32 %v1961, %v1961
    %v2003 = vmul.f32 %v1962, %v1962
    %v2004 = vmul.f32 %v1963, %v1963
    %v2005 = vmul.f32 %v1964, %v1964
    %v2006 = vmul.f32 %v1965, %v1965
    %v2007 = vmul.f32 %v1966, %v1966
    %v2008 = vsel %vm1967, %v2000, 0.0
    %2009 = vadd.xlane.f32.xlu0 %v2008
    %v2010 = vpop.xlane.xlu0 %2009
    %v2011 = vsel %vm1967, %v2001, 0.0
    %2012 = vadd.xlane.f32.xlu0 %v2011
    %v2013 = vpop.xlane.xlu0 %2012
    %v2014 = vsel %vm1967, %v2002, 0.0
    %2015 = vadd.xlane.f32.xlu0 %v2014
    %v2016 = vpop.xlane.xlu0 %2015
    %v2017 = vsel %vm1967, %v2003, 0.0
    %2018 = vadd.xlane.f32.xlu0 %v2017
    %v2019 = vpop.xlane.xlu0 %2018
    %v2020 = vsel %vm1967, %v2004, 0.0
    %2021 = vadd.xlane.f32.xlu0 %v2020
    %v2022 = vpop.xlane.xlu0 %2021
    %v2023 = vsel %vm1967, %v2005, 0.0
    %2024 = vadd.xlane.f32.xlu0 %v2023
    %v2025 = vpop.xlane.xlu0 %2024
    %v2026 = vsel %vm1967, %v2006, 0.0
    %2027 = vadd.xlane.f32.xlu0 %v2026
    %v2028 = vpop.xlane.xlu0 %2027
    %v2029 = vsel %vm1967, %v2007, 0.0
    %2030 = vadd.xlane.f32.xlu0 %v2029
    %v2031 = vpop.xlane.xlu0 %2030
    %v2032 = vmul.f32 %v2010, 0.015625
    %v2033 = vmul.f32 %v2013, 0.015625
    %v2034 = vmul.f32 %v2016, 0.015625
    %v2035 = vmul.f32 %v2019, 0.015625
    %v2036 = vmul.f32 %v2022, 0.015625
    %v2037 = vmul.f32 %v2025, 0.015625
    %v2038 = vmul.f32 %v2028, 0.015625
    %v2039 = vmul.f32 %v2031, 0.015625
    %v2040 = vmul.f32 %v1992, %v1992
    %v2041 = vmul.f32 %v1993, %v1993
    %v2042 = vmul.f32 %v1994, %v1994
    %v2043 = vmul.f32 %v1995, %v1995
    %v2044 = vmul.f32 %v1996, %v1996
    %v2045 = vmul.f32 %v1997, %v1997
    %v2046 = vmul.f32 %v1998, %v1998
    %v2047 = vmul.f32 %v1999, %v1999
    %v2048 = vsub.f32 %v2032, %v2040
    %v2049 = vsub.f32 %v2033, %v2041
    %v2050 = vsub.f32 %v2034, %v2042
    %v2051 = vsub.f32 %v2035, %v2043
    %v2052 = vsub.f32 %v2036, %v2044
    %v2053 = vsub.f32 %v2037, %v2045
    %v2054 = vsub.f32 %v2038, %v2046
    %v2055 = vsub.f32 %v2039, %v2047
    %v2056 = vmax.f32 %v2048, 0.0
    %v2057 = vmax.f32 %v2049, 0.0
    %v2058 = vmax.f32 %v2050, 0.0
    %v2059 = vmax.f32 %v2051, 0.0
    %v2060 = vmax.f32 %v2052, 0.0
    %v2061 = vmax.f32 %v2053, 0.0
    %v2062 = vmax.f32 %v2054, 0.0
    %v2063 = vmax.f32 %v2055, 0.0
    %v2064 = vadd.f32 %v2056, 1e-05
    %v2065 = vadd.f32 %v2057, 1e-05
    %v2066 = vadd.f32 %v2058, 1e-05
    %v2067 = vadd.f32 %v2059, 1e-05
    %v2068 = vadd.f32 %v2060, 1e-05
    %v2069 = vadd.f32 %v2061, 1e-05
    %v2070 = vadd.f32 %v2062, 1e-05
    %v2071 = vadd.f32 %v2063, 1e-05
    %v2072 = vrsqrt.pop %v2064
    %v2073 = vrsqrt.pop %v2065
    %v2074 = vrsqrt.pop %v2066
    %v2075 = vrsqrt.pop %v2067
    %v2076 = vrsqrt.pop %v2068
    %v2077 = vrsqrt.pop %v2069
    %v2078 = vrsqrt.pop %v2070
    %v2079 = vrsqrt.pop %v2071
    %v2080 = vmul.f32 %v1797, %v2072
    %v2081 = vmul.f32 %v1798, %v2073
    %v2082 = vmul.f32 %v1799, %v2074
    %v2083 = vmul.f32 %v1800, %v2075
    %v2084 = vmul.f32 %v1801, %v2076
    %v2085 = vmul.f32 %v1802, %v2077
    %v2086 = vmul.f32 %v1803, %v2078
    %v2087 = vmul.f32 %v1804, %v2079
    %v2088 = vmul.f32 %v1992, %v2080
    %v2089 = vmul.f32 %v1993, %v2081
    %v2090 = vmul.f32 %v1994, %v2082
    %v2091 = vmul.f32 %v1995, %v2083
    %v2092 = vmul.f32 %v1996, %v2084
    %v2093 = vmul.f32 %v1997, %v2085
    %v2094 = vmul.f32 %v1998, %v2086
    %v2095 = vmul.f32 %v1999, %v2087
    %2104 = vrot.lane.b32.xlu0 %v2088, 1
    %v2105 = vpop.permute.xlu0 %2104
    %2106 = vrot.lane.b32.xlu0 %v2089, 1
    %v2107 = vpop.permute.xlu0 %2106
    %2108 = vrot.lane.b32.xlu0 %v2090, 1
    %v2109 = vpop.permute.xlu0 %2108
    %2110 = vrot.lane.b32.xlu0 %v2091, 1
    %v2111 = vpop.permute.xlu0 %2110
    %2112 = vrot.lane.b32.xlu0 %v2092, 1
    %v2113 = vpop.permute.xlu0 %2112
    %2114 = vrot.lane.b32.xlu0 %v2093, 1
    %v2115 = vpop.permute.xlu0 %2114
    %2116 = vrot.lane.b32.xlu0 %v2094, 1
    %v2117 = vpop.permute.xlu0 %2116
    %2118 = vrot.lane.b32.xlu0 %v2095, 1
    %v2119 = vpop.permute.xlu0 %2118
    %v2128 = vsub.f32 %v1797, %v2105
    %v2129 = vsub.f32 %v1798, %v2107
    %v2130 = vsub.f32 %v1799, %v2109
    %v2131 = vsub.f32 %v1800, %v2111
    %v2132 = vsub.f32 %v1801, %v2113
    %v2133 = vsub.f32 %v1802, %v2115
    %v2134 = vsub.f32 %v1803, %v2117
    %v2135 = vsub.f32 %v1804, %v2119
    %2137 = vset.pattern.permute.xlu0 1
    %2138 = vperm.xlu0 %2137, %v2080
    %v2139 = vpop.permute.xlu0 %2138
    %2142 = vset.pattern.permute.xlu0 1
    %2143 = vperm.xlu0 %2142, %v2081
    %v2144 = vpop.permute.xlu0 %2143
    %2147 = vset.pattern.permute.xlu0 1
    %2148 = vperm.xlu0 %2147, %v2082
    %v2149 = vpop.permute.xlu0 %2148
    %2152 = vset.pattern.permute.xlu0 1
    %2153 = vperm.xlu0 %2152, %v2083
    %v2154 = vpop.permute.xlu0 %2153
    %2157 = vset.pattern.permute.xlu0 1
    %2158 = vperm.xlu0 %2157, %v2084
    %v2159 = vpop.permute.xlu0 %2158
    %2162 = vset.pattern.permute.xlu0 1
    %2163 = vperm.xlu0 %2162, %v2085
    %v2164 = vpop.permute.xlu0 %2163
    %2167 = vset.pattern.permute.xlu0 1
    %2168 = vperm.xlu0 %2167, %v2086
    %v2169 = vpop.permute.xlu0 %2168
    %2172 = vset.pattern.permute.xlu0 1
    %2173 = vperm.xlu0 %2172, %v2087
    %v2174 = vpop.permute.xlu0 %2173
    %v2176 = vmul.f32 %v1959, %v2139
    %v2177 = vmul.f32 %v1960, %v2144
    %v2178 = vmul.f32 %v1961, %v2149
    %v2179 = vmul.f32 %v1962, %v2154
    %v2180 = vmul.f32 %v1963, %v2159
    %v2181 = vmul.f32 %v1964, %v2164
    %v2182 = vmul.f32 %v1965, %v2169
    %v2183 = vmul.f32 %v1966, %v2174
    %2185 = vset.pattern.permute.xlu0 2
    %2186 = vperm.xlu0 %2185, %v2128
    %v2187 = vpop.permute.xlu0 %2186
    %2190 = vset.pattern.permute.xlu0 2
    %2191 = vperm.xlu0 %2190, %v2129
    %v2192 = vpop.permute.xlu0 %2191
    %2195 = vset.pattern.permute.xlu0 2
    %2196 = vperm.xlu0 %2195, %v2130
    %v2197 = vpop.permute.xlu0 %2196
    %2200 = vset.pattern.permute.xlu0 2
    %2201 = vperm.xlu0 %2200, %v2131
    %v2202 = vpop.permute.xlu0 %2201
    %2205 = vset.pattern.permute.xlu0 2
    %2206 = vperm.xlu0 %2205, %v2132
    %v2207 = vpop.permute.xlu0 %2206
    %2210 = vset.pattern.permute.xlu0 2
    %2211 = vperm.xlu0 %2210, %v2133
    %v2212 = vpop.permute.xlu0 %2211
    %2215 = vset.pattern.permute.xlu0 2
    %2216 = vperm.xlu0 %2215, %v2134
    %v2217 = vpop.permute.xlu0 %2216
    %2220 = vset.pattern.permute.xlu0 2
    %2221 = vperm.xlu0 %2220, %v2135
    %v2222 = vpop.permute.xlu0 %2221
    %v2224 = vadd.f32 %v2176, %v2187
    %v2225 = vadd.f32 %v2177, %v2192
    %v2226 = vadd.f32 %v2178, %v2197
    %v2227 = vadd.f32 %v2179, %v2202
    %v2228 = vadd.f32 %v2180, %v2207
    %v2229 = vadd.f32 %v2181, %v2212
    %v2230 = vadd.f32 %v2182, %v2217
    %v2231 = vadd.f32 %v2183, %v2222
    %v2232 = vpack.c.bf16 %v2225, %v2224
    %v2233 = vpack.c.bf16 %v2227, %v2226
    %v2234 = vpack.c.bf16 %v2229, %v2228
    %v2235 = vpack.c.bf16 %v2231, %v2230
    %v2236 = vld [vmem:[%s3] sm:$0xff]
    %v2237 = vld [vmem:[%s3 + $0x8] sm:$0xff]
    %v2238 = vld [vmem:[%s3 + $0x10] sm:$0xff]
    %v2239 = vld [vmem:[%s3 + $0x18] sm:$0xff]
    %v2240 = vld [vmem:[%s3 + $0x20] sm:$0xff]
    %v2241 = vld [vmem:[%s3 + $0x28] sm:$0xff]
    %v2242 = vld [vmem:[%s3 + $0x30] sm:$0xff]
    %v2243 = vld [vmem:[%s3 + $0x38] sm:$0xff]
    %v2244 = vld [vmem:[%s9] sm:$0xff]
    %v2245 = vld [vmem:[%s9 + $0x8] sm:$0xf]
    %v2246 = vld [vmem:[%s9 + $0xc] sm:$0xff]
    %v2247 = vld [vmem:[%s9 + $0x14] sm:$0xf]
    %v2248 = vld [vmem:[%s9 + $0x18] sm:$0xff]
    %v2249 = vld [vmem:[%s9 + $0x20] sm:$0xf]
    %v2250 = vld [vmem:[%s9 + $0x24] sm:$0xff]
    %v2251 = vld [vmem:[%s9 + $0x2c] sm:$0xf]
    %v2252 = vld [vmem:[%s9 + $0x30] sm:$0xff]
    %v2253 = vld [vmem:[%s9 + $0x38] sm:$0xf]
    %v2254 = vld [vmem:[%s9 + $0x3c] sm:$0xff]
    %v2255 = vld [vmem:[%s9 + $0x44] sm:$0xf]
    %v2256 = vld [vmem:[%s9 + $0x48] sm:$0xff]
    %v2257 = vld [vmem:[%s9 + $0x50] sm:$0xf]
    %v2258 = vld [vmem:[%s9 + $0x54] sm:$0xff]
    %v2259 = vld [vmem:[%s9 + $0x5c] sm:$0xf]
    %v2260 = vld [vmem:[%s9 + $0x60] sm:$0xff]
    %v2261 = vld [vmem:[%s9 + $0x68] sm:$0xf]
    %v2262 = vld [vmem:[%s9 + $0x6c] sm:$0xff]
    %v2263 = vld [vmem:[%s9 + $0x74] sm:$0xf]
    %v2264 = vld [vmem:[%s9 + $0x78] sm:$0xff]
    %v2265 = vld [vmem:[%s9 + $0x80] sm:$0xf]
    %v2266 = vld [vmem:[%s9 + $0x84] sm:$0xff]
    %v2267 = vld [vmem:[%s9 + $0x8c] sm:$0xf]
    %v2268 = vld [vmem:[%s9 + $0x90] sm:$0xff]
    %v2269 = vld [vmem:[%s9 + $0x98] sm:$0xf]
    %v2270 = vld [vmem:[%s9 + $0x9c] sm:$0xff]
    %v2271 = vld [vmem:[%s9 + $0xa4] sm:$0xf]
    %v2272 = vld [vmem:[%s9 + $0xa8] sm:$0xff]
    %v2273 = vld [vmem:[%s9 + $0xb0] sm:$0xf]
    %v2274 = vld [vmem:[%s9 + $0xb4] sm:$0xff]
    %v2275 = vld [vmem:[%s9 + $0xbc] sm:$0xf]
    %v2284 = vunpack.c.l.b16 %v2236
    %v2285 = vunpack.c.h.b16 %v2236
    %v2286 = vunpack.c.l.b16 %v2237
    %v2287 = vunpack.c.h.b16 %v2237
    %v2288 = vunpack.c.l.b16 %v2238
    %v2289 = vunpack.c.h.b16 %v2238
    %v2290 = vunpack.c.l.b16 %v2239
    %v2291 = vunpack.c.h.b16 %v2239
    %v2292 = vunpack.c.l.b16 %v2240
    %v2293 = vunpack.c.h.b16 %v2240
    %v2294 = vunpack.c.l.b16 %v2241
    %v2295 = vunpack.c.h.b16 %v2241
    %v2296 = vunpack.c.l.b16 %v2242
    %v2297 = vunpack.c.h.b16 %v2242
    %v2298 = vunpack.c.l.b16 %v2243
    %v2299 = vunpack.c.h.b16 %v2243
    %v2300 = vpack.c.b16 %v2286, %v2284
    %v2301 = vpack.c.b16 %v2287, %v2285
    %v2302 = vpack.c.b16 %v2290, %v2288
    %v2303 = vpack.c.b16 %v2291, %v2289
    %v2304 = vpack.c.b16 %v2294, %v2292
    %v2305 = vpack.c.b16 %v2295, %v2293
    %v2306 = vpack.c.b16 %v2298, %v2296
    %v2307 = vpack.c.b16 %v2299, %v2297
    %v2317 = vsel %vm1967, %v2232, 0
    %v2320 = vsel %vm1967, %v2233, 0
    %v2323 = vsel %vm1967, %v2234, 0
    %v2326 = vsel %vm1967, %v2235, 0
    %2328 = vmatprep.subr.bf16.mxu0 %v2301
    %2329 = vmatpush1.bf16.msra.mxu0 %v2300
    %2330 = vmatprep.subr.bf16.mxu0 %v2303
    %2331 = vmatpush1.bf16.msra.mxu0 %v2302
    %2332 = vmatprep.subr.bf16.mxu0 %v2305
    %2333 = vmatpush1.bf16.msra.mxu0 %v2304
    %2334 = vmatprep.subr.bf16.mxu0 %v2307
    %2335 = vmatpush1.bf16.msra.mxu0 %v2306
    %2336 = vmatprep.subr.bf16.mxu0 0
    %2337 = vmatpush1.bf16.msra.mxu0 0
    %2338 = vmatprep.subr.bf16.mxu0 0
    %2339 = vmatpush1.bf16.msra.mxu0 0
    %2340 = vmatprep.subr.bf16.mxu0 0
    %2341 = vmatpush1.bf16.msra.mxu0 0
    %2342 = vmatprep.subr.bf16.mxu0 0
    %2343 = vmatpush1.bf16.msra.mxu0 0
    %2344 = vmatprep.subr.bf16.mxu0 0
    %2345 = vmatpush1.bf16.msra.mxu0 0
    %2346 = vmatprep.subr.bf16.mxu0 0
    %2347 = vmatpush1.bf16.msra.mxu0 0
    %2348 = vmatprep.subr.bf16.mxu0 0
    %2349 = vmatpush1.bf16.msra.mxu0 0
    %2350 = vmatprep.subr.bf16.mxu0 0
    %2351 = vmatpush1.bf16.msra.mxu0 0
    %2352 = vmatprep.subr.bf16.mxu0 0
    %2353 = vmatpush1.bf16.msra.mxu0 0
    %2354 = vmatprep.subr.bf16.mxu0 0
    %2355 = vmatpush1.bf16.msra.mxu0 0
    %2356 = vmatprep.subr.bf16.mxu0 0
    %2357 = vmatpush1.bf16.msra.mxu0 0
    %2358 = vmatprep.subr.bf16.mxu0 0
    %2359 = vmatpush1.bf16.msra.mxu0 0
    %2360 = vmatprep.mubr.bf16.mxu0 0
    %2361 = vmatmul.mubr.bf16.gmra.mrb[0].mxu0 %v2317
    %v2362 = vpop.f32.mrb[0].mxu0
    %v2363 = vadd.f32 0.0, %v2362
    %v2364 = vpop.f32.mrb[0].mxu0
    %v2365 = vadd.f32 0.0, %v2364
    %v2366 = vpop.f32.mrb[0].mxu0
    %v2367 = vadd.f32 0.0, %v2366
    %v2368 = vpop.f32.mrb[0].mxu0
    %v2369 = vadd.f32 0.0, %v2368
    %2370 = vmatprep.mubr.bf16.mxu0 0
    %2371 = vmatmul.mubr.bf16.gmra.mrb[0].mxu0 %v2320
    %v2372 = vpop.f32.mrb[0].mxu0
    %v2373 = vadd.f32 0.0, %v2372
    %v2374 = vpop.f32.mrb[0].mxu0
    %v2375 = vadd.f32 0.0, %v2374
    %v2376 = vpop.f32.mrb[0].mxu0
    %v2377 = vadd.f32 0.0, %v2376
    %v2378 = vpop.f32.mrb[0].mxu0
    %v2379 = vadd.f32 0.0, %v2378
    %2380 = vmatprep.mubr.bf16.mxu0 0
    %2381 = vmatmul.mubr.bf16.gmra.mrb[0].mxu0 %v2323
    %v2382 = vpop.f32.mrb[0].mxu0
    %v2383 = vadd.f32 0.0, %v2382
    %v2384 = vpop.f32.mrb[0].mxu0
    %v2385 = vadd.f32 0.0, %v2384
    %v2386 = vpop.f32.mrb[0].mxu0
    %v2387 = vadd.f32 0.0, %v2386
    %v2388 = vpop.f32.mrb[0].mxu0
    %v2389 = vadd.f32 0.0, %v2388
    %2390 = vmatprep.mubr.bf16.mxu0 0
    %2391 = vmatmul.mubr.bf16.gmra.mrb[0].mxu0 %v2326
    %v2392 = vpop.f32.mrb[0].mxu0
    %v2393 = vadd.f32 0.0, %v2392
    %v2394 = vpop.f32.mrb[0].mxu0
    %v2395 = vadd.f32 0.0, %v2394
    %v2396 = vpop.f32.mrb[0].mxu0
    %v2397 = vadd.f32 0.0, %v2396
    %v2398 = vpop.f32.mrb[0].mxu0
    %v2399 = vadd.f32 0.0, %v2398
    %2400 = vdwg.mxu0
    %2409 = vrot.lane.b32.xlu0 %v2363, 96
    %v2410 = vpop.permute.xlu0 %2409
    %2411 = vrot.lane.b32.xlu0 %v2367, 96
    %v2412 = vpop.permute.xlu0 %2411
    %2413 = vrot.lane.b32.xlu0 %v2373, 96
    %v2414 = vpop.permute.xlu0 %2413
    %2415 = vrot.lane.b32.xlu0 %v2377, 96
    %v2416 = vpop.permute.xlu0 %2415
    %2417 = vrot.lane.b32.xlu0 %v2383, 96
    %v2418 = vpop.permute.xlu0 %2417
    %2419 = vrot.lane.b32.xlu0 %v2387, 96
    %v2420 = vpop.permute.xlu0 %2419
    %2421 = vrot.lane.b32.xlu0 %v2393, 96
    %v2422 = vpop.permute.xlu0 %2421
    %2423 = vrot.lane.b32.xlu0 %v2397, 96
    %v2424 = vpop.permute.xlu0 %2423
    %2433 = vrot.lane.b32.xlu0 %v2363, 64
    %v2434 = vpop.permute.xlu0 %2433
    %2435 = vrot.lane.b32.xlu0 %v2367, 64
    %v2436 = vpop.permute.xlu0 %2435
    %2437 = vrot.lane.b32.xlu0 %v2373, 64
    %v2438 = vpop.permute.xlu0 %2437
    %2439 = vrot.lane.b32.xlu0 %v2377, 64
    %v2440 = vpop.permute.xlu0 %2439
    %2441 = vrot.lane.b32.xlu0 %v2383, 64
    %v2442 = vpop.permute.xlu0 %2441
    %2443 = vrot.lane.b32.xlu0 %v2387, 64
    %v2444 = vpop.permute.xlu0 %2443
    %2445 = vrot.lane.b32.xlu0 %v2393, 64
    %v2446 = vpop.permute.xlu0 %2445
    %2447 = vrot.lane.b32.xlu0 %v2397, 64
    %v2448 = vpop.permute.xlu0 %2447
    %2457 = vrot.lane.b32.xlu0 %v2363, 32
    %v2458 = vpop.permute.xlu0 %2457
    %2459 = vrot.lane.b32.xlu0 %v2367, 32
    %v2460 = vpop.permute.xlu0 %2459
    %2461 = vrot.lane.b32.xlu0 %v2373, 32
    %v2462 = vpop.permute.xlu0 %2461
    %2463 = vrot.lane.b32.xlu0 %v2377, 32
    %v2464 = vpop.permute.xlu0 %2463
    %2465 = vrot.lane.b32.xlu0 %v2383, 32
    %v2466 = vpop.permute.xlu0 %2465
    %2467 = vrot.lane.b32.xlu0 %v2387, 32
    %v2468 = vpop.permute.xlu0 %2467
    %2469 = vrot.lane.b32.xlu0 %v2393, 32
    %v2470 = vpop.permute.xlu0 %2469
    %2471 = vrot.lane.b32.xlu0 %v2397, 32
    %v2472 = vpop.permute.xlu0 %2471
    %v2481 = vpack.c.bf16 %v2367, %v2363
    %v2482 = vpack.c.bf16 %v2377, %v2373
    %v2483 = vpack.c.bf16 %v2387, %v2383
    %v2484 = vpack.c.bf16 %v2397, %v2393
    %v2485 = vpack.c.bf16 %v2412, %v2410
    %v2486 = vpack.c.bf16 %v2416, %v2414
    %v2487 = vpack.c.bf16 %v2420, %v2418
    %v2488 = vpack.c.bf16 %v2424, %v2422
    %v2489 = vpack.c.bf16 %v2436, %v2434
    %v2490 = vpack.c.bf16 %v2440, %v2438
    %v2491 = vpack.c.bf16 %v2444, %v2442
    %v2492 = vpack.c.bf16 %v2448, %v2446
    %v2493 = vpack.c.bf16 %v2460, %v2458
    %v2494 = vpack.c.bf16 %v2464, %v2462
    %v2495 = vpack.c.bf16 %v2468, %v2466
    %v2496 = vpack.c.bf16 %v2472, %v2470
    %v2497 = vpack.c.bf16 %v2369, %v2365
    %v2498 = vpack.c.bf16 %v2379, %v2375
    %v2499 = vpack.c.bf16 %v2389, %v2385
    %v2500 = vpack.c.bf16 %v2399, %v2395
    %s2501 = scalar_lea.vmem %s13, 256
    %v2502 = vld [vmem:[%s2501] sm:$0xff]
    %v2503 = vld [vmem:[%s2501 + $0x8] sm:$0xff]
    %v2504 = vld [vmem:[%s2501 + $0x10] sm:$0xff]
    %v2505 = vld [vmem:[%s2501 + $0x18] sm:$0xff]
    %v2506 = vld [vmem:[%s2501 + $0x20] sm:$0xff]
    %v2507 = vld [vmem:[%s2501 + $0x28] sm:$0xff]
    %v2508 = vld [vmem:[%s2501 + $0x30] sm:$0xff]
    %v2509 = vld [vmem:[%s2501 + $0x38] sm:$0xff]
    %v2510 = vld [vmem:[%s2501 + $0x40] sm:$0xff]
    %v2511 = vld [vmem:[%s2501 + $0x48] sm:$0xff]
    %v2512 = vld [vmem:[%s2501 + $0x50] sm:$0xff]
    %v2513 = vld [vmem:[%s2501 + $0x58] sm:$0xff]
    %v2514 = vld [vmem:[%s2501 + $0x60] sm:$0xff]
    %v2515 = vld [vmem:[%s2501 + $0x68] sm:$0xff]
    %v2516 = vld [vmem:[%s2501 + $0x70] sm:$0xff]
    %v2517 = vld [vmem:[%s2501 + $0x78] sm:$0xff]
    %2519 = vset.pattern.permute.xlu0 0
    %2520 = vperm.xlu0 %2519, %v2502
    %v2521 = vpop.permute.xlu0 %2520
    %2524 = vset.pattern.permute.xlu0 0
    %2525 = vperm.xlu0 %2524, %v2503
    %v2526 = vpop.permute.xlu0 %2525
    %2529 = vset.pattern.permute.xlu0 0
    %2530 = vperm.xlu0 %2529, %v2504
    %v2531 = vpop.permute.xlu0 %2530
    %2534 = vset.pattern.permute.xlu0 0
    %2535 = vperm.xlu0 %2534, %v2505
    %v2536 = vpop.permute.xlu0 %2535
    %2539 = vset.pattern.permute.xlu0 0
    %2540 = vperm.xlu0 %2539, %v2506
    %v2541 = vpop.permute.xlu0 %2540
    %2544 = vset.pattern.permute.xlu0 0
    %2545 = vperm.xlu0 %2544, %v2507
    %v2546 = vpop.permute.xlu0 %2545
    %2549 = vset.pattern.permute.xlu0 0
    %2550 = vperm.xlu0 %2549, %v2508
    %v2551 = vpop.permute.xlu0 %2550
    %2554 = vset.pattern.permute.xlu0 0
    %2555 = vperm.xlu0 %2554, %v2509
    %v2556 = vpop.permute.xlu0 %2555
    %2559 = vset.pattern.permute.xlu0 0
    %2560 = vperm.xlu0 %2559, %v2510
    %v2561 = vpop.permute.xlu0 %2560
    %2564 = vset.pattern.permute.xlu0 0
    %2565 = vperm.xlu0 %2564, %v2511
    %v2566 = vpop.permute.xlu0 %2565
    %2569 = vset.pattern.permute.xlu0 0
    %2570 = vperm.xlu0 %2569, %v2512
    %v2571 = vpop.permute.xlu0 %2570
    %2574 = vset.pattern.permute.xlu0 0
    %2575 = vperm.xlu0 %2574, %v2513
    %v2576 = vpop.permute.xlu0 %2575
    %2579 = vset.pattern.permute.xlu0 0
    %2580 = vperm.xlu0 %2579, %v2514
    %v2581 = vpop.permute.xlu0 %2580
    %2584 = vset.pattern.permute.xlu0 0
    %2585 = vperm.xlu0 %2584, %v2515
    %v2586 = vpop.permute.xlu0 %2585
    %2589 = vset.pattern.permute.xlu0 0
    %2590 = vperm.xlu0 %2589, %v2516
    %v2591 = vpop.permute.xlu0 %2590
    %2594 = vset.pattern.permute.xlu0 0
    %2595 = vperm.xlu0 %2594, %v2517
    %v2596 = vpop.permute.xlu0 %2595
    %v2630 = vunpack.c.l.b16 %v2244
    %v2631 = vunpack.c.h.b16 %v2244
    %v2632 = vunpack.c.l.b16 %v2245
    %v2633 = vunpack.c.l.b16 %v2246
    %v2634 = vunpack.c.h.b16 %v2246
    %v2635 = vunpack.c.l.b16 %v2247
    %v2636 = vunpack.c.l.b16 %v2248
    %v2637 = vunpack.c.h.b16 %v2248
    %v2638 = vunpack.c.l.b16 %v2249
    %v2639 = vunpack.c.l.b16 %v2250
    %v2640 = vunpack.c.h.b16 %v2250
    %v2641 = vunpack.c.l.b16 %v2251
    %v2642 = vunpack.c.l.b16 %v2252
    %v2643 = vunpack.c.h.b16 %v2252
    %v2644 = vunpack.c.l.b16 %v2253
    %v2645 = vunpack.c.l.b16 %v2254
    %v2646 = vunpack.c.h.b16 %v2254
    %v2647 = vunpack.c.l.b16 %v2255
    %v2648 = vunpack.c.l.b16 %v2256
    %v2649 = vunpack.c.h.b16 %v2256
    %v2650 = vunpack.c.l.b16 %v2257
    %v2651 = vunpack.c.l.b16 %v2258
    %v2652 = vunpack.c.h.b16 %v2258
    %v2653 = vunpack.c.l.b16 %v2259
    %v2654 = vunpack.c.l.b16 %v2260
    %v2655 = vunpack.c.h.b16 %v2260
    %v2656 = vunpack.c.l.b16 %v2261
    %v2657 = vunpack.c.l.b16 %v2262
    %v2658 = vunpack.c.h.b16 %v2262
    %v2659 = vunpack.c.l.b16 %v2263
    %v2660 = vunpack.c.l.b16 %v2264
    %v2661 = vunpack.c.h.b16 %v2264
    %v2662 = vunpack.c.l.b16 %v2265
    %v2663 = vunpack.c.l.b16 %v2266
    %v2664 = vunpack.c.h.b16 %v2266
    %v2665 = vunpack.c.l.b16 %v2267
    %v2666 = vunpack.c.l.b16 %v2268
    %v2667 = vunpack.c.h.b16 %v2268
    %v2668 = vunpack.c.l.b16 %v2269
    %v2669 = vunpack.c.l.b16 %v2270
    %v2670 = vunpack.c.h.b16 %v2270
    %v2671 = vunpack.c.l.b16 %v2271
    %v2672 = vunpack.c.l.b16 %v2272
    %v2673 = vunpack.c.h.b16 %v2272
    %v2674 = vunpack.c.l.b16 %v2273
    %v2675 = vunpack.c.l.b16 %v2274
    %v2676 = vunpack.c.h.b16 %v2274
    %v2677 = vunpack.c.l.b16 %v2275
    %v2678 = vpack.c.b16 %v2633, %v2630
    %v2679 = vpack.c.b16 %v2634, %v2631
    %v2680 = vpack.c.b16 %v2635, %v2632
    %v2681 = vpack.c.b16 %v2639, %v2636
    %v2682 = vpack.c.b16 %v2640, %v2637
    %v2683 = vpack.c.b16 %v2641, %v2638
    %v2684 = vpack.c.b16 %v2645, %v2642
    %v2685 = vpack.c.b16 %v2646, %v2643
    %v2686 = vpack.c.b16 %v2647, %v2644
    %v2687 = vpack.c.b16 %v2651, %v2648
    %v2688 = vpack.c.b16 %v2652, %v2649
    %v2689 = vpack.c.b16 %v2653, %v2650
    %v2690 = vpack.c.b16 %v2657, %v2654
    %v2691 = vpack.c.b16 %v2658, %v2655
    %v2692 = vpack.c.b16 %v2659, %v2656
    %v2693 = vpack.c.b16 %v2663, %v2660
    %v2694 = vpack.c.b16 %v2664, %v2661
    %v2695 = vpack.c.b16 %v2665, %v2662
    %v2696 = vpack.c.b16 %v2669, %v2666
    %v2697 = vpack.c.b16 %v2670, %v2667
    %v2698 = vpack.c.b16 %v2671, %v2668
    %v2699 = vpack.c.b16 %v2675, %v2672
    %v2700 = vpack.c.b16 %v2676, %v2673
    %v2701 = vpack.c.b16 %v2677, %v2674
    %v2719 = vsel %vm1967, %v2680, 0
    %v2722 = vsel %vm1967, %v2683, 0
    %v2725 = vsel %vm1967, %v2686, 0
    %v2728 = vsel %vm1967, %v2689, 0
    %v2731 = vsel %vm1967, %v2692, 0
    %v2734 = vsel %vm1967, %v2695, 0
    %v2737 = vsel %vm1967, %v2698, 0
    %v2740 = vsel %vm1967, %v2701, 0
    %2742 = vmatprep.subr.bf16.mxu0 0
    %2743 = vmatpush1.bf16.msra.mxu0 %v2481
    %2744 = vmatprep.subr.bf16.mxu0 0
    %2745 = vmatpush1.bf16.msra.mxu0 %v2482
    %2746 = vmatprep.subr.bf16.mxu0 0
    %2747 = vmatpush1.bf16.msra.mxu0 %v2483
    %2748 = vmatprep.subr.bf16.mxu0 0
    %2749 = vmatpush1.bf16.msra.mxu0 %v2484
    %2750 = vmatprep.subr.bf16.mxu0 0
    %2751 = vmatpush1.bf16.msra.mxu0 %v2485
    %2752 = vmatprep.subr.bf16.mxu0 0
    %2753 = vmatpush1.bf16.msra.mxu0 %v2486
    %2754 = vmatprep.subr.bf16.mxu0 0
    %2755 = vmatpush1.bf16.msra.mxu0 %v2487
    %2756 = vmatprep.subr.bf16.mxu0 0
    %2757 = vmatpush1.bf16.msra.mxu0 %v2488
    %2758 = vmatprep.subr.bf16.mxu0 0
    %2759 = vmatpush1.bf16.msra.mxu0 %v2489
    %2760 = vmatprep.subr.bf16.mxu0 0
    %2761 = vmatpush1.bf16.msra.mxu0 %v2490
    %2762 = vmatprep.subr.bf16.mxu0 0
    %2763 = vmatpush1.bf16.msra.mxu0 %v2491
    %2764 = vmatprep.subr.bf16.mxu0 0
    %2765 = vmatpush1.bf16.msra.mxu0 %v2492
    %2766 = vmatprep.subr.bf16.mxu0 0
    %2767 = vmatpush1.bf16.msra.mxu0 %v2493
    %2768 = vmatprep.subr.bf16.mxu0 0
    %2769 = vmatpush1.bf16.msra.mxu0 %v2494
    %2770 = vmatprep.subr.bf16.mxu0 0
    %2771 = vmatpush1.bf16.msra.mxu0 %v2495
    %2772 = vmatprep.subr.bf16.mxu0 0
    %2773 = vmatpush1.bf16.msra.mxu0 %v2496
    %2774 = vmatprep.mubr.bf16.mxu0 %v2679
    %2775 = vmatmul.mubr.bf16.gmra.mrb[0].mxu0 %v2678
    %v2776 = vpop.f32.mrb[0].mxu0
    %v2777 = vadd.f32 %v2521, %v2776
    %v2778 = vpop.f32.mrb[0].mxu0
    %v2779 = vpop.f32.mrb[0].mxu0
    %v2780 = vadd.f32 %v2526, %v2779
    %v2781 = vpop.f32.mrb[0].mxu0
    %2782 = vmatprep.mubr.bf16.mxu0 %v2682
    %2783 = vmatmul.mubr.bf16.gmra.mrb[0].mxu0 %v2681
    %v2784 = vpop.f32.mrb[0].mxu0
    %v2785 = vadd.f32 %v2531, %v2784
    %v2786 = vpop.f32.mrb[0].mxu0
    %v2787 = vpop.f32.mrb[0].mxu0
    %v2788 = vadd.f32 %v2536, %v2787
    %v2789 = vpop.f32.mrb[0].mxu0
    %2790 = vmatprep.mubr.bf16.mxu0 %v2685
    %2791 = vmatmul.mubr.bf16.gmra.mrb[0].mxu0 %v2684
    %v2792 = vpop.f32.mrb[0].mxu0
    %v2793 = vadd.f32 %v2541, %v2792
    %v2794 = vpop.f32.mrb[0].mxu0
    %v2795 = vpop.f32.mrb[0].mxu0
    %v2796 = vadd.f32 %v2546, %v2795
    %v2797 = vpop.f32.mrb[0].mxu0
    %2798 = vmatprep.mubr.bf16.mxu0 %v2688
    %2799 = vmatmul.mubr.bf16.gmra.mrb[0].mxu0 %v2687
    %v2800 = vpop.f32.mrb[0].mxu0
    %v2801 = vadd.f32 %v2551, %v2800
    %v2802 = vpop.f32.mrb[0].mxu0
    %v2803 = vpop.f32.mrb[0].mxu0
    %v2804 = vadd.f32 %v2556, %v2803
    %v2805 = vpop.f32.mrb[0].mxu0
    %2806 = vmatprep.mubr.bf16.mxu0 %v2691
    %2807 = vmatmul.mubr.bf16.gmra.mrb[0].mxu0 %v2690
    %v2808 = vpop.f32.mrb[0].mxu0
    %v2809 = vadd.f32 %v2561, %v2808
    %v2810 = vpop.f32.mrb[0].mxu0
    %v2811 = vpop.f32.mrb[0].mxu0
    %v2812 = vadd.f32 %v2566, %v2811
    %v2813 = vpop.f32.mrb[0].mxu0
    %2814 = vmatprep.mubr.bf16.mxu0 %v2694
    %2815 = vmatmul.mubr.bf16.gmra.mrb[0].mxu0 %v2693
    %v2816 = vpop.f32.mrb[0].mxu0
    %v2817 = vadd.f32 %v2571, %v2816
    %v2818 = vpop.f32.mrb[0].mxu0
    %v2819 = vpop.f32.mrb[0].mxu0
    %v2820 = vadd.f32 %v2576, %v2819
    %v2821 = vpop.f32.mrb[0].mxu0
    %2822 = vmatprep.mubr.bf16.mxu0 %v2697
    %2823 = vmatmul.mubr.bf16.gmra.mrb[0].mxu0 %v2696
    %v2824 = vpop.f32.mrb[0].mxu0
    %v2825 = vadd.f32 %v2581, %v2824
    %v2826 = vpop.f32.mrb[0].mxu0
    %v2827 = vpop.f32.mrb[0].mxu0
    %v2828 = vadd.f32 %v2586, %v2827
    %v2829 = vpop.f32.mrb[0].mxu0
    %2830 = vmatprep.mubr.bf16.mxu0 %v2700
    %2831 = vmatmul.mubr.bf16.gmra.mrb[0].mxu0 %v2699
    %v2832 = vpop.f32.mrb[0].mxu0
    %v2833 = vadd.f32 %v2591, %v2832
    %v2834 = vpop.f32.mrb[0].mxu0
    %v2835 = vpop.f32.mrb[0].mxu0
    %v2836 = vadd.f32 %v2596, %v2835
    %v2837 = vpop.f32.mrb[0].mxu0
    %2838 = vdwg.mxu0
    %2839 = vmatprep.subr.bf16.mxu0 0
    %2840 = vmatpush1.bf16.msra.mxu0 %v2497
    %2841 = vmatprep.subr.bf16.mxu0 0
    %2842 = vmatpush1.bf16.msra.mxu0 %v2498
    %2843 = vmatprep.subr.bf16.mxu0 0
    %2844 = vmatpush1.bf16.msra.mxu0 %v2499
    %2845 = vmatprep.subr.bf16.mxu0 0
    %2846 = vmatpush1.bf16.msra.mxu0 %v2500
    %2847 = vmatprep.subr.bf16.mxu0 0
    %2848 = vmatpush1.bf16.msra.mxu0 0
    %2849 = vmatprep.subr.bf16.mxu0 0
    %2850 = vmatpush1.bf16.msra.mxu0 0
    %2851 = vmatprep.subr.bf16.mxu0 0
    %2852 = vmatpush1.bf16.msra.mxu0 0
    %2853 = vmatprep.subr.bf16.mxu0 0
    %2854 = vmatpush1.bf16.msra.mxu0 0
    %2855 = vmatprep.subr.bf16.mxu0 0
    %2856 = vmatpush1.bf16.msra.mxu0 0
    %2857 = vmatprep.subr.bf16.mxu0 0
    %2858 = vmatpush1.bf16.msra.mxu0 0
    %2859 = vmatprep.subr.bf16.mxu0 0
    %2860 = vmatpush1.bf16.msra.mxu0 0
    %2861 = vmatprep.subr.bf16.mxu0 0
    %2862 = vmatpush1.bf16.msra.mxu0 0
    %2863 = vmatprep.subr.bf16.mxu0 0
    %2864 = vmatpush1.bf16.msra.mxu0 0
    %2865 = vmatprep.subr.bf16.mxu0 0
    %2866 = vmatpush1.bf16.msra.mxu0 0
    %2867 = vmatprep.subr.bf16.mxu0 0
    %2868 = vmatpush1.bf16.msra.mxu0 0
    %2869 = vmatprep.subr.bf16.mxu0 0
    %2870 = vmatpush1.bf16.msra.mxu0 0
    %2871 = vmatprep.mubr.bf16.mxu0 0
    %2872 = vmatmul.mubr.bf16.gmra.mrb[0].mxu0 %v2719
    %v2873 = vpop.f32.mrb[0].mxu0
    %v2874 = vadd.f32 %v2777, %v2873
    %v2875 = vpop.f32.mrb[0].mxu0
    %v2876 = vpop.f32.mrb[0].mxu0
    %v2877 = vadd.f32 %v2780, %v2876
    %v2878 = vpop.f32.mrb[0].mxu0
    %2879 = vmatprep.mubr.bf16.mxu0 0
    %2880 = vmatmul.mubr.bf16.gmra.mrb[0].mxu0 %v2722
    %v2881 = vpop.f32.mrb[0].mxu0
    %v2882 = vadd.f32 %v2785, %v2881
    %v2883 = vpop.f32.mrb[0].mxu0
    %v2884 = vpop.f32.mrb[0].mxu0
    %v2885 = vadd.f32 %v2788, %v2884
    %v2886 = vpop.f32.mrb[0].mxu0
    %2887 = vmatprep.mubr.bf16.mxu0 0
    %2888 = vmatmul.mubr.bf16.gmra.mrb[0].mxu0 %v2725
    %v2889 = vpop.f32.mrb[0].mxu0
    %v2890 = vadd.f32 %v2793, %v2889
    %v2891 = vpop.f32.mrb[0].mxu0
    %v2892 = vpop.f32.mrb[0].mxu0
    %v2893 = vadd.f32 %v2796, %v2892
    %v2894 = vpop.f32.mrb[0].mxu0
    %2895 = vmatprep.mubr.bf16.mxu0 0
    %2896 = vmatmul.mubr.bf16.gmra.mrb[0].mxu0 %v2728
    %v2897 = vpop.f32.mrb[0].mxu0
    %v2898 = vadd.f32 %v2801, %v2897
    %v2899 = vpop.f32.mrb[0].mxu0
    %v2900 = vpop.f32.mrb[0].mxu0
    %v2901 = vadd.f32 %v2804, %v2900
    %v2902 = vpop.f32.mrb[0].mxu0
    %2903 = vmatprep.mubr.bf16.mxu0 0
    %2904 = vmatmul.mubr.bf16.gmra.mrb[0].mxu0 %v2731
    %v2905 = vpop.f32.mrb[0].mxu0
    %v2906 = vadd.f32 %v2809, %v2905
    %v2907 = vpop.f32.mrb[0].mxu0
    %v2908 = vpop.f32.mrb[0].mxu0
    %v2909 = vadd.f32 %v2812, %v2908
    %v2910 = vpop.f32.mrb[0].mxu0
    %2911 = vmatprep.mubr.bf16.mxu0 0
    %2912 = vmatmul.mubr.bf16.gmra.mrb[0].mxu0 %v2734
    %v2913 = vpop.f32.mrb[0].mxu0
    %v2914 = vadd.f32 %v2817, %v2913
    %v2915 = vpop.f32.mrb[0].mxu0
    %v2916 = vpop.f32.mrb[0].mxu0
    %v2917 = vadd.f32 %v2820, %v2916
    %v2918 = vpop.f32.mrb[0].mxu0
    %2919 = vmatprep.mubr.bf16.mxu0 0
    %2920 = vmatmul.mubr.bf16.gmra.mrb[0].mxu0 %v2737
    %v2921 = vpop.f32.mrb[0].mxu0
    %v2922 = vadd.f32 %v2825, %v2921
    %v2923 = vpop.f32.mrb[0].mxu0
    %v2924 = vpop.f32.mrb[0].mxu0
    %v2925 = vadd.f32 %v2828, %v2924
    %v2926 = vpop.f32.mrb[0].mxu0
    %2927 = vmatprep.mubr.bf16.mxu0 0
    %2928 = vmatmul.mubr.bf16.gmra.mrb[0].mxu0 %v2740
    %v2929 = vpop.f32.mrb[0].mxu0
    %v2930 = vadd.f32 %v2833, %v2929
    %v2931 = vpop.f32.mrb[0].mxu0
    %v2932 = vpop.f32.mrb[0].mxu0
    %v2933 = vadd.f32 %v2836, %v2932
    %v2934 = vpop.f32.mrb[0].mxu0
    %2935 = vdwg.mxu0
    %v2936 = vmax.f32 %v2874, 0.0
    %v2937 = vmax.f32 %v2877, 0.0
    %v2938 = vmax.f32 %v2882, 0.0
    %v2939 = vmax.f32 %v2885, 0.0
    %v2940 = vmax.f32 %v2890, 0.0
    %v2941 = vmax.f32 %v2893, 0.0
    %v2942 = vmax.f32 %v2898, 0.0
    %v2943 = vmax.f32 %v2901, 0.0
    %v2944 = vmax.f32 %v2906, 0.0
    %v2945 = vmax.f32 %v2909, 0.0
    %v2946 = vmax.f32 %v2914, 0.0
    %v2947 = vmax.f32 %v2917, 0.0
    %v2948 = vmax.f32 %v2922, 0.0
    %v2949 = vmax.f32 %v2925, 0.0
    %v2950 = vmax.f32 %v2930, 0.0
    %v2951 = vmax.f32 %v2933, 0.0
    %vm2952 = vcmask 261120
    %v2953 = vsel %vm2952, %v2936, 0.0
    %2954 = vadd.xlane.f32.xlu0 %v2953
    %v2955 = vpop.xlane.xlu0 %2954
    %v2956 = vsel %vm2952, %v2937, 0.0
    %2957 = vadd.xlane.f32.xlu0 %v2956
    %v2958 = vpop.xlane.xlu0 %2957
    %v2959 = vsel %vm2952, %v2938, 0.0
    %2960 = vadd.xlane.f32.xlu0 %v2959
    %v2961 = vpop.xlane.xlu0 %2960
    %v2962 = vsel %vm2952, %v2939, 0.0
    %2963 = vadd.xlane.f32.xlu0 %v2962
    %v2964 = vpop.xlane.xlu0 %2963
    %v2965 = vsel %vm2952, %v2940, 0.0
    %2966 = vadd.xlane.f32.xlu0 %v2965
    %v2967 = vpop.xlane.xlu0 %2966
    %v2968 = vsel %vm2952, %v2941, 0.0
    %2969 = vadd.xlane.f32.xlu0 %v2968
    %v2970 = vpop.xlane.xlu0 %2969
    %v2971 = vsel %vm2952, %v2942, 0.0
    %2972 = vadd.xlane.f32.xlu0 %v2971
    %v2973 = vpop.xlane.xlu0 %2972
    %v2974 = vsel %vm2952, %v2943, 0.0
    %2975 = vadd.xlane.f32.xlu0 %v2974
    %v2976 = vpop.xlane.xlu0 %2975
    %v2977 = vsel %vm2952, %v2944, 0.0
    %2978 = vadd.xlane.f32.xlu0 %v2977
    %v2979 = vpop.xlane.xlu0 %2978
    %v2980 = vsel %vm2952, %v2945, 0.0
    %2981 = vadd.xlane.f32.xlu0 %v2980
    %v2982 = vpop.xlane.xlu0 %2981
    %v2983 = vsel %vm2952, %v2946, 0.0
    %2984 = vadd.xlane.f32.xlu0 %v2983
    %v2985 = vpop.xlane.xlu0 %2984
    %v2986 = vsel %vm2952, %v2947, 0.0
    %2987 = vadd.xlane.f32.xlu0 %v2986
    %v2988 = vpop.xlane.xlu0 %2987
    %v2989 = vsel %vm2952, %v2948, 0.0
    %2990 = vadd.xlane.f32.xlu0 %v2989
    %v2991 = vpop.xlane.xlu0 %2990
    %v2992 = vsel %vm2952, %v2949, 0.0
    %2993 = vadd.xlane.f32.xlu0 %v2992
    %v2994 = vpop.xlane.xlu0 %2993
    %v2995 = vsel %vm2952, %v2950, 0.0
    %2996 = vadd.xlane.f32.xlu0 %v2995
    %v2997 = vpop.xlane.xlu0 %2996
    %v2998 = vsel %vm2952, %v2951, 0.0
    %2999 = vadd.xlane.f32.xlu0 %v2998
    %v3000 = vpop.xlane.xlu0 %2999
    %v3001 = vmul.f32 %v2955, 0.03125
    %v3002 = vmul.f32 %v2958, 0.03125
    %v3003 = vmul.f32 %v2961, 0.03125
    %v3004 = vmul.f32 %v2964, 0.03125
    %v3005 = vmul.f32 %v2967, 0.03125
    %v3006 = vmul.f32 %v2970, 0.03125
    %v3007 = vmul.f32 %v2973, 0.03125
    %v3008 = vmul.f32 %v2976, 0.03125
    %v3009 = vmul.f32 %v2979, 0.03125
    %v3010 = vmul.f32 %v2982, 0.03125
    %v3011 = vmul.f32 %v2985, 0.03125
    %v3012 = vmul.f32 %v2988, 0.03125
    %v3013 = vmul.f32 %v2991, 0.03125
    %v3014 = vmul.f32 %v2994, 0.03125
    %v3015 = vmul.f32 %v2997, 0.03125
    %v3016 = vmul.f32 %v3000, 0.03125
    %v3017 = vmul.f32 %v2936, %v2936
    %v3018 = vmul.f32 %v2937, %v2937
    %v3019 = vmul.f32 %v2938, %v2938
    %v3020 = vmul.f32 %v2939, %v2939
    %v3021 = vmul.f32 %v2940, %v2940
    %v3022 = vmul.f32 %v2941, %v2941
    %v3023 = vmul.f32 %v2942, %v2942
    %v3024 = vmul.f32 %v2943, %v2943
    %v3025 = vmul.f32 %v2944, %v2944
    %v3026 = vmul.f32 %v2945, %v2945
    %v3027 = vmul.f32 %v2946, %v2946
    %v3028 = vmul.f32 %v2947, %v2947
    %v3029 = vmul.f32 %v2948, %v2948
    %v3030 = vmul.f32 %v2949, %v2949
    %v3031 = vmul.f32 %v2950, %v2950
    %v3032 = vmul.f32 %v2951, %v2951
    %v3033 = vsel %vm2952, %v3017, 0.0
    %3034 = vadd.xlane.f32.xlu0 %v3033
    %v3035 = vpop.xlane.xlu0 %3034
    %v3036 = vsel %vm2952, %v3018, 0.0
    %3037 = vadd.xlane.f32.xlu0 %v3036
    %v3038 = vpop.xlane.xlu0 %3037
    %v3039 = vsel %vm2952, %v3019, 0.0
    %3040 = vadd.xlane.f32.xlu0 %v3039
    %v3041 = vpop.xlane.xlu0 %3040
    %v3042 = vsel %vm2952, %v3020, 0.0
    %3043 = vadd.xlane.f32.xlu0 %v3042
    %v3044 = vpop.xlane.xlu0 %3043
    %v3045 = vsel %vm2952, %v3021, 0.0
    %3046 = vadd.xlane.f32.xlu0 %v3045
    %v3047 = vpop.xlane.xlu0 %3046
    %v3048 = vsel %vm2952, %v3022, 0.0
    %3049 = vadd.xlane.f32.xlu0 %v3048
    %v3050 = vpop.xlane.xlu0 %3049
    %v3051 = vsel %vm2952, %v3023, 0.0
    %3052 = vadd.xlane.f32.xlu0 %v3051
    %v3053 = vpop.xlane.xlu0 %3052
    %v3054 = vsel %vm2952, %v3024, 0.0
    %3055 = vadd.xlane.f32.xlu0 %v3054
    %v3056 = vpop.xlane.xlu0 %3055
    %v3057 = vsel %vm2952, %v3025, 0.0
    %3058 = vadd.xlane.f32.xlu0 %v3057
    %v3059 = vpop.xlane.xlu0 %3058
    %v3060 = vsel %vm2952, %v3026, 0.0
    %3061 = vadd.xlane.f32.xlu0 %v3060
    %v3062 = vpop.xlane.xlu0 %3061
    %v3063 = vsel %vm2952, %v3027, 0.0
    %3064 = vadd.xlane.f32.xlu0 %v3063
    %v3065 = vpop.xlane.xlu0 %3064
    %v3066 = vsel %vm2952, %v3028, 0.0
    %3067 = vadd.xlane.f32.xlu0 %v3066
    %v3068 = vpop.xlane.xlu0 %3067
    %v3069 = vsel %vm2952, %v3029, 0.0
    %3070 = vadd.xlane.f32.xlu0 %v3069
    %v3071 = vpop.xlane.xlu0 %3070
    %v3072 = vsel %vm2952, %v3030, 0.0
    %3073 = vadd.xlane.f32.xlu0 %v3072
    %v3074 = vpop.xlane.xlu0 %3073
    %v3075 = vsel %vm2952, %v3031, 0.0
    %3076 = vadd.xlane.f32.xlu0 %v3075
    %v3077 = vpop.xlane.xlu0 %3076
    %v3078 = vsel %vm2952, %v3032, 0.0
    %3079 = vadd.xlane.f32.xlu0 %v3078
    %v3080 = vpop.xlane.xlu0 %3079
    %v3081 = vmul.f32 %v3035, 0.03125
    %v3082 = vmul.f32 %v3038, 0.03125
    %v3083 = vmul.f32 %v3041, 0.03125
    %v3084 = vmul.f32 %v3044, 0.03125
    %v3085 = vmul.f32 %v3047, 0.03125
    %v3086 = vmul.f32 %v3050, 0.03125
    %v3087 = vmul.f32 %v3053, 0.03125
    %v3088 = vmul.f32 %v3056, 0.03125
    %v3089 = vmul.f32 %v3059, 0.03125
    %v3090 = vmul.f32 %v3062, 0.03125
    %v3091 = vmul.f32 %v3065, 0.03125
    %v3092 = vmul.f32 %v3068, 0.03125
    %v3093 = vmul.f32 %v3071, 0.03125
    %v3094 = vmul.f32 %v3074, 0.03125
    %v3095 = vmul.f32 %v3077, 0.03125
    %v3096 = vmul.f32 %v3080, 0.03125
    %v3097 = vmul.f32 %v3001, %v3001
    %v3098 = vmul.f32 %v3002, %v3002
    %v3099 = vmul.f32 %v3003, %v3003
    %v3100 = vmul.f32 %v3004, %v3004
    %v3101 = vmul.f32 %v3005, %v3005
    %v3102 = vmul.f32 %v3006, %v3006
    %v3103 = vmul.f32 %v3007, %v3007
    %v3104 = vmul.f32 %v3008, %v3008
    %v3105 = vmul.f32 %v3009, %v3009
    %v3106 = vmul.f32 %v3010, %v3010
    %v3107 = vmul.f32 %v3011, %v3011
    %v3108 = vmul.f32 %v3012, %v3012
    %v3109 = vmul.f32 %v3013, %v3013
    %v3110 = vmul.f32 %v3014, %v3014
    %v3111 = vmul.f32 %v3015, %v3015
    %v3112 = vmul.f32 %v3016, %v3016
    %v3113 = vsub.f32 %v3081, %v3097
    %v3114 = vsub.f32 %v3082, %v3098
    %v3115 = vsub.f32 %v3083, %v3099
    %v3116 = vsub.f32 %v3084, %v3100
    %v3117 = vsub.f32 %v3085, %v3101
    %v3118 = vsub.f32 %v3086, %v3102
    %v3119 = vsub.f32 %v3087, %v3103
    %v3120 = vsub.f32 %v3088, %v3104
    %v3121 = vsub.f32 %v3089, %v3105
    %v3122 = vsub.f32 %v3090, %v3106
    %v3123 = vsub.f32 %v3091, %v3107
    %v3124 = vsub.f32 %v3092, %v3108
    %v3125 = vsub.f32 %v3093, %v3109
    %v3126 = vsub.f32 %v3094, %v3110
    %v3127 = vsub.f32 %v3095, %v3111
    %v3128 = vsub.f32 %v3096, %v3112
    %v3129 = vmax.f32 %v3113, 0.0
    %v3130 = vmax.f32 %v3114, 0.0
    %v3131 = vmax.f32 %v3115, 0.0
    %v3132 = vmax.f32 %v3116, 0.0
    %v3133 = vmax.f32 %v3117, 0.0
    %v3134 = vmax.f32 %v3118, 0.0
    %v3135 = vmax.f32 %v3119, 0.0
    %v3136 = vmax.f32 %v3120, 0.0
    %v3137 = vmax.f32 %v3121, 0.0
    %v3138 = vmax.f32 %v3122, 0.0
    %v3139 = vmax.f32 %v3123, 0.0
    %v3140 = vmax.f32 %v3124, 0.0
    %v3141 = vmax.f32 %v3125, 0.0
    %v3142 = vmax.f32 %v3126, 0.0
    %v3143 = vmax.f32 %v3127, 0.0
    %v3144 = vmax.f32 %v3128, 0.0
    %v3145 = vadd.f32 %v3129, 1e-05
    %v3146 = vadd.f32 %v3130, 1e-05
    %v3147 = vadd.f32 %v3131, 1e-05
    %v3148 = vadd.f32 %v3132, 1e-05
    %v3149 = vadd.f32 %v3133, 1e-05
    %v3150 = vadd.f32 %v3134, 1e-05
    %v3151 = vadd.f32 %v3135, 1e-05
    %v3152 = vadd.f32 %v3136, 1e-05
    %v3153 = vadd.f32 %v3137, 1e-05
    %v3154 = vadd.f32 %v3138, 1e-05
    %v3155 = vadd.f32 %v3139, 1e-05
    %v3156 = vadd.f32 %v3140, 1e-05
    %v3157 = vadd.f32 %v3141, 1e-05
    %v3158 = vadd.f32 %v3142, 1e-05
    %v3159 = vadd.f32 %v3143, 1e-05
    %v3160 = vadd.f32 %v3144, 1e-05
    %v3161 = vrsqrt.pop %v3145
    %v3162 = vrsqrt.pop %v3146
    %v3163 = vrsqrt.pop %v3147
    %v3164 = vrsqrt.pop %v3148
    %v3165 = vrsqrt.pop %v3149
    %v3166 = vrsqrt.pop %v3150
    %v3167 = vrsqrt.pop %v3151
    %v3168 = vrsqrt.pop %v3152
    %v3169 = vrsqrt.pop %v3153
    %v3170 = vrsqrt.pop %v3154
    %v3171 = vrsqrt.pop %v3155
    %v3172 = vrsqrt.pop %v3156
    %v3173 = vrsqrt.pop %v3157
    %v3174 = vrsqrt.pop %v3158
    %v3175 = vrsqrt.pop %v3159
    %v3176 = vrsqrt.pop %v3160
    %v3177 = vmul.f32 %v2502, %v3161
    %v3178 = vmul.f32 %v2503, %v3162
    %v3179 = vmul.f32 %v2504, %v3163
    %v3180 = vmul.f32 %v2505, %v3164
    %v3181 = vmul.f32 %v2506, %v3165
    %v3182 = vmul.f32 %v2507, %v3166
    %v3183 = vmul.f32 %v2508, %v3167
    %v3184 = vmul.f32 %v2509, %v3168
    %v3185 = vmul.f32 %v2510, %v3169
    %v3186 = vmul.f32 %v2511, %v3170
    %v3187 = vmul.f32 %v2512, %v3171
    %v3188 = vmul.f32 %v2513, %v3172
    %v3189 = vmul.f32 %v2514, %v3173
    %v3190 = vmul.f32 %v2515, %v3174
    %v3191 = vmul.f32 %v2516, %v3175
    %v3192 = vmul.f32 %v2517, %v3176
    %v3193 = vmul.f32 %v3001, %v3177
    %v3194 = vmul.f32 %v3002, %v3178
    %v3195 = vmul.f32 %v3003, %v3179
    %v3196 = vmul.f32 %v3004, %v3180
    %v3197 = vmul.f32 %v3005, %v3181
    %v3198 = vmul.f32 %v3006, %v3182
    %v3199 = vmul.f32 %v3007, %v3183
    %v3200 = vmul.f32 %v3008, %v3184
    %v3201 = vmul.f32 %v3009, %v3185
    %v3202 = vmul.f32 %v3010, %v3186
    %v3203 = vmul.f32 %v3011, %v3187
    %v3204 = vmul.f32 %v3012, %v3188
    %v3205 = vmul.f32 %v3013, %v3189
    %v3206 = vmul.f32 %v3014, %v3190
    %v3207 = vmul.f32 %v3015, %v3191
    %v3208 = vmul.f32 %v3016, %v3192
    %3225 = vrot.lane.b32.xlu0 %v3193, 1
    %v3226 = vpop.permute.xlu0 %3225
    %3227 = vrot.lane.b32.xlu0 %v3194, 1
    %v3228 = vpop.permute.xlu0 %3227
    %3229 = vrot.lane.b32.xlu0 %v3195, 1
    %v3230 = vpop.permute.xlu0 %3229
    %3231 = vrot.lane.b32.xlu0 %v3196, 1
    %v3232 = vpop.permute.xlu0 %3231
    %3233 = vrot.lane.b32.xlu0 %v3197, 1
    %v3234 = vpop.permute.xlu0 %3233
    %3235 = vrot.lane.b32.xlu0 %v3198, 1
    %v3236 = vpop.permute.xlu0 %3235
    %3237 = vrot.lane.b32.xlu0 %v3199, 1
    %v3238 = vpop.permute.xlu0 %3237
    %3239 = vrot.lane.b32.xlu0 %v3200, 1
    %v3240 = vpop.permute.xlu0 %3239
    %3241 = vrot.lane.b32.xlu0 %v3201, 1
    %v3242 = vpop.permute.xlu0 %3241
    %3243 = vrot.lane.b32.xlu0 %v3202, 1
    %v3244 = vpop.permute.xlu0 %3243
    %3245 = vrot.lane.b32.xlu0 %v3203, 1
    %v3246 = vpop.permute.xlu0 %3245
    %3247 = vrot.lane.b32.xlu0 %v3204, 1
    %v3248 = vpop.permute.xlu0 %3247
    %3249 = vrot.lane.b32.xlu0 %v3205, 1
    %v3250 = vpop.permute.xlu0 %3249
    %3251 = vrot.lane.b32.xlu0 %v3206, 1
    %v3252 = vpop.permute.xlu0 %3251
    %3253 = vrot.lane.b32.xlu0 %v3207, 1
    %v3254 = vpop.permute.xlu0 %3253
    %3255 = vrot.lane.b32.xlu0 %v3208, 1
    %v3256 = vpop.permute.xlu0 %3255
    %v3273 = vsub.f32 %v2502, %v3226
    %v3274 = vsub.f32 %v2503, %v3228
    %v3275 = vsub.f32 %v2504, %v3230
    %v3276 = vsub.f32 %v2505, %v3232
    %v3277 = vsub.f32 %v2506, %v3234
    %v3278 = vsub.f32 %v2507, %v3236
    %v3279 = vsub.f32 %v2508, %v3238
    %v3280 = vsub.f32 %v2509, %v3240
    %v3281 = vsub.f32 %v2510, %v3242
    %v3282 = vsub.f32 %v2511, %v3244
    %v3283 = vsub.f32 %v2512, %v3246
    %v3284 = vsub.f32 %v2513, %v3248
    %v3285 = vsub.f32 %v2514, %v3250
    %v3286 = vsub.f32 %v2515, %v3252
    %v3287 = vsub.f32 %v2516, %v3254
    %v3288 = vsub.f32 %v2517, %v3256
    %3290 = vset.pattern.permute.xlu0 1
    %3291 = vperm.xlu0 %3290, %v3177
    %v3292 = vpop.permute.xlu0 %3291
    %3295 = vset.pattern.permute.xlu0 1
    %3296 = vperm.xlu0 %3295, %v3178
    %v3297 = vpop.permute.xlu0 %3296
    %3300 = vset.pattern.permute.xlu0 1
    %3301 = vperm.xlu0 %3300, %v3179
    %v3302 = vpop.permute.xlu0 %3301
    %3305 = vset.pattern.permute.xlu0 1
    %3306 = vperm.xlu0 %3305, %v3180
    %v3307 = vpop.permute.xlu0 %3306
    %3310 = vset.pattern.permute.xlu0 1
    %3311 = vperm.xlu0 %3310, %v3181
    %v3312 = vpop.permute.xlu0 %3311
    %3315 = vset.pattern.permute.xlu0 1
    %3316 = vperm.xlu0 %3315, %v3182
    %v3317 = vpop.permute.xlu0 %3316
    %3320 = vset.pattern.permute.xlu0 1
    %3321 = vperm.xlu0 %3320, %v3183
    %v3322 = vpop.permute.xlu0 %3321
    %3325 = vset.pattern.permute.xlu0 1
    %3326 = vperm.xlu0 %3325, %v3184
    %v3327 = vpop.permute.xlu0 %3326
    %3330 = vset.pattern.permute.xlu0 1
    %3331 = vperm.xlu0 %3330, %v3185
    %v3332 = vpop.permute.xlu0 %3331
    %3335 = vset.pattern.permute.xlu0 1
    %3336 = vperm.xlu0 %3335, %v3186
    %v3337 = vpop.permute.xlu0 %3336
    %3340 = vset.pattern.permute.xlu0 1
    %3341 = vperm.xlu0 %3340, %v3187
    %v3342 = vpop.permute.xlu0 %3341
    %3345 = vset.pattern.permute.xlu0 1
    %3346 = vperm.xlu0 %3345, %v3188
    %v3347 = vpop.permute.xlu0 %3346
    %3350 = vset.pattern.permute.xlu0 1
    %3351 = vperm.xlu0 %3350, %v3189
    %v3352 = vpop.permute.xlu0 %3351
    %3355 = vset.pattern.permute.xlu0 1
    %3356 = vperm.xlu0 %3355, %v3190
    %v3357 = vpop.permute.xlu0 %3356
    %3360 = vset.pattern.permute.xlu0 1
    %3361 = vperm.xlu0 %3360, %v3191
    %v3362 = vpop.permute.xlu0 %3361
    %3365 = vset.pattern.permute.xlu0 1
    %3366 = vperm.xlu0 %3365, %v3192
    %v3367 = vpop.permute.xlu0 %3366
    %v3369 = vmul.f32 %v2936, %v3292
    %v3370 = vmul.f32 %v2937, %v3297
    %v3371 = vmul.f32 %v2938, %v3302
    %v3372 = vmul.f32 %v2939, %v3307
    %v3373 = vmul.f32 %v2940, %v3312
    %v3374 = vmul.f32 %v2941, %v3317
    %v3375 = vmul.f32 %v2942, %v3322
    %v3376 = vmul.f32 %v2943, %v3327
    %v3377 = vmul.f32 %v2944, %v3332
    %v3378 = vmul.f32 %v2945, %v3337
    %v3379 = vmul.f32 %v2946, %v3342
    %v3380 = vmul.f32 %v2947, %v3347
    %v3381 = vmul.f32 %v2948, %v3352
    %v3382 = vmul.f32 %v2949, %v3357
    %v3383 = vmul.f32 %v2950, %v3362
    %v3384 = vmul.f32 %v2951, %v3367
    %3386 = vset.pattern.permute.xlu0 2
    %3387 = vperm.xlu0 %3386, %v3273
    %v3388 = vpop.permute.xlu0 %3387
    %3391 = vset.pattern.permute.xlu0 2
    %3392 = vperm.xlu0 %3391, %v3274
    %v3393 = vpop.permute.xlu0 %3392
    %3396 = vset.pattern.permute.xlu0 2
    %3397 = vperm.xlu0 %3396, %v3275
    %v3398 = vpop.permute.xlu0 %3397
    %3401 = vset.pattern.permute.xlu0 2
    %3402 = vperm.xlu0 %3401, %v3276
    %v3403 = vpop.permute.xlu0 %3402
    %3406 = vset.pattern.permute.xlu0 2
    %3407 = vperm.xlu0 %3406, %v3277
    %v3408 = vpop.permute.xlu0 %3407
    %3411 = vset.pattern.permute.xlu0 2
    %3412 = vperm.xlu0 %3411, %v3278
    %v3413 = vpop.permute.xlu0 %3412
    %3416 = vset.pattern.permute.xlu0 2
    %3417 = vperm.xlu0 %3416, %v3279
    %v3418 = vpop.permute.xlu0 %3417
    %3421 = vset.pattern.permute.xlu0 2
    %3422 = vperm.xlu0 %3421, %v3280
    %v3423 = vpop.permute.xlu0 %3422
    %3426 = vset.pattern.permute.xlu0 2
    %3427 = vperm.xlu0 %3426, %v3281
    %v3428 = vpop.permute.xlu0 %3427
    %3431 = vset.pattern.permute.xlu0 2
    %3432 = vperm.xlu0 %3431, %v3282
    %v3433 = vpop.permute.xlu0 %3432
    %3436 = vset.pattern.permute.xlu0 2
    %3437 = vperm.xlu0 %3436, %v3283
    %v3438 = vpop.permute.xlu0 %3437
    %3441 = vset.pattern.permute.xlu0 2
    %3442 = vperm.xlu0 %3441, %v3284
    %v3443 = vpop.permute.xlu0 %3442
    %3446 = vset.pattern.permute.xlu0 2
    %3447 = vperm.xlu0 %3446, %v3285
    %v3448 = vpop.permute.xlu0 %3447
    %3451 = vset.pattern.permute.xlu0 2
    %3452 = vperm.xlu0 %3451, %v3286
    %v3453 = vpop.permute.xlu0 %3452
    %3456 = vset.pattern.permute.xlu0 2
    %3457 = vperm.xlu0 %3456, %v3287
    %v3458 = vpop.permute.xlu0 %3457
    %3461 = vset.pattern.permute.xlu0 2
    %3462 = vperm.xlu0 %3461, %v3288
    %v3463 = vpop.permute.xlu0 %3462
    %v3465 = vadd.f32 %v3369, %v3388
    %v3466 = vadd.f32 %v3370, %v3393
    %v3467 = vadd.f32 %v3371, %v3398
    %v3468 = vadd.f32 %v3372, %v3403
    %v3469 = vadd.f32 %v3373, %v3408
    %v3470 = vadd.f32 %v3374, %v3413
    %v3471 = vadd.f32 %v3375, %v3418
    %v3472 = vadd.f32 %v3376, %v3423
    %v3473 = vadd.f32 %v3377, %v3428
    %v3474 = vadd.f32 %v3378, %v3433
    %v3475 = vadd.f32 %v3379, %v3438
    %v3476 = vadd.f32 %v3380, %v3443
    %v3477 = vadd.f32 %v3381, %v3448
    %v3478 = vadd.f32 %v3382, %v3453
    %v3479 = vadd.f32 %v3383, %v3458
    %v3480 = vadd.f32 %v3384, %v3463
    %v3481 = vpack.c.bf16 %v3466, %v3465
    %v3482 = vpack.c.bf16 %v3468, %v3467
    %v3483 = vpack.c.bf16 %v3470, %v3469
    %v3484 = vpack.c.bf16 %v3472, %v3471
    %v3485 = vpack.c.bf16 %v3474, %v3473
    %v3486 = vpack.c.bf16 %v3476, %v3475
    %v3487 = vpack.c.bf16 %v3478, %v3477
    %v3488 = vpack.c.bf16 %v3480, %v3479
    %v3489 = vld [vmem:[%s4] sm:$0xff]
    %v3490 = vld [vmem:[%s4 + $0x8] sm:$0xf]
    %v3491 = vld [vmem:[%s4 + $0xc] sm:$0xff]
    %v3492 = vld [vmem:[%s4 + $0x14] sm:$0xf]
    %v3493 = vld [vmem:[%s4 + $0x18] sm:$0xff]
    %v3494 = vld [vmem:[%s4 + $0x20] sm:$0xf]
    %v3495 = vld [vmem:[%s4 + $0x24] sm:$0xff]
    %v3496 = vld [vmem:[%s4 + $0x2c] sm:$0xf]
    %v3497 = vld [vmem:[%s10] sm:$0xff]
    %v3498 = vld [vmem:[%s10 + $0x8] sm:$0xff]
    %v3499 = vld [vmem:[%s10 + $0x10] sm:$0xf]
    %v3500 = vld [vmem:[%s10 + $0x14] sm:$0xff]
    %v3501 = vld [vmem:[%s10 + $0x1c] sm:$0xff]
    %v3502 = vld [vmem:[%s10 + $0x24] sm:$0xf]
    %v3503 = vld [vmem:[%s10 + $0x28] sm:$0xff]
    %v3504 = vld [vmem:[%s10 + $0x30] sm:$0xff]
    %v3505 = vld [vmem:[%s10 + $0x38] sm:$0xf]
    %v3506 = vld [vmem:[%s10 + $0x3c] sm:$0xff]
    %v3507 = vld [vmem:[%s10 + $0x44] sm:$0xff]
    %v3508 = vld [vmem:[%s10 + $0x4c] sm:$0xf]
    %v3509 = vld [vmem:[%s10 + $0x50] sm:$0xff]
    %v3510 = vld [vmem:[%s10 + $0x58] sm:$0xff]
    %v3511 = vld [vmem:[%s10 + $0x60] sm:$0xf]
    %v3512 = vld [vmem:[%s10 + $0x64] sm:$0xff]
    %v3513 = vld [vmem:[%s10 + $0x6c] sm:$0xff]
    %v3514 = vld [vmem:[%s10 + $0x74] sm:$0xf]
    %v3515 = vld [vmem:[%s10 + $0x78] sm:$0xff]
    %v3516 = vld [vmem:[%s10 + $0x80] sm:$0xff]
    %v3517 = vld [vmem:[%s10 + $0x88] sm:$0xf]
    %v3518 = vld [vmem:[%s10 + $0x8c] sm:$0xff]
    %v3519 = vld [vmem:[%s10 + $0x94] sm:$0xff]
    %v3520 = vld [vmem:[%s10 + $0x9c] sm:$0xf]
    %v3529 = vunpack.c.l.b16 %v3489
    %v3530 = vunpack.c.h.b16 %v3489
    %v3531 = vunpack.c.l.b16 %v3490
    %v3532 = vunpack.c.l.b16 %v3491
    %v3533 = vunpack.c.h.b16 %v3491
    %v3534 = vunpack.c.l.b16 %v3492
    %v3535 = vunpack.c.l.b16 %v3493
    %v3536 = vunpack.c.h.b16 %v3493
    %v3537 = vunpack.c.l.b16 %v3494
    %v3538 = vunpack.c.l.b16 %v3495
    %v3539 = vunpack.c.h.b16 %v3495
    %v3540 = vunpack.c.l.b16 %v3496
    %v3541 = vpack.c.b16 %v3532, %v3529
    %v3542 = vpack.c.b16 %v3533, %v3530
    %v3543 = vpack.c.b16 %v3534, %v3531
    %v3544 = vpack.c.b16 %v3538, %v3535
    %v3545 = vpack.c.b16 %v3539, %v3536
    %v3546 = vpack.c.b16 %v3540, %v3537
    %v3554 = vsel %vm2952, %v3481, 0
    %v3557 = vsel %vm2952, %v3482, 0
    %v3560 = vsel %vm2952, %v3483, 0
    %v3563 = vsel %vm2952, %v3484, 0
    %v3566 = vsel %vm2952, %v3485, 0
    %v3569 = vsel %vm2952, %v3486, 0
    %v3572 = vsel %vm2952, %v3487, 0
    %v3575 = vsel %vm2952, %v3488, 0
    %3577 = vmatprep.subr.bf16.mxu0 %v3542
    %3578 = vmatpush1.bf16.msra.mxu0 %v3541
    %3579 = vmatprep.subr.bf16.mxu0 %v3545
    %3580 = vmatpush1.bf16.msra.mxu0 %v3544
    %3581 = vmatprep.subr.bf16.mxu0 0
    %3582 = vmatpush1.bf16.msra.mxu0 0
    %3583 = vmatprep.subr.bf16.mxu0 0
    %3584 = vmatpush1.bf16.msra.mxu0 0
    %3585 = vmatprep.subr.bf16.mxu0 0
    %3586 = vmatpush1.bf16.msra.mxu0 0
    %3587 = vmatprep.subr.bf16.mxu0 0
    %3588 = vmatpush1.bf16.msra.mxu0 0
    %3589 = vmatprep.subr.bf16.mxu0 0
    %3590 = vmatpush1.bf16.msra.mxu0 0
    %3591 = vmatprep.subr.bf16.mxu0 0
    %3592 = vmatpush1.bf16.msra.mxu0 0
    %3593 = vmatprep.subr.bf16.mxu0 0
    %3594 = vmatpush1.bf16.msra.mxu0 0
    %3595 = vmatprep.subr.bf16.mxu0 0
    %3596 = vmatpush1.bf16.msra.mxu0 0
    %3597 = vmatprep.subr.bf16.mxu0 0
    %3598 = vmatpush1.bf16.msra.mxu0 0
    %3599 = vmatprep.subr.bf16.mxu0 0
    %3600 = vmatpush1.bf16.msra.mxu0 0
    %3601 = vmatprep.subr.bf16.mxu0 0
    %3602 = vmatpush1.bf16.msra.mxu0 0
    %3603 = vmatprep.subr.bf16.mxu0 0
    %3604 = vmatpush1.bf16.msra.mxu0 0
    %3605 = vmatprep.subr.bf16.mxu0 0
    %3606 = vmatpush1.bf16.msra.mxu0 0
    %3607 = vmatprep.subr.bf16.mxu0 0
    %3608 = vmatpush1.bf16.msra.mxu0 0
    %3609 = vmatprep.mubr.bf16.mxu0 0
    %3610 = vmatmul.mubr.bf16.gmra.mrb[0].mxu0 %v3554
    %v3611 = vpop.f32.mrb[0].mxu0
    %v3612 = vadd.f32 0.0, %v3611
    %v3613 = vpop.f32.mrb[0].mxu0
    %v3614 = vadd.f32 0.0, %v3613
    %v3615 = vpop.f32.mrb[0].mxu0
    %v3616 = vadd.f32 0.0, %v3615
    %v3617 = vpop.f32.mrb[0].mxu0
    %v3618 = vadd.f32 0.0, %v3617
    %3619 = vmatprep.mubr.bf16.mxu0 0
    %3620 = vmatmul.mubr.bf16.gmra.mrb[0].mxu0 %v3557
    %v3621 = vpop.f32.mrb[0].mxu0
    %v3622 = vadd.f32 0.0, %v3621
    %v3623 = vpop.f32.mrb[0].mxu0
    %v3624 = vadd.f32 0.0, %v3623
    %v3625 = vpop.f32.mrb[0].mxu0
    %v3626 = vadd.f32 0.0, %v3625
    %v3627 = vpop.f32.mrb[0].mxu0
    %v3628 = vadd.f32 0.0, %v3627
    %3629 = vmatprep.mubr.bf16.mxu0 0
    %3630 = vmatmul.mubr.bf16.gmra.mrb[0].mxu0 %v3560
    %v3631 = vpop.f32.mrb[0].mxu0
    %v3632 = vadd.f32 0.0, %v3631
    %v3633 = vpop.f32.mrb[0].mxu0
    %v3634 = vadd.f32 0.0, %v3633
    %v3635 = vpop.f32.mrb[0].mxu0
    %v3636 = vadd.f32 0.0, %v3635
    %v3637 = vpop.f32.mrb[0].mxu0
    %v3638 = vadd.f32 0.0, %v3637
    %3639 = vmatprep.mubr.bf16.mxu0 0
    %3640 = vmatmul.mubr.bf16.gmra.mrb[0].mxu0 %v3563
    %v3641 = vpop.f32.mrb[0].mxu0
    %v3642 = vadd.f32 0.0, %v3641
    %v3643 = vpop.f32.mrb[0].mxu0
    %v3644 = vadd.f32 0.0, %v3643
    %v3645 = vpop.f32.mrb[0].mxu0
    %v3646 = vadd.f32 0.0, %v3645
    %v3647 = vpop.f32.mrb[0].mxu0
    %v3648 = vadd.f32 0.0, %v3647
    %3649 = vmatprep.mubr.bf16.mxu0 0
    %3650 = vmatmul.mubr.bf16.gmra.mrb[0].mxu0 %v3566
    %v3651 = vpop.f32.mrb[0].mxu0
    %v3652 = vadd.f32 0.0, %v3651
    %v3653 = vpop.f32.mrb[0].mxu0
    %v3654 = vadd.f32 0.0, %v3653
    %v3655 = vpop.f32.mrb[0].mxu0
    %v3656 = vadd.f32 0.0, %v3655
    %v3657 = vpop.f32.mrb[0].mxu0
    %v3658 = vadd.f32 0.0, %v3657
    %3659 = vmatprep.mubr.bf16.mxu0 0
    %3660 = vmatmul.mubr.bf16.gmra.mrb[0].mxu0 %v3569
    %v3661 = vpop.f32.mrb[0].mxu0
    %v3662 = vadd.f32 0.0, %v3661
    %v3663 = vpop.f32.mrb[0].mxu0
    %v3664 = vadd.f32 0.0, %v3663
    %v3665 = vpop.f32.mrb[0].mxu0
    %v3666 = vadd.f32 0.0, %v3665
    %v3667 = vpop.f32.mrb[0].mxu0
    %v3668 = vadd.f32 0.0, %v3667
    %3669 = vmatprep.mubr.bf16.mxu0 0
    %3670 = vmatmul.mubr.bf16.gmra.mrb[0].mxu0 %v3572
    %v3671 = vpop.f32.mrb[0].mxu0
    %v3672 = vadd.f32 0.0, %v3671
    %v3673 = vpop.f32.mrb[0].mxu0
    %v3674 = vadd.f32 0.0, %v3673
    %v3675 = vpop.f32.mrb[0].mxu0
    %v3676 = vadd.f32 0.0, %v3675
    %v3677 = vpop.f32.mrb[0].mxu0
    %v3678 = vadd.f32 0.0, %v3677
    %3679 = vmatprep.mubr.bf16.mxu0 0
    %3680 = vmatmul.mubr.bf16.gmra.mrb[0].mxu0 %v3575
    %v3681 = vpop.f32.mrb[0].mxu0
    %v3682 = vadd.f32 0.0, %v3681
    %v3683 = vpop.f32.mrb[0].mxu0
    %v3684 = vadd.f32 0.0, %v3683
    %v3685 = vpop.f32.mrb[0].mxu0
    %v3686 = vadd.f32 0.0, %v3685
    %v3687 = vpop.f32.mrb[0].mxu0
    %v3688 = vadd.f32 0.0, %v3687
    %3689 = vdwg.mxu0
    %3690 = vmatprep.subr.bf16.mxu0 0
    %3691 = vmatpush1.bf16.msra.mxu0 %v3543
    %3692 = vmatprep.subr.bf16.mxu0 0
    %3693 = vmatpush1.bf16.msra.mxu0 %v3546
    %3694 = vmatprep.subr.bf16.mxu0 0
    %3695 = vmatpush1.bf16.msra.mxu0 0
    %3696 = vmatprep.subr.bf16.mxu0 0
    %3697 = vmatpush1.bf16.msra.mxu0 0
    %3698 = vmatprep.subr.bf16.mxu0 0
    %3699 = vmatpush1.bf16.msra.mxu0 0
    %3700 = vmatprep.subr.bf16.mxu0 0
    %3701 = vmatpush1.bf16.msra.mxu0 0
    %3702 = vmatprep.subr.bf16.mxu0 0
    %3703 = vmatpush1.bf16.msra.mxu0 0
    %3704 = vmatprep.subr.bf16.mxu0 0
    %3705 = vmatpush1.bf16.msra.mxu0 0
    %3706 = vmatprep.subr.bf16.mxu0 0
    %3707 = vmatpush1.bf16.msra.mxu0 0
    %3708 = vmatprep.subr.bf16.mxu0 0
    %3709 = vmatpush1.bf16.msra.mxu0 0
    %3710 = vmatprep.subr.bf16.mxu0 0
    %3711 = vmatpush1.bf16.msra.mxu0 0
    %3712 = vmatprep.subr.bf16.mxu0 0
    %3713 = vmatpush1.bf16.msra.mxu0 0
    %3714 = vmatprep.subr.bf16.mxu0 0
    %3715 = vmatpush1.bf16.msra.mxu0 0
    %3716 = vmatprep.subr.bf16.mxu0 0
    %3717 = vmatpush1.bf16.msra.mxu0 0
    %3718 = vmatprep.subr.bf16.mxu0 0
    %3719 = vmatpush1.bf16.msra.mxu0 0
    %3720 = vmatprep.subr.bf16.mxu0 0
    %3721 = vmatpush1.bf16.msra.mxu0 0
    %3722 = vmatprep.mubr.bf16.mxu0 0
    %3723 = vmatmul.mubr.bf16.gmra.mrb[0].mxu0 %v3554
    %v3724 = vpop.f32.mrb[0].mxu0
    %v3725 = vadd.f32 0.0, %v3724
    %v3726 = vpop.f32.mrb[0].mxu0
    %v3727 = vpop.f32.mrb[0].mxu0
    %v3728 = vadd.f32 0.0, %v3727
    %v3729 = vpop.f32.mrb[0].mxu0
    %3730 = vmatprep.mubr.bf16.mxu0 0
    %3731 = vmatmul.mubr.bf16.gmra.mrb[0].mxu0 %v3557
    %v3732 = vpop.f32.mrb[0].mxu0
    %v3733 = vadd.f32 0.0, %v3732
    %v3734 = vpop.f32.mrb[0].mxu0
    %v3735 = vpop.f32.mrb[0].mxu0
    %v3736 = vadd.f32 0.0, %v3735
    %v3737 = vpop.f32.mrb[0].mxu0
    %3738 = vmatprep.mubr.bf16.mxu0 0
    %3739 = vmatmul.mubr.bf16.gmra.mrb[0].mxu0 %v3560
    %v3740 = vpop.f32.mrb[0].mxu0
    %v3741 = vadd.f32 0.0, %v3740
    %v3742 = vpop.f32.mrb[0].mxu0
    %v3743 = vpop.f32.mrb[0].mxu0
    %v3744 = vadd.f32 0.0, %v3743
    %v3745 = vpop.f32.mrb[0].mxu0
    %3746 = vmatprep.mubr.bf16.mxu0 0
    %3747 = vmatmul.mubr.bf16.gmra.mrb[0].mxu0 %v3563
    %v3748 = vpop.f32.mrb[0].mxu0
    %v3749 = vadd.f32 0.0, %v3748
    %v3750 = vpop.f32.mrb[0].mxu0
    %v3751 = vpop.f32.mrb[0].mxu0
    %v3752 = vadd.f32 0.0, %v3751
    %v3753 = vpop.f32.mrb[0].mxu0
    %3754 = vmatprep.mubr.bf16.mxu0 0
    %3755 = vmatmul.mubr.bf16.gmra.mrb[0].mxu0 %v3566
    %v3756 = vpop.f32.mrb[0].mxu0
    %v3757 = vadd.f32 0.0, %v3756
    %v3758 = vpop.f32.mrb[0].mxu0
    %v3759 = vpop.f32.mrb[0].mxu0
    %v3760 = vadd.f32 0.0, %v3759
    %v3761 = vpop.f32.mrb[0].mxu0
    %3762 = vmatprep.mubr.bf16.mxu0 0
    %3763 = vmatmul.mubr.bf16.gmra.mrb[0].mxu0 %v3569
    %v3764 = vpop.f32.mrb[0].mxu0
    %v3765 = vadd.f32 0.0, %v3764
    %v3766 = vpop.f32.mrb[0].mxu0
    %v3767 = vpop.f32.mrb[0].mxu0
    %v3768 = vadd.f32 0.0, %v3767
    %v3769 = vpop.f32.mrb[0].mxu0
    %3770 = vmatprep.mubr.bf16.mxu0 0
    %3771 = vmatmul.mubr.bf16.gmra.mrb[0].mxu0 %v3572
    %v3772 = vpop.f32.mrb[0].mxu0
    %v3773 = vadd.f32 0.0, %v3772
    %v3774 = vpop.f32.mrb[0].mxu0
    %v3775 = vpop.f32.mrb[0].mxu0
    %v3776 = vadd.f32 0.0, %v3775
    %v3777 = vpop.f32.mrb[0].mxu0
    %3778 = vmatprep.mubr.bf16.mxu0 0
    %3779 = vmatmul.mubr.bf16.gmra.mrb[0].mxu0 %v3575
    %v3780 = vpop.f32.mrb[0].mxu0
    %v3781 = vadd.f32 0.0, %v3780
    %v3782 = vpop.f32.mrb[0].mxu0
    %v3783 = vpop.f32.mrb[0].mxu0
    %v3784 = vadd.f32 0.0, %v3783
    %v3785 = vpop.f32.mrb[0].mxu0
    %3786 = vdwg.mxu0
    %3803 = vrot.lane.b32.xlu0 %v3612, 64
    %v3804 = vpop.permute.xlu0 %3803
    %3805 = vrot.lane.b32.xlu0 %v3616, 64
    %v3806 = vpop.permute.xlu0 %3805
    %3807 = vrot.lane.b32.xlu0 %v3622, 64
    %v3808 = vpop.permute.xlu0 %3807
    %3809 = vrot.lane.b32.xlu0 %v3626, 64
    %v3810 = vpop.permute.xlu0 %3809
    %3811 = vrot.lane.b32.xlu0 %v3632, 64
    %v3812 = vpop.permute.xlu0 %3811
    %3813 = vrot.lane.b32.xlu0 %v3636, 64
    %v3814 = vpop.permute.xlu0 %3813
    %3815 = vrot.lane.b32.xlu0 %v3642, 64
    %v3816 = vpop.permute.xlu0 %3815
    %3817 = vrot.lane.b32.xlu0 %v3646, 64
    %v3818 = vpop.permute.xlu0 %3817
    %3819 = vrot.lane.b32.xlu0 %v3652, 64
    %v3820 = vpop.permute.xlu0 %3819
    %3821 = vrot.lane.b32.xlu0 %v3656, 64
    %v3822 = vpop.permute.xlu0 %3821
    %3823 = vrot.lane.b32.xlu0 %v3662, 64
    %v3824 = vpop.permute.xlu0 %3823
    %3825 = vrot.lane.b32.xlu0 %v3666, 64
    %v3826 = vpop.permute.xlu0 %3825
    %3827 = vrot.lane.b32.xlu0 %v3672, 64
    %v3828 = vpop.permute.xlu0 %3827
    %3829 = vrot.lane.b32.xlu0 %v3676, 64
    %v3830 = vpop.permute.xlu0 %3829
    %3831 = vrot.lane.b32.xlu0 %v3682, 64
    %v3832 = vpop.permute.xlu0 %3831
    %3833 = vrot.lane.b32.xlu0 %v3686, 64
    %v3834 = vpop.permute.xlu0 %3833
    %3867 = vrot.lane.b32.xlu0 %v3614, 64
    %v3868 = vpop.permute.xlu0 %3867
    %3869 = vrot.lane.b32.xlu0 %v3618, 64
    %v3870 = vpop.permute.xlu0 %3869
    %3871 = vrot.lane.b32.xlu0 %v3624, 64
    %v3872 = vpop.permute.xlu0 %3871
    %3873 = vrot.lane.b32.xlu0 %v3628, 64
    %v3874 = vpop.permute.xlu0 %3873
    %3875 = vrot.lane.b32.xlu0 %v3634, 64
    %v3876 = vpop.permute.xlu0 %3875
    %3877 = vrot.lane.b32.xlu0 %v3638, 64
    %v3878 = vpop.permute.xlu0 %3877
    %3879 = vrot.lane.b32.xlu0 %v3644, 64
    %v3880 = vpop.permute.xlu0 %3879
    %3881 = vrot.lane.b32.xlu0 %v3648, 64
    %v3882 = vpop.permute.xlu0 %3881
    %3883 = vrot.lane.b32.xlu0 %v3654, 64
    %v3884 = vpop.permute.xlu0 %3883
    %3885 = vrot.lane.b32.xlu0 %v3658, 64
    %v3886 = vpop.permute.xlu0 %3885
    %3887 = vrot.lane.b32.xlu0 %v3664, 64
    %v3888 = vpop.permute.xlu0 %3887
    %3889 = vrot.lane.b32.xlu0 %v3668, 64
    %v3890 = vpop.permute.xlu0 %3889
    %3891 = vrot.lane.b32.xlu0 %v3674, 64
    %v3892 = vpop.permute.xlu0 %3891
    %3893 = vrot.lane.b32.xlu0 %v3678, 64
    %v3894 = vpop.permute.xlu0 %3893
    %3895 = vrot.lane.b32.xlu0 %v3684, 64
    %v3896 = vpop.permute.xlu0 %3895
    %3897 = vrot.lane.b32.xlu0 %v3688, 64
    %v3898 = vpop.permute.xlu0 %3897
    %v3915 = vpack.c.bf16 %v3616, %v3612
    %v3916 = vpack.c.bf16 %v3626, %v3622
    %v3917 = vpack.c.bf16 %v3636, %v3632
    %v3918 = vpack.c.bf16 %v3646, %v3642
    %v3919 = vpack.c.bf16 %v3656, %v3652
    %v3920 = vpack.c.bf16 %v3666, %v3662
    %v3921 = vpack.c.bf16 %v3676, %v3672
    %v3922 = vpack.c.bf16 %v3686, %v3682
    %v3923 = vpack.c.bf16 %v3806, %v3804
    %v3924 = vpack.c.bf16 %v3810, %v3808
    %v3925 = vpack.c.bf16 %v3814, %v3812
    %v3926 = vpack.c.bf16 %v3818, %v3816
    %v3927 = vpack.c.bf16 %v3822, %v3820
    %v3928 = vpack.c.bf16 %v3826, %v3824
    %v3929 = vpack.c.bf16 %v3830, %v3828
    %v3930 = vpack.c.bf16 %v3834, %v3832
    %v3931 = vpack.c.bf16 %v3618, %v3614
    %v3932 = vpack.c.bf16 %v3628, %v3624
    %v3933 = vpack.c.bf16 %v3638, %v3634
    %v3934 = vpack.c.bf16 %v3648, %v3644
    %v3935 = vpack.c.bf16 %v3658, %v3654
    %v3936 = vpack.c.bf16 %v3668, %v3664
    %v3937 = vpack.c.bf16 %v3678, %v3674
    %v3938 = vpack.c.bf16 %v3688, %v3684
    %v3939 = vpack.c.bf16 %v3870, %v3868
    %v3940 = vpack.c.bf16 %v3874, %v3872
    %v3941 = vpack.c.bf16 %v3878, %v3876
    %v3942 = vpack.c.bf16 %v3882, %v3880
    %v3943 = vpack.c.bf16 %v3886, %v3884
    %v3944 = vpack.c.bf16 %v3890, %v3888
    %v3945 = vpack.c.bf16 %v3894, %v3892
    %v3946 = vpack.c.bf16 %v3898, %v3896
    %v3947 = vpack.c.bf16 %v3728, %v3725
    %v3948 = vpack.c.bf16 %v3736, %v3733
    %v3949 = vpack.c.bf16 %v3744, %v3741
    %v3950 = vpack.c.bf16 %v3752, %v3749
    %v3951 = vpack.c.bf16 %v3760, %v3757
    %v3952 = vpack.c.bf16 %v3768, %v3765
    %v3953 = vpack.c.bf16 %v3776, %v3773
    %v3954 = vpack.c.bf16 %v3784, %v3781
    %s3955 = scalar_lea.vmem %s13, 384
    %v3956 = vld [vmem:[%s3955] sm:$0xff]
    %v3957 = vld [vmem:[%s3955 + $0x8] sm:$0xff]
    %v3958 = vld [vmem:[%s3955 + $0x10] sm:$0xff]
    %v3959 = vld [vmem:[%s3955 + $0x18] sm:$0xff]
    %v3960 = vld [vmem:[%s3955 + $0x20] sm:$0xff]
    %v3961 = vld [vmem:[%s3955 + $0x28] sm:$0xff]
    %v3962 = vld [vmem:[%s3955 + $0x30] sm:$0xff]
    %v3963 = vld [vmem:[%s3955 + $0x38] sm:$0xff]
    %3965 = vset.pattern.permute.xlu0 0
    %3966 = vperm.xlu0 %3965, %v3956
    %v3967 = vpop.permute.xlu0 %3966
    %3970 = vset.pattern.permute.xlu0 0
    %3971 = vperm.xlu0 %3970, %v3957
    %v3972 = vpop.permute.xlu0 %3971
    %3975 = vset.pattern.permute.xlu0 0
    %3976 = vperm.xlu0 %3975, %v3958
    %v3977 = vpop.permute.xlu0 %3976
    %3980 = vset.pattern.permute.xlu0 0
    %3981 = vperm.xlu0 %3980, %v3959
    %v3982 = vpop.permute.xlu0 %3981
    %3985 = vset.pattern.permute.xlu0 0
    %3986 = vperm.xlu0 %3985, %v3960
    %v3987 = vpop.permute.xlu0 %3986
    %3990 = vset.pattern.permute.xlu0 0
    %3991 = vperm.xlu0 %3990, %v3961
    %v3992 = vpop.permute.xlu0 %3991
    %3995 = vset.pattern.permute.xlu0 0
    %3996 = vperm.xlu0 %3995, %v3962
    %v3997 = vpop.permute.xlu0 %3996
    %4000 = vset.pattern.permute.xlu0 0
    %4001 = vperm.xlu0 %4000, %v3963
    %v4002 = vpop.permute.xlu0 %4001
    %v4028 = vunpack.c.l.b16 %v3497
    %v4029 = vunpack.c.h.b16 %v3497
    %v4030 = vunpack.c.l.b16 %v3498
    %v4031 = vunpack.c.h.b16 %v3498
    %v4032 = vunpack.c.l.b16 %v3499
    %v4033 = vunpack.c.l.b16 %v3500
    %v4034 = vunpack.c.h.b16 %v3500
    %v4035 = vunpack.c.l.b16 %v3501
    %v4036 = vunpack.c.h.b16 %v3501
    %v4037 = vunpack.c.l.b16 %v3502
    %v4038 = vunpack.c.l.b16 %v3503
    %v4039 = vunpack.c.h.b16 %v3503
    %v4040 = vunpack.c.l.b16 %v3504
    %v4041 = vunpack.c.h.b16 %v3504
    %v4042 = vunpack.c.l.b16 %v3505
    %v4043 = vunpack.c.l.b16 %v3506
    %v4044 = vunpack.c.h.b16 %v3506
    %v4045 = vunpack.c.l.b16 %v3507
    %v4046 = vunpack.c.h.b16 %v3507
    %v4047 = vunpack.c.l.b16 %v3508
    %v4048 = vunpack.c.l.b16 %v3509
    %v4049 = vunpack.c.h.b16 %v3509
    %v4050 = vunpack.c.l.b16 %v3510
    %v4051 = vunpack.c.h.b16 %v3510
    %v4052 = vunpack.c.l.b16 %v3511
    %v4053 = vunpack.c.l.b16 %v3512
    %v4054 = vunpack.c.h.b16 %v3512
    %v4055 = vunpack.c.l.b16 %v3513
    %v4056 = vunpack.c.h.b16 %v3513
    %v4057 = vunpack.c.l.b16 %v3514
    %v4058 = vunpack.c.l.b16 %v3515
    %v4059 = vunpack.c.h.b16 %v3515
    %v4060 = vunpack.c.l.b16 %v3516
    %v4061 = vunpack.c.h.b16 %v3516
    %v4062 = vunpack.c.l.b16 %v3517
    %v4063 = vunpack.c.l.b16 %v3518
    %v4064 = vunpack.c.h.b16 %v3518
    %v4065 = vunpack.c.l.b16 %v3519
    %v4066 = vunpack.c.h.b16 %v3519
    %v4067 = vunpack.c.l.b16 %v3520
    %v4068 = vpack.c.b16 %v4033, %v4028
    %v4069 = vpack.c.b16 %v4034, %v4029
    %v4070 = vpack.c.b16 %v4035, %v4030
    %v4071 = vpack.c.b16 %v4036, %v4031
    %v4072 = vpack.c.b16 %v4037, %v4032
    %v4073 = vpack.c.b16 %v4043, %v4038
    %v4074 = vpack.c.b16 %v4044, %v4039
    %v4075 = vpack.c.b16 %v4045, %v4040
    %v4076 = vpack.c.b16 %v4046, %v4041
    %v4077 = vpack.c.b16 %v4047, %v4042
    %v4078 = vpack.c.b16 %v4053, %v4048
    %v4079 = vpack.c.b16 %v4054, %v4049
    %v4080 = vpack.c.b16 %v4055, %v4050
    %v4081 = vpack.c.b16 %v4056, %v4051
    %v4082 = vpack.c.b16 %v4057, %v4052
    %v4083 = vpack.c.b16 %v4063, %v4058
    %v4084 = vpack.c.b16 %v4064, %v4059
    %v4085 = vpack.c.b16 %v4065, %v4060
    %v4086 = vpack.c.b16 %v4066, %v4061
    %v4087 = vpack.c.b16 %v4067, %v4062
    %4108 = vmatprep.subr.bf16.mxu0 0
    %4109 = vmatpush1.bf16.msra.mxu0 %v3915
    %4110 = vmatprep.subr.bf16.mxu0 0
    %4111 = vmatpush1.bf16.msra.mxu0 %v3916
    %4112 = vmatprep.subr.bf16.mxu0 0
    %4113 = vmatpush1.bf16.msra.mxu0 %v3917
    %4114 = vmatprep.subr.bf16.mxu0 0
    %4115 = vmatpush1.bf16.msra.mxu0 %v3918
    %4116 = vmatprep.subr.bf16.mxu0 0
    %4117 = vmatpush1.bf16.msra.mxu0 %v3919
    %4118 = vmatprep.subr.bf16.mxu0 0
    %4119 = vmatpush1.bf16.msra.mxu0 %v3920
    %4120 = vmatprep.subr.bf16.mxu0 0
    %4121 = vmatpush1.bf16.msra.mxu0 %v3921
    %4122 = vmatprep.subr.bf16.mxu0 0
    %4123 = vmatpush1.bf16.msra.mxu0 %v3922
    %4124 = vmatprep.subr.bf16.mxu0 0
    %4125 = vmatpush1.bf16.msra.mxu0 %v3923
    %4126 = vmatprep.subr.bf16.mxu0 0
    %4127 = vmatpush1.bf16.msra.mxu0 %v3924
    %4128 = vmatprep.subr.bf16.mxu0 0
    %4129 = vmatpush1.bf16.msra.mxu0 %v3925
    %4130 = vmatprep.subr.bf16.mxu0 0
    %4131 = vmatpush1.bf16.msra.mxu0 %v3926
    %4132 = vmatprep.subr.bf16.mxu0 0
    %4133 = vmatpush1.bf16.msra.mxu0 %v3927
    %4134 = vmatprep.subr.bf16.mxu0 0
    %4135 = vmatpush1.bf16.msra.mxu0 %v3928
    %4136 = vmatprep.subr.bf16.mxu0 0
    %4137 = vmatpush1.bf16.msra.mxu0 %v3929
    %4138 = vmatprep.subr.bf16.mxu0 0
    %4139 = vmatpush1.bf16.msra.mxu0 %v3930
    %4140 = vmatprep.mubr.bf16.mxu0 %v4069
    %4141 = vmatmul.mubr.bf16.gmra.mrb[0].mxu0 %v4068
    %v4142 = vpop.f32.mrb[0].mxu0
    %v4143 = vadd.f32 %v3967, %v4142
    %v4144 = vpop.f32.mrb[0].mxu0
    %v4145 = vpop.f32.mrb[0].mxu0
    %v4146 = vadd.f32 %v3972, %v4145
    %v4147 = vpop.f32.mrb[0].mxu0
    %4148 = vmatprep.mubr.bf16.mxu0 %v4074
    %4149 = vmatmul.mubr.bf16.gmra.mrb[0].mxu0 %v4073
    %v4150 = vpop.f32.mrb[0].mxu0
    %v4151 = vadd.f32 %v3977, %v4150
    %v4152 = vpop.f32.mrb[0].mxu0
    %v4153 = vpop.f32.mrb[0].mxu0
    %v4154 = vadd.f32 %v3982, %v4153
    %v4155 = vpop.f32.mrb[0].mxu0
    %4156 = vmatprep.mubr.bf16.mxu0 %v4079
    %4157 = vmatmul.mubr.bf16.gmra.mrb[0].mxu0 %v4078
    %v4158 = vpop.f32.mrb[0].mxu0
    %v4159 = vadd.f32 %v3987, %v4158
    %v4160 = vpop.f32.mrb[0].mxu0
    %v4161 = vpop.f32.mrb[0].mxu0
    %v4162 = vadd.f32 %v3992, %v4161
    %v4163 = vpop.f32.mrb[0].mxu0
    %4164 = vmatprep.mubr.bf16.mxu0 %v4084
    %4165 = vmatmul.mubr.bf16.gmra.mrb[0].mxu0 %v4083
    %v4166 = vpop.f32.mrb[0].mxu0
    %v4167 = vadd.f32 %v3997, %v4166
    %v4168 = vpop.f32.mrb[0].mxu0
    %v4169 = vpop.f32.mrb[0].mxu0
    %v4170 = vadd.f32 %v4002, %v4169
    %v4171 = vpop.f32.mrb[0].mxu0
    %4172 = vdwg.mxu0
    %4173 = vmatprep.subr.bf16.mxu0 0
    %4174 = vmatpush1.bf16.msra.mxu0 %v3931
    %4175 = vmatprep.subr.bf16.mxu0 0
    %4176 = vmatpush1.bf16.msra.mxu0 %v3932
    %4177 = vmatprep.subr.bf16.mxu0 0
    %4178 = vmatpush1.bf16.msra.mxu0 %v3933
    %4179 = vmatprep.subr.bf16.mxu0 0
    %4180 = vmatpush1.bf16.msra.mxu0 %v3934
    %4181 = vmatprep.subr.bf16.mxu0 0
    %4182 = vmatpush1.bf16.msra.mxu0 %v3935
    %4183 = vmatprep.subr.bf16.mxu0 0
    %4184 = vmatpush1.bf16.msra.mxu0 %v3936
    %4185 = vmatprep.subr.bf16.mxu0 0
    %4186 = vmatpush1.bf16.msra.mxu0 %v3937
    %4187 = vmatprep.subr.bf16.mxu0 0
    %4188 = vmatpush1.bf16.msra.mxu0 %v3938
    %4189 = vmatprep.subr.bf16.mxu0 0
    %4190 = vmatpush1.bf16.msra.mxu0 %v3939
    %4191 = vmatprep.subr.bf16.mxu0 0
    %4192 = vmatpush1.bf16.msra.mxu0 %v3940
    %4193 = vmatprep.subr.bf16.mxu0 0
    %4194 = vmatpush1.bf16.msra.mxu0 %v3941
    %4195 = vmatprep.subr.bf16.mxu0 0
    %4196 = vmatpush1.bf16.msra.mxu0 %v3942
    %4197 = vmatprep.subr.bf16.mxu0 0
    %4198 = vmatpush1.bf16.msra.mxu0 %v3943
    %4199 = vmatprep.subr.bf16.mxu0 0
    %4200 = vmatpush1.bf16.msra.mxu0 %v3944
    %4201 = vmatprep.subr.bf16.mxu0 0
    %4202 = vmatpush1.bf16.msra.mxu0 %v3945
    %4203 = vmatprep.subr.bf16.mxu0 0
    %4204 = vmatpush1.bf16.msra.mxu0 %v3946
    %4205 = vmatprep.mubr.bf16.mxu0 %v4071
    %4206 = vmatmul.mubr.bf16.gmra.mrb[0].mxu0 %v4070
    %v4207 = vpop.f32.mrb[0].mxu0
    %v4208 = vadd.f32 %v4143, %v4207
    %v4209 = vpop.f32.mrb[0].mxu0
    %v4210 = vpop.f32.mrb[0].mxu0
    %v4211 = vadd.f32 %v4146, %v4210
    %v4212 = vpop.f32.mrb[0].mxu0
    %4213 = vmatprep.mubr.bf16.mxu0 %v4076
    %4214 = vmatmul.mubr.bf16.gmra.mrb[0].mxu0 %v4075
    %v4215 = vpop.f32.mrb[0].mxu0
    %v4216 = vadd.f32 %v4151, %v4215
    %v4217 = vpop.f32.mrb[0].mxu0
    %v4218 = vpop.f32.mrb[0].mxu0
    %v4219 = vadd.f32 %v4154, %v4218
    %v4220 = vpop.f32.mrb[0].mxu0
    %4221 = vmatprep.mubr.bf16.mxu0 %v4081
    %4222 = vmatmul.mubr.bf16.gmra.mrb[0].mxu0 %v4080
    %v4223 = vpop.f32.mrb[0].mxu0
    %v4224 = vadd.f32 %v4159, %v4223
    %v4225 = vpop.f32.mrb[0].mxu0
    %v4226 = vpop.f32.mrb[0].mxu0
    %v4227 = vadd.f32 %v4162, %v4226
    %v4228 = vpop.f32.mrb[0].mxu0
    %4229 = vmatprep.mubr.bf16.mxu0 %v4086
    %4230 = vmatmul.mubr.bf16.gmra.mrb[0].mxu0 %v4085
    %v4231 = vpop.f32.mrb[0].mxu0
    %v4232 = vadd.f32 %v4167, %v4231
    %v4233 = vpop.f32.mrb[0].mxu0
    %v4234 = vpop.f32.mrb[0].mxu0
    %v4235 = vadd.f32 %v4170, %v4234
    %v4236 = vpop.f32.mrb[0].mxu0
    %4237 = vdwg.mxu0
    %4238 = vmatprep.subr.bf16.mxu0 0
    %4239 = vmatpush1.bf16.msra.mxu0 %v3947
    %4240 = vmatprep.subr.bf16.mxu0 0
    %4241 = vmatpush1.bf16.msra.mxu0 %v3948
    %4242 = vmatprep.subr.bf16.mxu0 0
    %4243 = vmatpush1.bf16.msra.mxu0 %v3949
    %4244 = vmatprep.subr.bf16.mxu0 0
    %4245 = vmatpush1.bf16.msra.mxu0 %v3950
    %4246 = vmatprep.subr.bf16.mxu0 0
    %4247 = vmatpush1.bf16.msra.mxu0 %v3951
    %4248 = vmatprep.subr.bf16.mxu0 0
    %4249 = vmatpush1.bf16.msra.mxu0 %v3952
    %4250 = vmatprep.subr.bf16.mxu0 0
    %4251 = vmatpush1.bf16.msra.mxu0 %v3953
    %4252 = vmatprep.subr.bf16.mxu0 0
    %4253 = vmatpush1.bf16.msra.mxu0 %v3954
    %4254 = vmatprep.subr.bf16.mxu0 0
    %4255 = vmatpush1.bf16.msra.mxu0 0
    %4256 = vmatprep.subr.bf16.mxu0 0
    %4257 = vmatpush1.bf16.msra.mxu0 0
    %4258 = vmatprep.subr.bf16.mxu0 0
    %4259 = vmatpush1.bf16.msra.mxu0 0
    %4260 = vmatprep.subr.bf16.mxu0 0
    %4261 = vmatpush1.bf16.msra.mxu0 0
    %4262 = vmatprep.subr.bf16.mxu0 0
    %4263 = vmatpush1.bf16.msra.mxu0 0
    %4264 = vmatprep.subr.bf16.mxu0 0
    %4265 = vmatpush1.bf16.msra.mxu0 0
    %4266 = vmatprep.subr.bf16.mxu0 0
    %4267 = vmatpush1.bf16.msra.mxu0 0
    %4268 = vmatprep.subr.bf16.mxu0 0
    %4269 = vmatpush1.bf16.msra.mxu0 0
    %4270 = vmatprep.mubr.bf16.mxu0 0
    %4271 = vmatmul.mubr.bf16.gmra.mrb[0].mxu0 %v4072
    %v4272 = vpop.f32.mrb[0].mxu0
    %v4273 = vadd.f32 %v4208, %v4272
    %v4274 = vpop.f32.mrb[0].mxu0
    %v4275 = vpop.f32.mrb[0].mxu0
    %v4276 = vadd.f32 %v4211, %v4275
    %v4277 = vpop.f32.mrb[0].mxu0
    %4278 = vmatprep.mubr.bf16.mxu0 0
    %4279 = vmatmul.mubr.bf16.gmra.mrb[0].mxu0 %v4077
    %v4280 = vpop.f32.mrb[0].mxu0
    %v4281 = vadd.f32 %v4216, %v4280
    %v4282 = vpop.f32.mrb[0].mxu0
    %v4283 = vpop.f32.mrb[0].mxu0
    %v4284 = vadd.f32 %v4219, %v4283
    %v4285 = vpop.f32.mrb[0].mxu0
    %4286 = vmatprep.mubr.bf16.mxu0 0
    %4287 = vmatmul.mubr.bf16.gmra.mrb[0].mxu0 %v4082
    %v4288 = vpop.f32.mrb[0].mxu0
    %v4289 = vadd.f32 %v4224, %v4288
    %v4290 = vpop.f32.mrb[0].mxu0
    %v4291 = vpop.f32.mrb[0].mxu0
    %v4292 = vadd.f32 %v4227, %v4291
    %v4293 = vpop.f32.mrb[0].mxu0
    %4294 = vmatprep.mubr.bf16.mxu0 0
    %4295 = vmatmul.mubr.bf16.gmra.mrb[0].mxu0 %v4087
    %v4296 = vpop.f32.mrb[0].mxu0
    %v4297 = vadd.f32 %v4232, %v4296
    %v4298 = vpop.f32.mrb[0].mxu0
    %v4299 = vpop.f32.mrb[0].mxu0
    %v4300 = vadd.f32 %v4235, %v4299
    %v4301 = vpop.f32.mrb[0].mxu0
    %4302 = vdwg.mxu0
    %v4303 = vmax.f32 %v4273, 0.0
    %v4304 = vmax.f32 %v4276, 0.0
    %v4305 = vmax.f32 %v4281, 0.0
    %v4306 = vmax.f32 %v4284, 0.0
    %v4307 = vmax.f32 %v4289, 0.0
    %v4308 = vmax.f32 %v4292, 0.0
    %v4309 = vmax.f32 %v4297, 0.0
    %v4310 = vmax.f32 %v4300, 0.0
    %v4311 = vsel %vm1967, %v4303, 0.0
    %4312 = vadd.xlane.f32.xlu0 %v4311
    %v4313 = vpop.xlane.xlu0 %4312
    %v4314 = vsel %vm1967, %v4304, 0.0
    %4315 = vadd.xlane.f32.xlu0 %v4314
    %v4316 = vpop.xlane.xlu0 %4315
    %v4317 = vsel %vm1967, %v4305, 0.0
    %4318 = vadd.xlane.f32.xlu0 %v4317
    %v4319 = vpop.xlane.xlu0 %4318
    %v4320 = vsel %vm1967, %v4306, 0.0
    %4321 = vadd.xlane.f32.xlu0 %v4320
    %v4322 = vpop.xlane.xlu0 %4321
    %v4323 = vsel %vm1967, %v4307, 0.0
    %4324 = vadd.xlane.f32.xlu0 %v4323
    %v4325 = vpop.xlane.xlu0 %4324
    %v4326 = vsel %vm1967, %v4308, 0.0
    %4327 = vadd.xlane.f32.xlu0 %v4326
    %v4328 = vpop.xlane.xlu0 %4327
    %v4329 = vsel %vm1967, %v4309, 0.0
    %4330 = vadd.xlane.f32.xlu0 %v4329
    %v4331 = vpop.xlane.xlu0 %4330
    %v4332 = vsel %vm1967, %v4310, 0.0
    %4333 = vadd.xlane.f32.xlu0 %v4332
    %v4334 = vpop.xlane.xlu0 %4333
    %v4335 = vmul.f32 %v4313, 0.015625
    %v4336 = vmul.f32 %v4316, 0.015625
    %v4337 = vmul.f32 %v4319, 0.015625
    %v4338 = vmul.f32 %v4322, 0.015625
    %v4339 = vmul.f32 %v4325, 0.015625
    %v4340 = vmul.f32 %v4328, 0.015625
    %v4341 = vmul.f32 %v4331, 0.015625
    %v4342 = vmul.f32 %v4334, 0.015625
    %v4343 = vmul.f32 %v4303, %v4303
    %v4344 = vmul.f32 %v4304, %v4304
    %v4345 = vmul.f32 %v4305, %v4305
    %v4346 = vmul.f32 %v4306, %v4306
    %v4347 = vmul.f32 %v4307, %v4307
    %v4348 = vmul.f32 %v4308, %v4308
    %v4349 = vmul.f32 %v4309, %v4309
    %v4350 = vmul.f32 %v4310, %v4310
    %v4351 = vsel %vm1967, %v4343, 0.0
    %4352 = vadd.xlane.f32.xlu0 %v4351
    %v4353 = vpop.xlane.xlu0 %4352
    %v4354 = vsel %vm1967, %v4344, 0.0
    %4355 = vadd.xlane.f32.xlu0 %v4354
    %v4356 = vpop.xlane.xlu0 %4355
    %v4357 = vsel %vm1967, %v4345, 0.0
    %4358 = vadd.xlane.f32.xlu0 %v4357
    %v4359 = vpop.xlane.xlu0 %4358
    %v4360 = vsel %vm1967, %v4346, 0.0
    %4361 = vadd.xlane.f32.xlu0 %v4360
    %v4362 = vpop.xlane.xlu0 %4361
    %v4363 = vsel %vm1967, %v4347, 0.0
    %4364 = vadd.xlane.f32.xlu0 %v4363
    %v4365 = vpop.xlane.xlu0 %4364
    %v4366 = vsel %vm1967, %v4348, 0.0
    %4367 = vadd.xlane.f32.xlu0 %v4366
    %v4368 = vpop.xlane.xlu0 %4367
    %v4369 = vsel %vm1967, %v4349, 0.0
    %4370 = vadd.xlane.f32.xlu0 %v4369
    %v4371 = vpop.xlane.xlu0 %4370
    %v4372 = vsel %vm1967, %v4350, 0.0
    %4373 = vadd.xlane.f32.xlu0 %v4372
    %v4374 = vpop.xlane.xlu0 %4373
    %v4375 = vmul.f32 %v4353, 0.015625
    %v4376 = vmul.f32 %v4356, 0.015625
    %v4377 = vmul.f32 %v4359, 0.015625
    %v4378 = vmul.f32 %v4362, 0.015625
    %v4379 = vmul.f32 %v4365, 0.015625
    %v4380 = vmul.f32 %v4368, 0.015625
    %v4381 = vmul.f32 %v4371, 0.015625
    %v4382 = vmul.f32 %v4374, 0.015625
    %v4383 = vmul.f32 %v4335, %v4335
    %v4384 = vmul.f32 %v4336, %v4336
    %v4385 = vmul.f32 %v4337, %v4337
    %v4386 = vmul.f32 %v4338, %v4338
    %v4387 = vmul.f32 %v4339, %v4339
    %v4388 = vmul.f32 %v4340, %v4340
    %v4389 = vmul.f32 %v4341, %v4341
    %v4390 = vmul.f32 %v4342, %v4342
    %v4391 = vsub.f32 %v4375, %v4383
    %v4392 = vsub.f32 %v4376, %v4384
    %v4393 = vsub.f32 %v4377, %v4385
    %v4394 = vsub.f32 %v4378, %v4386
    %v4395 = vsub.f32 %v4379, %v4387
    %v4396 = vsub.f32 %v4380, %v4388
    %v4397 = vsub.f32 %v4381, %v4389
    %v4398 = vsub.f32 %v4382, %v4390
    %v4399 = vmax.f32 %v4391, 0.0
    %v4400 = vmax.f32 %v4392, 0.0
    %v4401 = vmax.f32 %v4393, 0.0
    %v4402 = vmax.f32 %v4394, 0.0
    %v4403 = vmax.f32 %v4395, 0.0
    %v4404 = vmax.f32 %v4396, 0.0
    %v4405 = vmax.f32 %v4397, 0.0
    %v4406 = vmax.f32 %v4398, 0.0
    %v4407 = vadd.f32 %v4399, 1e-05
    %v4408 = vadd.f32 %v4400, 1e-05
    %v4409 = vadd.f32 %v4401, 1e-05
    %v4410 = vadd.f32 %v4402, 1e-05
    %v4411 = vadd.f32 %v4403, 1e-05
    %v4412 = vadd.f32 %v4404, 1e-05
    %v4413 = vadd.f32 %v4405, 1e-05
    %v4414 = vadd.f32 %v4406, 1e-05
    %v4415 = vrsqrt.pop %v4407
    %v4416 = vrsqrt.pop %v4408
    %v4417 = vrsqrt.pop %v4409
    %v4418 = vrsqrt.pop %v4410
    %v4419 = vrsqrt.pop %v4411
    %v4420 = vrsqrt.pop %v4412
    %v4421 = vrsqrt.pop %v4413
    %v4422 = vrsqrt.pop %v4414
    %v4423 = vmul.f32 %v3956, %v4415
    %v4424 = vmul.f32 %v3957, %v4416
    %v4425 = vmul.f32 %v3958, %v4417
    %v4426 = vmul.f32 %v3959, %v4418
    %v4427 = vmul.f32 %v3960, %v4419
    %v4428 = vmul.f32 %v3961, %v4420
    %v4429 = vmul.f32 %v3962, %v4421
    %v4430 = vmul.f32 %v3963, %v4422
    %v4431 = vmul.f32 %v4335, %v4423
    %v4432 = vmul.f32 %v4336, %v4424
    %v4433 = vmul.f32 %v4337, %v4425
    %v4434 = vmul.f32 %v4338, %v4426
    %v4435 = vmul.f32 %v4339, %v4427
    %v4436 = vmul.f32 %v4340, %v4428
    %v4437 = vmul.f32 %v4341, %v4429
    %v4438 = vmul.f32 %v4342, %v4430
    %4447 = vrot.lane.b32.xlu0 %v4431, 1
    %v4448 = vpop.permute.xlu0 %4447
    %4449 = vrot.lane.b32.xlu0 %v4432, 1
    %v4450 = vpop.permute.xlu0 %4449
    %4451 = vrot.lane.b32.xlu0 %v4433, 1
    %v4452 = vpop.permute.xlu0 %4451
    %4453 = vrot.lane.b32.xlu0 %v4434, 1
    %v4454 = vpop.permute.xlu0 %4453
    %4455 = vrot.lane.b32.xlu0 %v4435, 1
    %v4456 = vpop.permute.xlu0 %4455
    %4457 = vrot.lane.b32.xlu0 %v4436, 1
    %v4458 = vpop.permute.xlu0 %4457
    %4459 = vrot.lane.b32.xlu0 %v4437, 1
    %v4460 = vpop.permute.xlu0 %4459
    %4461 = vrot.lane.b32.xlu0 %v4438, 1
    %v4462 = vpop.permute.xlu0 %4461
    %v4471 = vsub.f32 %v3956, %v4448
    %v4472 = vsub.f32 %v3957, %v4450
    %v4473 = vsub.f32 %v3958, %v4452
    %v4474 = vsub.f32 %v3959, %v4454
    %v4475 = vsub.f32 %v3960, %v4456
    %v4476 = vsub.f32 %v3961, %v4458
    %v4477 = vsub.f32 %v3962, %v4460
    %v4478 = vsub.f32 %v3963, %v4462
    %4480 = vset.pattern.permute.xlu0 1
    %4481 = vperm.xlu0 %4480, %v4423
    %v4482 = vpop.permute.xlu0 %4481
    %4485 = vset.pattern.permute.xlu0 1
    %4486 = vperm.xlu0 %4485, %v4424
    %v4487 = vpop.permute.xlu0 %4486
    %4490 = vset.pattern.permute.xlu0 1
    %4491 = vperm.xlu0 %4490, %v4425
    %v4492 = vpop.permute.xlu0 %4491
    %4495 = vset.pattern.permute.xlu0 1
    %4496 = vperm.xlu0 %4495, %v4426
    %v4497 = vpop.permute.xlu0 %4496
    %4500 = vset.pattern.permute.xlu0 1
    %4501 = vperm.xlu0 %4500, %v4427
    %v4502 = vpop.permute.xlu0 %4501
    %4505 = vset.pattern.permute.xlu0 1
    %4506 = vperm.xlu0 %4505, %v4428
    %v4507 = vpop.permute.xlu0 %4506
    %4510 = vset.pattern.permute.xlu0 1
    %4511 = vperm.xlu0 %4510, %v4429
    %v4512 = vpop.permute.xlu0 %4511
    %4515 = vset.pattern.permute.xlu0 1
    %4516 = vperm.xlu0 %4515, %v4430
    %v4517 = vpop.permute.xlu0 %4516
    %v4519 = vmul.f32 %v4303, %v4482
    %v4520 = vmul.f32 %v4304, %v4487
    %v4521 = vmul.f32 %v4305, %v4492
    %v4522 = vmul.f32 %v4306, %v4497
    %v4523 = vmul.f32 %v4307, %v4502
    %v4524 = vmul.f32 %v4308, %v4507
    %v4525 = vmul.f32 %v4309, %v4512
    %v4526 = vmul.f32 %v4310, %v4517
    %4528 = vset.pattern.permute.xlu0 2
    %4529 = vperm.xlu0 %4528, %v4471
    %v4530 = vpop.permute.xlu0 %4529
    %4533 = vset.pattern.permute.xlu0 2
    %4534 = vperm.xlu0 %4533, %v4472
    %v4535 = vpop.permute.xlu0 %4534
    %4538 = vset.pattern.permute.xlu0 2
    %4539 = vperm.xlu0 %4538, %v4473
    %v4540 = vpop.permute.xlu0 %4539
    %4543 = vset.pattern.permute.xlu0 2
    %4544 = vperm.xlu0 %4543, %v4474
    %v4545 = vpop.permute.xlu0 %4544
    %4548 = vset.pattern.permute.xlu0 2
    %4549 = vperm.xlu0 %4548, %v4475
    %v4550 = vpop.permute.xlu0 %4549
    %4553 = vset.pattern.permute.xlu0 2
    %4554 = vperm.xlu0 %4553, %v4476
    %v4555 = vpop.permute.xlu0 %4554
    %4558 = vset.pattern.permute.xlu0 2
    %4559 = vperm.xlu0 %4558, %v4477
    %v4560 = vpop.permute.xlu0 %4559
    %4563 = vset.pattern.permute.xlu0 2
    %4564 = vperm.xlu0 %4563, %v4478
    %v4565 = vpop.permute.xlu0 %4564
    %v4567 = vadd.f32 %v4519, %v4530
    %v4568 = vadd.f32 %v4520, %v4535
    %v4569 = vadd.f32 %v4521, %v4540
    %v4570 = vadd.f32 %v4522, %v4545
    %v4571 = vadd.f32 %v4523, %v4550
    %v4572 = vadd.f32 %v4524, %v4555
    %v4573 = vadd.f32 %v4525, %v4560
    %v4574 = vadd.f32 %v4526, %v4565
    %v4575 = vpack.c.bf16 %v4568, %v4567
    %v4576 = vpack.c.bf16 %v4570, %v4569
    %v4577 = vpack.c.bf16 %v4572, %v4571
    %v4578 = vpack.c.bf16 %v4574, %v4573
    %v4579 = vld [vmem:[%s5] sm:$0xff]
    %v4580 = vld [vmem:[%s5 + $0x8] sm:$0xff]
    %v4581 = vld [vmem:[%s5 + $0x10] sm:$0xff]
    %v4582 = vld [vmem:[%s5 + $0x18] sm:$0xf]
    %v4583 = vld [vmem:[%s5 + $0x1c] sm:$0xff]
    %v4584 = vld [vmem:[%s5 + $0x24] sm:$0xff]
    %v4585 = vld [vmem:[%s5 + $0x2c] sm:$0xff]
    %v4586 = vld [vmem:[%s5 + $0x34] sm:$0xf]
    %v4587 = vld [vmem:[%s5 + $0x38] sm:$0xff]
    %v4588 = vld [vmem:[%s5 + $0x40] sm:$0xff]
    %v4589 = vld [vmem:[%s5 + $0x48] sm:$0xff]
    %v4590 = vld [vmem:[%s5 + $0x50] sm:$0xf]
    %v4591 = vld [vmem:[%s5 + $0x54] sm:$0xff]
    %v4592 = vld [vmem:[%s5 + $0x5c] sm:$0xff]
    %v4593 = vld [vmem:[%s5 + $0x64] sm:$0xff]
    %v4594 = vld [vmem:[%s5 + $0x6c] sm:$0xf]
    %v4595 = vld [vmem:[%s5 + $0x70] sm:$0xff]
    %v4596 = vld [vmem:[%s5 + $0x78] sm:$0xff]
    %v4597 = vld [vmem:[%s5 + $0x80] sm:$0xff]
    %v4598 = vld [vmem:[%s5 + $0x88] sm:$0xf]
    %v4599 = vld [vmem:[%s5 + $0x8c] sm:$0xff]
    %v4600 = vld [vmem:[%s5 + $0x94] sm:$0xff]
    %v4601 = vld [vmem:[%s5 + $0x9c] sm:$0xff]
    %v4602 = vld [vmem:[%s5 + $0xa4] sm:$0xf]
    %v4603 = vld [vmem:[%s5 + $0xa8] sm:$0xff]
    %v4604 = vld [vmem:[%s5 + $0xb0] sm:$0xff]
    %v4605 = vld [vmem:[%s5 + $0xb8] sm:$0xff]
    %v4606 = vld [vmem:[%s5 + $0xc0] sm:$0xf]
    %v4607 = vld [vmem:[%s5 + $0xc4] sm:$0xff]
    %v4608 = vld [vmem:[%s5 + $0xcc] sm:$0xff]
    %v4609 = vld [vmem:[%s5 + $0xd4] sm:$0xff]
    %v4610 = vld [vmem:[%s5 + $0xdc] sm:$0xf]
    %v4611 = vld [vmem:[%s11] sm:$0xff]
    %v4612 = vld [vmem:[%s11 + $0x8] sm:$0xff]
    %v4613 = vld [vmem:[%s11 + $0x10] sm:$0xff]
    %v4614 = vld [vmem:[%s11 + $0x18] sm:$0xff]
    %v4615 = vld [vmem:[%s11 + $0x20] sm:$0xff]
    %v4616 = vld [vmem:[%s11 + $0x28] sm:$0xff]
    %v4617 = vld [vmem:[%s11 + $0x30] sm:$0xff]
    %v4618 = vld [vmem:[%s11 + $0x38] sm:$0xff]
    %v4651 = vunpack.c.l.b16 %v4579
    %v4652 = vunpack.c.h.b16 %v4579
    %v4653 = vunpack.c.l.b16 %v4580
    %v4654 = vunpack.c.h.b16 %v4580
    %v4655 = vunpack.c.l.b16 %v4581
    %v4656 = vunpack.c.h.b16 %v4581
    %v4657 = vunpack.c.l.b16 %v4582
    %v4658 = vunpack.c.l.b16 %v4583
    %v4659 = vunpack.c.h.b16 %v4583
    %v4660 = vunpack.c.l.b16 %v4584
    %v4661 = vunpack.c.h.b16 %v4584
    %v4662 = vunpack.c.l.b16 %v4585
    %v4663 = vunpack.c.h.b16 %v4585
    %v4664 = vunpack.c.l.b16 %v4586
    %v4665 = vunpack.c.l.b16 %v4587
    %v4666 = vunpack.c.h.b16 %v4587
    %v4667 = vunpack.c.l.b16 %v4588
    %v4668 = vunpack.c.h.b16 %v4588
    %v4669 = vunpack.c.l.b16 %v4589
    %v4670 = vunpack.c.h.b16 %v4589
    %v4671 = vunpack.c.l.b16 %v4590
    %v4672 = vunpack.c.l.b16 %v4591
    %v4673 = vunpack.c.h.b16 %v4591
    %v4674 = vunpack.c.l.b16 %v4592
    %v4675 = vunpack.c.h.b16 %v4592
    %v4676 = vunpack.c.l.b16 %v4593
    %v4677 = vunpack.c.h.b16 %v4593
    %v4678 = vunpack.c.l.b16 %v4594
    %v4679 = vunpack.c.l.b16 %v4595
    %v4680 = vunpack.c.h.b16 %v4595
    %v4681 = vunpack.c.l.b16 %v4596
    %v4682 = vunpack.c.h.b16 %v4596
    %v4683 = vunpack.c.l.b16 %v4597
    %v4684 = vunpack.c.h.b16 %v4597
    %v4685 = vunpack.c.l.b16 %v4598
    %v4686 = vunpack.c.l.b16 %v4599
    %v4687 = vunpack.c.h.b16 %v4599
    %v4688 = vunpack.c.l.b16 %v4600
    %v4689 = vunpack.c.h.b16 %v4600
    %v4690 = vunpack.c.l.b16 %v4601
    %v4691 = vunpack.c.h.b16 %v4601
    %v4692 = vunpack.c.l.b16 %v4602
    %v4693 = vunpack.c.l.b16 %v4603
    %v4694 = vunpack.c.h.b16 %v4603
    %v4695 = vunpack.c.l.b16 %v4604
    %v4696 = vunpack.c.h.b16 %v4604
    %v4697 = vunpack.c.l.b16 %v4605
    %v4698 = vunpack.c.h.b16 %v4605
    %v4699 = vunpack.c.l.b16 %v4606
    %v4700 = vunpack.c.l.b16 %v4607
    %v4701 = vunpack.c.h.b16 %v4607
    %v4702 = vunpack.c.l.b16 %v4608
    %v4703 = vunpack.c.h.b16 %v4608
    %v4704 = vunpack.c.l.b16 %v4609
    %v4705 = vunpack.c.h.b16 %v4609
    %v4706 = vunpack.c.l.b16 %v4610
    %v4707 = vpack.c.b16 %v4658, %v4651
    %v4708 = vpack.c.b16 %v4659, %v4652
    %v4709 = vpack.c.b16 %v4660, %v4653
    %v4710 = vpack.c.b16 %v4661, %v4654
    %v4711 = vpack.c.b16 %v4662, %v4655
    %v4712 = vpack.c.b16 %v4663, %v4656
    %v4713 = vpack.c.b16 %v4664, %v4657
    %v4714 = vpack.c.b16 %v4672, %v4665
    %v4715 = vpack.c.b16 %v4673, %v4666
    %v4716 = vpack.c.b16 %v4674, %v4667
    %v4717 = vpack.c.b16 %v4675, %v4668
    %v4718 = vpack.c.b16 %v4676, %v4669
    %v4719 = vpack.c.b16 %v4677, %v4670
    %v4720 = vpack.c.b16 %v4678, %v4671
    %v4721 = vpack.c.b16 %v4686, %v4679
    %v4722 = vpack.c.b16 %v4687, %v4680
    %v4723 = vpack.c.b16 %v4688, %v4681
    %v4724 = vpack.c.b16 %v4689, %v4682
    %v4725 = vpack.c.b16 %v4690, %v4683
    %v4726 = vpack.c.b16 %v4691, %v4684
    %v4727 = vpack.c.b16 %v4692, %v4685
    %v4728 = vpack.c.b16 %v4700, %v4693
    %v4729 = vpack.c.b16 %v4701, %v4694
    %v4730 = vpack.c.b16 %v4702, %v4695
    %v4731 = vpack.c.b16 %v4703, %v4696
    %v4732 = vpack.c.b16 %v4704, %v4697
    %v4733 = vpack.c.b16 %v4705, %v4698
    %v4734 = vpack.c.b16 %v4706, %v4699
    %v4764 = vsel %vm1967, %v4575, 0
    %v4767 = vsel %vm1967, %v4576, 0
    %v4770 = vsel %vm1967, %v4577, 0
    %v4773 = vsel %vm1967, %v4578, 0
    %4775 = vmatprep.subr.bf16.mxu0 %v4708
    %4776 = vmatpush1.bf16.msra.mxu0 %v4707
    %4777 = vmatprep.subr.bf16.mxu0 %v4715
    %4778 = vmatpush1.bf16.msra.mxu0 %v4714
    %4779 = vmatprep.subr.bf16.mxu0 %v4722
    %4780 = vmatpush1.bf16.msra.mxu0 %v4721
    %4781 = vmatprep.subr.bf16.mxu0 %v4729
    %4782 = vmatpush1.bf16.msra.mxu0 %v4728
    %4783 = vmatprep.subr.bf16.mxu0 0
    %4784 = vmatpush1.bf16.msra.mxu0 0
    %4785 = vmatprep.subr.bf16.mxu0 0
    %4786 = vmatpush1.bf16.msra.mxu0 0
    %4787 = vmatprep.subr.bf16.mxu0 0
    %4788 = vmatpush1.bf16.msra.mxu0 0
    %4789 = vmatprep.subr.bf16.mxu0 0
    %4790 = vmatpush1.bf16.msra.mxu0 0
    %4791 = vmatprep.subr.bf16.mxu0 0
    %4792 = vmatpush1.bf16.msra.mxu0 0
    %4793 = vmatprep.subr.bf16.mxu0 0
    %4794 = vmatpush1.bf16.msra.mxu0 0
    %4795 = vmatprep.subr.bf16.mxu0 0
    %4796 = vmatpush1.bf16.msra.mxu0 0
    %4797 = vmatprep.subr.bf16.mxu0 0
    %4798 = vmatpush1.bf16.msra.mxu0 0
    %4799 = vmatprep.subr.bf16.mxu0 0
    %4800 = vmatpush1.bf16.msra.mxu0 0
    %4801 = vmatprep.subr.bf16.mxu0 0
    %4802 = vmatpush1.bf16.msra.mxu0 0
    %4803 = vmatprep.subr.bf16.mxu0 0
    %4804 = vmatpush1.bf16.msra.mxu0 0
    %4805 = vmatprep.subr.bf16.mxu0 0
    %4806 = vmatpush1.bf16.msra.mxu0 0
    %4807 = vmatprep.mubr.bf16.mxu0 0
    %4808 = vmatmul.mubr.bf16.gmra.mrb[0].mxu0 %v4764
    %v4809 = vpop.f32.mrb[0].mxu0
    %v4810 = vadd.f32 0.0, %v4809
    %v4811 = vpop.f32.mrb[0].mxu0
    %v4812 = vadd.f32 0.0, %v4811
    %v4813 = vpop.f32.mrb[0].mxu0
    %v4814 = vadd.f32 0.0, %v4813
    %v4815 = vpop.f32.mrb[0].mxu0
    %v4816 = vadd.f32 0.0, %v4815
    %4817 = vmatprep.mubr.bf16.mxu0 0
    %4818 = vmatmul.mubr.bf16.gmra.mrb[0].mxu0 %v4767
    %v4819 = vpop.f32.mrb[0].mxu0
    %v4820 = vadd.f32 0.0, %v4819
    %v4821 = vpop.f32.mrb[0].mxu0
    %v4822 = vadd.f32 0.0, %v4821
    %v4823 = vpop.f32.mrb[0].mxu0
    %v4824 = vadd.f32 0.0, %v4823
    %v4825 = vpop.f32.mrb[0].mxu0
    %v4826 = vadd.f32 0.0, %v4825
    %4827 = vmatprep.mubr.bf16.mxu0 0
    %4828 = vmatmul.mubr.bf16.gmra.mrb[0].mxu0 %v4770
    %v4829 = vpop.f32.mrb[0].mxu0
    %v4830 = vadd.f32 0.0, %v4829
    %v4831 = vpop.f32.mrb[0].mxu0
    %v4832 = vadd.f32 0.0, %v4831
    %v4833 = vpop.f32.mrb[0].mxu0
    %v4834 = vadd.f32 0.0, %v4833
    %v4835 = vpop.f32.mrb[0].mxu0
    %v4836 = vadd.f32 0.0, %v4835
    %4837 = vmatprep.mubr.bf16.mxu0 0
    %4838 = vmatmul.mubr.bf16.gmra.mrb[0].mxu0 %v4773
    %v4839 = vpop.f32.mrb[0].mxu0
    %v4840 = vadd.f32 0.0, %v4839
    %v4841 = vpop.f32.mrb[0].mxu0
    %v4842 = vadd.f32 0.0, %v4841
    %v4843 = vpop.f32.mrb[0].mxu0
    %v4844 = vadd.f32 0.0, %v4843
    %v4845 = vpop.f32.mrb[0].mxu0
    %v4846 = vadd.f32 0.0, %v4845
    %4847 = vdwg.mxu0
    %4848 = vmatprep.subr.bf16.mxu0 %v4710
    %4849 = vmatpush1.bf16.msra.mxu0 %v4709
    %4850 = vmatprep.subr.bf16.mxu0 %v4717
    %4851 = vmatpush1.bf16.msra.mxu0 %v4716
    %4852 = vmatprep.subr.bf16.mxu0 %v4724
    %4853 = vmatpush1.bf16.msra.mxu0 %v4723
    %4854 = vmatprep.subr.bf16.mxu0 %v4731
    %4855 = vmatpush1.bf16.msra.mxu0 %v4730
    %4856 = vmatprep.subr.bf16.mxu0 0
    %4857 = vmatpush1.bf16.msra.mxu0 0
    %4858 = vmatprep.subr.bf16.mxu0 0
    %4859 = vmatpush1.bf16.msra.mxu0 0
    %4860 = vmatprep.subr.bf16.mxu0 0
    %4861 = vmatpush1.bf16.msra.mxu0 0
    %4862 = vmatprep.subr.bf16.mxu0 0
    %4863 = vmatpush1.bf16.msra.mxu0 0
    %4864 = vmatprep.subr.bf16.mxu0 0
    %4865 = vmatpush1.bf16.msra.mxu0 0
    %4866 = vmatprep.subr.bf16.mxu0 0
    %4867 = vmatpush1.bf16.msra.mxu0 0
    %4868 = vmatprep.subr.bf16.mxu0 0
    %4869 = vmatpush1.bf16.msra.mxu0 0
    %4870 = vmatprep.subr.bf16.mxu0 0
    %4871 = vmatpush1.bf16.msra.mxu0 0
    %4872 = vmatprep.subr.bf16.mxu0 0
    %4873 = vmatpush1.bf16.msra.mxu0 0
    %4874 = vmatprep.subr.bf16.mxu0 0
    %4875 = vmatpush1.bf16.msra.mxu0 0
    %4876 = vmatprep.subr.bf16.mxu0 0
    %4877 = vmatpush1.bf16.msra.mxu0 0
    %4878 = vmatprep.subr.bf16.mxu0 0
    %4879 = vmatpush1.bf16.msra.mxu0 0
    %4880 = vmatprep.mubr.bf16.mxu0 0
    %4881 = vmatmul.mubr.bf16.gmra.mrb[0].mxu0 %v4764
    %v4882 = vpop.f32.mrb[0].mxu0
    %v4883 = vadd.f32 0.0, %v4882
    %v4884 = vpop.f32.mrb[0].mxu0
    %v4885 = vadd.f32 0.0, %v4884
    %v4886 = vpop.f32.mrb[0].mxu0
    %v4887 = vadd.f32 0.0, %v4886
    %v4888 = vpop.f32.mrb[0].mxu0
    %v4889 = vadd.f32 0.0, %v4888
    %4890 = vmatprep.mubr.bf16.mxu0 0
    %4891 = vmatmul.mubr.bf16.gmra.mrb[0].mxu0 %v4767
    %v4892 = vpop.f32.mrb[0].mxu0
    %v4893 = vadd.f32 0.0, %v4892
    %v4894 = vpop.f32.mrb[0].mxu0
    %v4895 = vadd.f32 0.0, %v4894
    %v4896 = vpop.f32.mrb[0].mxu0
    %v4897 = vadd.f32 0.0, %v4896
    %v4898 = vpop.f32.mrb[0].mxu0
    %v4899 = vadd.f32 0.0, %v4898
    %4900 = vmatprep.mubr.bf16.mxu0 0
    %4901 = vmatmul.mubr.bf16.gmra.mrb[0].mxu0 %v4770
    %v4902 = vpop.f32.mrb[0].mxu0
    %v4903 = vadd.f32 0.0, %v4902
    %v4904 = vpop.f32.mrb[0].mxu0
    %v4905 = vadd.f32 0.0, %v4904
    %v4906 = vpop.f32.mrb[0].mxu0
    %v4907 = vadd.f32 0.0, %v4906
    %v4908 = vpop.f32.mrb[0].mxu0
    %v4909 = vadd.f32 0.0, %v4908
    %4910 = vmatprep.mubr.bf16.mxu0 0
    %4911 = vmatmul.mubr.bf16.gmra.mrb[0].mxu0 %v4773
    %v4912 = vpop.f32.mrb[0].mxu0
    %v4913 = vadd.f32 0.0, %v4912
    %v4914 = vpop.f32.mrb[0].mxu0
    %v4915 = vadd.f32 0.0, %v4914
    %v4916 = vpop.f32.mrb[0].mxu0
    %v4917 = vadd.f32 0.0, %v4916
    %v4918 = vpop.f32.mrb[0].mxu0
    %v4919 = vadd.f32 0.0, %v4918
    %4920 = vdwg.mxu0
    %4921 = vmatprep.subr.bf16.mxu0 %v4712
    %4922 = vmatpush1.bf16.msra.mxu0 %v4711
    %4923 = vmatprep.subr.bf16.mxu0 %v4719
    %4924 = vmatpush1.bf16.msra.mxu0 %v4718
    %4925 = vmatprep.subr.bf16.mxu0 %v4726
    %4926 = vmatpush1.bf16.msra.mxu0 %v4725
    %4927 = vmatprep.subr.bf16.mxu0 %v4733
    %4928 = vmatpush1.bf16.msra.mxu0 %v4732
    %4929 = vmatprep.subr.bf16.mxu0 0
    %4930 = vmatpush1.bf16.msra.mxu0 0
    %4931 = vmatprep.subr.bf16.mxu0 0
    %4932 = vmatpush1.bf16.msra.mxu0 0
    %4933 = vmatprep.subr.bf16.mxu0 0
    %4934 = vmatpush1.bf16.msra.mxu0 0
    %4935 = vmatprep.subr.bf16.mxu0 0
    %4936 = vmatpush1.bf16.msra.mxu0 0
    %4937 = vmatprep.subr.bf16.mxu0 0
    %4938 = vmatpush1.bf16.msra.mxu0 0
    %4939 = vmatprep.subr.bf16.mxu0 0
    %4940 = vmatpush1.bf16.msra.mxu0 0
    %4941 = vmatprep.subr.bf16.mxu0 0
    %4942 = vmatpush1.bf16.msra.mxu0 0
    %4943 = vmatprep.subr.bf16.mxu0 0
    %4944 = vmatpush1.bf16.msra.mxu0 0
    %4945 = vmatprep.subr.bf16.mxu0 0
    %4946 = vmatpush1.bf16.msra.mxu0 0
    %4947 = vmatprep.subr.bf16.mxu0 0
    %4948 = vmatpush1.bf16.msra.mxu0 0
    %4949 = vmatprep.subr.bf16.mxu0 0
    %4950 = vmatpush1.bf16.msra.mxu0 0
    %4951 = vmatprep.subr.bf16.mxu0 0
    %4952 = vmatpush1.bf16.msra.mxu0 0
    %4953 = vmatprep.mubr.bf16.mxu0 0
    %4954 = vmatmul.mubr.bf16.gmra.mrb[0].mxu0 %v4764
    %v4955 = vpop.f32.mrb[0].mxu0
    %v4956 = vadd.f32 0.0, %v4955
    %v4957 = vpop.f32.mrb[0].mxu0
    %v4958 = vadd.f32 0.0, %v4957
    %v4959 = vpop.f32.mrb[0].mxu0
    %v4960 = vadd.f32 0.0, %v4959
    %v4961 = vpop.f32.mrb[0].mxu0
    %v4962 = vadd.f32 0.0, %v4961
    %4963 = vmatprep.mubr.bf16.mxu0 0
    %4964 = vmatmul.mubr.bf16.gmra.mrb[0].mxu0 %v4767
    %v4965 = vpop.f32.mrb[0].mxu0
    %v4966 = vadd.f32 0.0, %v4965
    %v4967 = vpop.f32.mrb[0].mxu0
    %v4968 = vadd.f32 0.0, %v4967
    %v4969 = vpop.f32.mrb[0].mxu0
    %v4970 = vadd.f32 0.0, %v4969
    %v4971 = vpop.f32.mrb[0].mxu0
    %v4972 = vadd.f32 0.0, %v4971
    %4973 = vmatprep.mubr.bf16.mxu0 0
    %4974 = vmatmul.mubr.bf16.gmra.mrb[0].mxu0 %v4770
    %v4975 = vpop.f32.mrb[0].mxu0
    %v4976 = vadd.f32 0.0, %v4975
    %v4977 = vpop.f32.mrb[0].mxu0
    %v4978 = vadd.f32 0.0, %v4977
    %v4979 = vpop.f32.mrb[0].mxu0
    %v4980 = vadd.f32 0.0, %v4979
    %v4981 = vpop.f32.mrb[0].mxu0
    %v4982 = vadd.f32 0.0, %v4981
    %4983 = vmatprep.mubr.bf16.mxu0 0
    %4984 = vmatmul.mubr.bf16.gmra.mrb[0].mxu0 %v4773
    %v4985 = vpop.f32.mrb[0].mxu0
    %v4986 = vadd.f32 0.0, %v4985
    %v4987 = vpop.f32.mrb[0].mxu0
    %v4988 = vadd.f32 0.0, %v4987
    %v4989 = vpop.f32.mrb[0].mxu0
    %v4990 = vadd.f32 0.0, %v4989
    %v4991 = vpop.f32.mrb[0].mxu0
    %v4992 = vadd.f32 0.0, %v4991
    %4993 = vdwg.mxu0
    %4994 = vmatprep.subr.bf16.mxu0 0
    %4995 = vmatpush1.bf16.msra.mxu0 %v4713
    %4996 = vmatprep.subr.bf16.mxu0 0
    %4997 = vmatpush1.bf16.msra.mxu0 %v4720
    %4998 = vmatprep.subr.bf16.mxu0 0
    %4999 = vmatpush1.bf16.msra.mxu0 %v4727
    %5000 = vmatprep.subr.bf16.mxu0 0
    %5001 = vmatpush1.bf16.msra.mxu0 %v4734
    %5002 = vmatprep.subr.bf16.mxu0 0
    %5003 = vmatpush1.bf16.msra.mxu0 0
    %5004 = vmatprep.subr.bf16.mxu0 0
    %5005 = vmatpush1.bf16.msra.mxu0 0
    %5006 = vmatprep.subr.bf16.mxu0 0
    %5007 = vmatpush1.bf16.msra.mxu0 0
    %5008 = vmatprep.subr.bf16.mxu0 0
    %5009 = vmatpush1.bf16.msra.mxu0 0
    %5010 = vmatprep.subr.bf16.mxu0 0
    %5011 = vmatpush1.bf16.msra.mxu0 0
    %5012 = vmatprep.subr.bf16.mxu0 0
    %5013 = vmatpush1.bf16.msra.mxu0 0
    %5014 = vmatprep.subr.bf16.mxu0 0
    %5015 = vmatpush1.bf16.msra.mxu0 0
    %5016 = vmatprep.subr.bf16.mxu0 0
    %5017 = vmatpush1.bf16.msra.mxu0 0
    %5018 = vmatprep.subr.bf16.mxu0 0
    %5019 = vmatpush1.bf16.msra.mxu0 0
    %5020 = vmatprep.subr.bf16.mxu0 0
    %5021 = vmatpush1.bf16.msra.mxu0 0
    %5022 = vmatprep.subr.bf16.mxu0 0
    %5023 = vmatpush1.bf16.msra.mxu0 0
    %5024 = vmatprep.subr.bf16.mxu0 0
    %5025 = vmatpush1.bf16.msra.mxu0 0
    %5026 = vmatprep.mubr.bf16.mxu0 0
    %5027 = vmatmul.mubr.bf16.gmra.mrb[0].mxu0 %v4764
    %v5028 = vpop.f32.mrb[0].mxu0
    %v5029 = vadd.f32 0.0, %v5028
    %v5030 = vpop.f32.mrb[0].mxu0
    %v5031 = vpop.f32.mrb[0].mxu0
    %v5032 = vadd.f32 0.0, %v5031
    %v5033 = vpop.f32.mrb[0].mxu0
    %5034 = vmatprep.mubr.bf16.mxu0 0
    %5035 = vmatmul.mubr.bf16.gmra.mrb[0].mxu0 %v4767
    %v5036 = vpop.f32.mrb[0].mxu0
    %v5037 = vadd.f32 0.0, %v5036
    %v5038 = vpop.f32.mrb[0].mxu0
    %v5039 = vpop.f32.mrb[0].mxu0
    %v5040 = vadd.f32 0.0, %v5039
    %v5041 = vpop.f32.mrb[0].mxu0
    %5042 = vmatprep.mubr.bf16.mxu0 0
    %5043 = vmatmul.mubr.bf16.gmra.mrb[0].mxu0 %v4770
    %v5044 = vpop.f32.mrb[0].mxu0
    %v5045 = vadd.f32 0.0, %v5044
    %v5046 = vpop.f32.mrb[0].mxu0
    %v5047 = vpop.f32.mrb[0].mxu0
    %v5048 = vadd.f32 0.0, %v5047
    %v5049 = vpop.f32.mrb[0].mxu0
    %5050 = vmatprep.mubr.bf16.mxu0 0
    %5051 = vmatmul.mubr.bf16.gmra.mrb[0].mxu0 %v4773
    %v5052 = vpop.f32.mrb[0].mxu0
    %v5053 = vadd.f32 0.0, %v5052
    %v5054 = vpop.f32.mrb[0].mxu0
    %v5055 = vpop.f32.mrb[0].mxu0
    %v5056 = vadd.f32 0.0, %v5055
    %v5057 = vpop.f32.mrb[0].mxu0
    %5058 = vdwg.mxu0
    %v5059 = vpack.c.bf16 %v4814, %v4810
    %v5060 = vpack.c.bf16 %v4824, %v4820
    %v5061 = vpack.c.bf16 %v4834, %v4830
    %v5062 = vpack.c.bf16 %v4844, %v4840
    %v5063 = vpack.c.bf16 %v4816, %v4812
    %v5064 = vpack.c.bf16 %v4826, %v4822
    %v5065 = vpack.c.bf16 %v4836, %v4832
    %v5066 = vpack.c.bf16 %v4846, %v4842
    %v5067 = vpack.c.bf16 %v4887, %v4883
    %v5068 = vpack.c.bf16 %v4897, %v4893
    %v5069 = vpack.c.bf16 %v4907, %v4903
    %v5070 = vpack.c.bf16 %v4917, %v4913
    %v5071 = vpack.c.bf16 %v4889, %v4885
    %v5072 = vpack.c.bf16 %v4899, %v4895
    %v5073 = vpack.c.bf16 %v4909, %v4905
    %v5074 = vpack.c.bf16 %v4919, %v4915
    %v5075 = vpack.c.bf16 %v4960, %v4956
    %v5076 = vpack.c.bf16 %v4970, %v4966
    %v5077 = vpack.c.bf16 %v4980, %v4976
    %v5078 = vpack.c.bf16 %v4990, %v4986
    %v5079 = vpack.c.bf16 %v4962, %v4958
    %v5080 = vpack.c.bf16 %v4972, %v4968
    %v5081 = vpack.c.bf16 %v4982, %v4978
    %v5082 = vpack.c.bf16 %v4992, %v4988
    %v5083 = vpack.c.bf16 %v5032, %v5029
    %v5084 = vpack.c.bf16 %v5040, %v5037
    %v5085 = vpack.c.bf16 %v5048, %v5045
    %v5086 = vpack.c.bf16 %v5056, %v5053
    %s5087 = scalar_lea.vmem %s13, 512
    %v5088 = vld [vmem:[%s5087] sm:$0xff]
    %v5089 = vld [vmem:[%s5087 + $0x8] sm:$0xff]
    %v5090 = vld [vmem:[%s5087 + $0x10] sm:$0xff]
    %v5091 = vld [vmem:[%s5087 + $0x18] sm:$0xff]
    %5093 = vset.pattern.permute.xlu0 0
    %5094 = vperm.xlu0 %5093, %v5088
    %v5095 = vpop.permute.xlu0 %5094
    %5098 = vset.pattern.permute.xlu0 0
    %5099 = vperm.xlu0 %5098, %v5089
    %v5100 = vpop.permute.xlu0 %5099
    %5103 = vset.pattern.permute.xlu0 0
    %5104 = vperm.xlu0 %5103, %v5090
    %v5105 = vpop.permute.xlu0 %5104
    %5108 = vset.pattern.permute.xlu0 0
    %5109 = vperm.xlu0 %5108, %v5091
    %v5110 = vpop.permute.xlu0 %5109
    %v5120 = vunpack.c.l.b16 %v4611
    %v5121 = vunpack.c.h.b16 %v4611
    %v5122 = vunpack.c.l.b16 %v4612
    %v5123 = vunpack.c.h.b16 %v4612
    %v5124 = vunpack.c.l.b16 %v4613
    %v5125 = vunpack.c.h.b16 %v4613
    %v5126 = vunpack.c.l.b16 %v4614
    %v5127 = vunpack.c.h.b16 %v4614
    %v5128 = vunpack.c.l.b16 %v4615
    %v5129 = vunpack.c.h.b16 %v4615
    %v5130 = vunpack.c.l.b16 %v4616
    %v5131 = vunpack.c.h.b16 %v4616
    %v5132 = vunpack.c.l.b16 %v4617
    %v5133 = vunpack.c.h.b16 %v4617
    %v5134 = vunpack.c.l.b16 %v4618
    %v5135 = vunpack.c.h.b16 %v4618
    %v5136 = vpack.c.b16 %v5124, %v5120
    %v5137 = vpack.c.b16 %v5125, %v5121
    %v5138 = vpack.c.b16 %v5126, %v5122
    %v5139 = vpack.c.b16 %v5127, %v5123
    %v5140 = vpack.c.b16 %v5132, %v5128
    %v5141 = vpack.c.b16 %v5133, %v5129
    %v5142 = vpack.c.b16 %v5134, %v5130
    %v5143 = vpack.c.b16 %v5135, %v5131
    %v5151 = vsel %vm1967, %v5139, 0
    %v5154 = vsel %vm1967, %v5143, 0
    %5156 = vmatprep.subr.bf16.mxu0 0
    %5157 = vmatpush1.bf16.msra.mxu0 %v5059
    %5158 = vmatprep.subr.bf16.mxu0 0
    %5159 = vmatpush1.bf16.msra.mxu0 %v5060
    %5160 = vmatprep.subr.bf16.mxu0 0
    %5161 = vmatpush1.bf16.msra.mxu0 %v5061
    %5162 = vmatprep.subr.bf16.mxu0 0
    %5163 = vmatpush1.bf16.msra.mxu0 %v5062
    %5164 = vmatprep.subr.bf16.mxu0 0
    %5165 = vmatpush1.bf16.msra.mxu0 %v5063
    %5166 = vmatprep.subr.bf16.mxu0 0
    %5167 = vmatpush1.bf16.msra.mxu0 %v5064
    %5168 = vmatprep.subr.bf16.mxu0 0
    %5169 = vmatpush1.bf16.msra.mxu0 %v5065
    %5170 = vmatprep.subr.bf16.mxu0 0
    %5171 = vmatpush1.bf16.msra.mxu0 %v5066
    %5172 = vmatprep.subr.bf16.mxu0 0
    %5173 = vmatpush1.bf16.msra.mxu0 %v5067
    %5174 = vmatprep.subr.bf16.mxu0 0
    %5175 = vmatpush1.bf16.msra.mxu0 %v5068
    %5176 = vmatprep.subr.bf16.mxu0 0
    %5177 = vmatpush1.bf16.msra.mxu0 %v5069
    %5178 = vmatprep.subr.bf16.mxu0 0
    %5179 = vmatpush1.bf16.msra.mxu0 %v5070
    %5180 = vmatprep.subr.bf16.mxu0 0
    %5181 = vmatpush1.bf16.msra.mxu0 %v5071
    %5182 = vmatprep.subr.bf16.mxu0 0
    %5183 = vmatpush1.bf16.msra.mxu0 %v5072
    %5184 = vmatprep.subr.bf16.mxu0 0
    %5185 = vmatpush1.bf16.msra.mxu0 %v5073
    %5186 = vmatprep.subr.bf16.mxu0 0
    %5187 = vmatpush1.bf16.msra.mxu0 %v5074
    %5188 = vmatprep.mubr.bf16.mxu0 %v5137
    %5189 = vmatmul.mubr.bf16.gmra.mrb[0].mxu0 %v5136
    %v5190 = vpop.f32.mrb[0].mxu0
    %v5191 = vadd.f32 %v5095, %v5190
    %v5192 = vpop.f32.mrb[0].mxu0
    %v5193 = vpop.f32.mrb[0].mxu0
    %v5194 = vadd.f32 %v5100, %v5193
    %v5195 = vpop.f32.mrb[0].mxu0
    %5196 = vmatprep.mubr.bf16.mxu0 %v5141
    %5197 = vmatmul.mubr.bf16.gmra.mrb[0].mxu0 %v5140
    %v5198 = vpop.f32.mrb[0].mxu0
    %v5199 = vadd.f32 %v5105, %v5198
    %v5200 = vpop.f32.mrb[0].mxu0
    %v5201 = vpop.f32.mrb[0].mxu0
    %v5202 = vadd.f32 %v5110, %v5201
    %v5203 = vpop.f32.mrb[0].mxu0
    %5204 = vdwg.mxu0
    %5205 = vmatprep.subr.bf16.mxu0 0
    %5206 = vmatpush1.bf16.msra.mxu0 %v5075
    %5207 = vmatprep.subr.bf16.mxu0 0
    %5208 = vmatpush1.bf16.msra.mxu0 %v5076
    %5209 = vmatprep.subr.bf16.mxu0 0
    %5210 = vmatpush1.bf16.msra.mxu0 %v5077
    %5211 = vmatprep.subr.bf16.mxu0 0
    %5212 = vmatpush1.bf16.msra.mxu0 %v5078
    %5213 = vmatprep.subr.bf16.mxu0 0
    %5214 = vmatpush1.bf16.msra.mxu0 %v5079
    %5215 = vmatprep.subr.bf16.mxu0 0
    %5216 = vmatpush1.bf16.msra.mxu0 %v5080
    %5217 = vmatprep.subr.bf16.mxu0 0
    %5218 = vmatpush1.bf16.msra.mxu0 %v5081
    %5219 = vmatprep.subr.bf16.mxu0 0
    %5220 = vmatpush1.bf16.msra.mxu0 %v5082
    %5221 = vmatprep.subr.bf16.mxu0 0
    %5222 = vmatpush1.bf16.msra.mxu0 %v5083
    %5223 = vmatprep.subr.bf16.mxu0 0
    %5224 = vmatpush1.bf16.msra.mxu0 %v5084
    %5225 = vmatprep.subr.bf16.mxu0 0
    %5226 = vmatpush1.bf16.msra.mxu0 %v5085
    %5227 = vmatprep.subr.bf16.mxu0 0
    %5228 = vmatpush1.bf16.msra.mxu0 %v5086
    %5229 = vmatprep.subr.bf16.mxu0 0
    %5230 = vmatpush1.bf16.msra.mxu0 0
    %5231 = vmatprep.subr.bf16.mxu0 0
    %5232 = vmatpush1.bf16.msra.mxu0 0
    %5233 = vmatprep.subr.bf16.mxu0 0
    %5234 = vmatpush1.bf16.msra.mxu0 0
    %5235 = vmatprep.subr.bf16.mxu0 0
    %5236 = vmatpush1.bf16.msra.mxu0 0
    %5237 = vmatprep.mubr.bf16.mxu0 %v5151
    %5238 = vmatmul.mubr.bf16.gmra.mrb[0].mxu0 %v5138
    %v5239 = vpop.f32.mrb[0].mxu0
    %v5240 = vadd.f32 %v5191, %v5239
    %v5241 = vpop.f32.mrb[0].mxu0
    %v5242 = vpop.f32.mrb[0].mxu0
    %v5243 = vadd.f32 %v5194, %v5242
    %v5244 = vpop.f32.mrb[0].mxu0
    %5245 = vmatprep.mubr.bf16.mxu0 %v5154
    %5246 = vmatmul.mubr.bf16.gmra.mrb[0].mxu0 %v5142
    %v5247 = vpop.f32.mrb[0].mxu0
    %v5248 = vadd.f32 %v5199, %v5247
    %v5249 = vpop.f32.mrb[0].mxu0
    %v5250 = vpop.f32.mrb[0].mxu0
    %v5251 = vadd.f32 %v5202, %v5250
    %v5252 = vpop.f32.mrb[0].mxu0
    %5253 = vdwg.mxu0
    %v5254 = vmax.f32 %v5240, 0.0
    %v5255 = vmax.f32 %v5243, 0.0
    %v5256 = vmax.f32 %v5248, 0.0
    %v5257 = vmax.f32 %v5251, 0.0
    %5258 = vadd.xlane.f32.xlu0 %v5254
    %v5259 = vpop.xlane.xlu0 %5258
    %5260 = vadd.xlane.f32.xlu0 %v5255
    %v5261 = vpop.xlane.xlu0 %5260
    %5262 = vadd.xlane.f32.xlu0 %v5256
    %v5263 = vpop.xlane.xlu0 %5262
    %5264 = vadd.xlane.f32.xlu0 %v5257
    %v5265 = vpop.xlane.xlu0 %5264
    %v5266 = vmul.f32 %v5259, 0.0078125
    %v5267 = vmul.f32 %v5261, 0.0078125
    %v5268 = vmul.f32 %v5263, 0.0078125
    %v5269 = vmul.f32 %v5265, 0.0078125
    %v5270 = vmul.f32 %v5254, %v5254
    %v5271 = vmul.f32 %v5255, %v5255
    %v5272 = vmul.f32 %v5256, %v5256
    %v5273 = vmul.f32 %v5257, %v5257
    %5274 = vadd.xlane.f32.xlu0 %v5270
    %v5275 = vpop.xlane.xlu0 %5274
    %5276 = vadd.xlane.f32.xlu0 %v5271
    %v5277 = vpop.xlane.xlu0 %5276
    %5278 = vadd.xlane.f32.xlu0 %v5272
    %v5279 = vpop.xlane.xlu0 %5278
    %5280 = vadd.xlane.f32.xlu0 %v5273
    %v5281 = vpop.xlane.xlu0 %5280
    %v5282 = vmul.f32 %v5275, 0.0078125
    %v5283 = vmul.f32 %v5277, 0.0078125
    %v5284 = vmul.f32 %v5279, 0.0078125
    %v5285 = vmul.f32 %v5281, 0.0078125
    %v5286 = vmul.f32 %v5266, %v5266
    %v5287 = vmul.f32 %v5267, %v5267
    %v5288 = vmul.f32 %v5268, %v5268
    %v5289 = vmul.f32 %v5269, %v5269
    %v5290 = vsub.f32 %v5282, %v5286
    %v5291 = vsub.f32 %v5283, %v5287
    %v5292 = vsub.f32 %v5284, %v5288
    %v5293 = vsub.f32 %v5285, %v5289
    %v5294 = vmax.f32 %v5290, 0.0
    %v5295 = vmax.f32 %v5291, 0.0
    %v5296 = vmax.f32 %v5292, 0.0
    %v5297 = vmax.f32 %v5293, 0.0
    %v5298 = vadd.f32 %v5294, 1e-05
    %v5299 = vadd.f32 %v5295, 1e-05
    %v5300 = vadd.f32 %v5296, 1e-05
    %v5301 = vadd.f32 %v5297, 1e-05
    %v5302 = vrsqrt.pop %v5298
    %v5303 = vrsqrt.pop %v5299
    %v5304 = vrsqrt.pop %v5300
    %v5305 = vrsqrt.pop %v5301
    %v5306 = vmul.f32 %v5088, %v5302
    %v5307 = vmul.f32 %v5089, %v5303
    %v5308 = vmul.f32 %v5090, %v5304
    %v5309 = vmul.f32 %v5091, %v5305
    %v5310 = vmul.f32 %v5266, %v5306
    %v5311 = vmul.f32 %v5267, %v5307
    %v5312 = vmul.f32 %v5268, %v5308
    %v5313 = vmul.f32 %v5269, %v5309
    %5318 = vrot.lane.b32.xlu0 %v5310, 1
    %v5319 = vpop.permute.xlu0 %5318
    %5320 = vrot.lane.b32.xlu0 %v5311, 1
    %v5321 = vpop.permute.xlu0 %5320
    %5322 = vrot.lane.b32.xlu0 %v5312, 1
    %v5323 = vpop.permute.xlu0 %5322
    %5324 = vrot.lane.b32.xlu0 %v5313, 1
    %v5325 = vpop.permute.xlu0 %5324
    %v5330 = vsub.f32 %v5088, %v5319
    %v5331 = vsub.f32 %v5089, %v5321
    %v5332 = vsub.f32 %v5090, %v5323
    %v5333 = vsub.f32 %v5091, %v5325
    %5335 = vset.pattern.permute.xlu0 1
    %5336 = vperm.xlu0 %5335, %v5306
    %v5337 = vpop.permute.xlu0 %5336
    %5340 = vset.pattern.permute.xlu0 1
    %5341 = vperm.xlu0 %5340, %v5307
    %v5342 = vpop.permute.xlu0 %5341
    %5345 = vset.pattern.permute.xlu0 1
    %5346 = vperm.xlu0 %5345, %v5308
    %v5347 = vpop.permute.xlu0 %5346
    %5350 = vset.pattern.permute.xlu0 1
    %5351 = vperm.xlu0 %5350, %v5309
    %v5352 = vpop.permute.xlu0 %5351
    %v5354 = vmul.f32 %v5254, %v5337
    %v5355 = vmul.f32 %v5255, %v5342
    %v5356 = vmul.f32 %v5256, %v5347
    %v5357 = vmul.f32 %v5257, %v5352
    %5359 = vset.pattern.permute.xlu0 2
    %5360 = vperm.xlu0 %5359, %v5330
    %v5361 = vpop.permute.xlu0 %5360
    %5364 = vset.pattern.permute.xlu0 2
    %5365 = vperm.xlu0 %5364, %v5331
    %v5366 = vpop.permute.xlu0 %5365
    %5369 = vset.pattern.permute.xlu0 2
    %5370 = vperm.xlu0 %5369, %v5332
    %v5371 = vpop.permute.xlu0 %5370
    %5374 = vset.pattern.permute.xlu0 2
    %5375 = vperm.xlu0 %5374, %v5333
    %v5376 = vpop.permute.xlu0 %5375
    %v5378 = vadd.f32 %v5354, %v5361
    %v5379 = vadd.f32 %v5355, %v5366
    %v5380 = vadd.f32 %v5356, %v5371
    %v5381 = vadd.f32 %v5357, %v5376
    %v5382 = vpack.c.bf16 %v5379, %v5378
    %v5383 = vpack.c.bf16 %v5381, %v5380
    %v5384 = vld [vmem:[%s6] sm:$0xff]
    %v5385 = vld [vmem:[%s6 + $0x8] sm:$0xff]
    %v5386 = vld [vmem:[%s6 + $0x10] sm:$0xff]
    %v5387 = vld [vmem:[%s6 + $0x18] sm:$0xff]
    %v5388 = vld [vmem:[%s6 + $0x20] sm:$0xff]
    %v5389 = vld [vmem:[%s6 + $0x28] sm:$0xff]
    %v5390 = vld [vmem:[%s6 + $0x30] sm:$0xff]
    %v5391 = vld [vmem:[%s6 + $0x38] sm:$0xff]
    %v5392 = vld [vmem:[%s6 + $0x40] sm:$0xff]
    %v5393 = vld [vmem:[%s6 + $0x48] sm:$0xff]
    %v5394 = vld [vmem:[%s6 + $0x50] sm:$0xff]
    %v5395 = vld [vmem:[%s6 + $0x58] sm:$0xff]
    %v5396 = vld [vmem:[%s6 + $0x60] sm:$0xff]
    %v5397 = vld [vmem:[%s6 + $0x68] sm:$0xff]
    %v5398 = vld [vmem:[%s6 + $0x70] sm:$0xff]
    %v5399 = vld [vmem:[%s6 + $0x78] sm:$0xff]
    %v5400 = vld [vmem:[%s6 + $0x80] sm:$0xff]
    %v5401 = vld [vmem:[%s6 + $0x88] sm:$0xff]
    %v5402 = vld [vmem:[%s6 + $0x90] sm:$0xff]
    %v5403 = vld [vmem:[%s6 + $0x98] sm:$0xff]
    %v5404 = vld [vmem:[%s6 + $0xa0] sm:$0xff]
    %v5405 = vld [vmem:[%s6 + $0xa8] sm:$0xff]
    %v5406 = vld [vmem:[%s6 + $0xb0] sm:$0xff]
    %v5407 = vld [vmem:[%s6 + $0xb8] sm:$0xff]
    %v5408 = vld [vmem:[%s6 + $0xc0] sm:$0xff]
    %v5409 = vld [vmem:[%s6 + $0xc8] sm:$0xff]
    %v5410 = vld [vmem:[%s6 + $0xd0] sm:$0xff]
    %v5411 = vld [vmem:[%s6 + $0xd8] sm:$0xff]
    %v5412 = vld [vmem:[%s6 + $0xe0] sm:$0xff]
    %v5413 = vld [vmem:[%s6 + $0xe8] sm:$0xff]
    %v5414 = vld [vmem:[%s6 + $0xf0] sm:$0xff]
    %v5415 = vld [vmem:[%s6 + $0xf8] sm:$0xff]
    %v5416 = vld [vmem:[%s6 + $0x100] sm:$0xff]
    %v5417 = vld [vmem:[%s6 + $0x108] sm:$0xff]
    %v5418 = vld [vmem:[%s6 + $0x110] sm:$0xff]
    %v5419 = vld [vmem:[%s6 + $0x118] sm:$0xff]
    %v5420 = vld [vmem:[%s6 + $0x120] sm:$0xff]
    %v5421 = vld [vmem:[%s6 + $0x128] sm:$0xff]
    %v5422 = vld [vmem:[%s6 + $0x130] sm:$0xff]
    %v5423 = vld [vmem:[%s6 + $0x138] sm:$0xff]
    %v5424 = vld [vmem:[%s6 + $0x140] sm:$0xff]
    %v5425 = vld [vmem:[%s6 + $0x148] sm:$0xff]
    %v5426 = vld [vmem:[%s6 + $0x150] sm:$0xff]
    %v5427 = vld [vmem:[%s6 + $0x158] sm:$0xff]
    %v5428 = vld [vmem:[%s6 + $0x160] sm:$0xff]
    %v5429 = vld [vmem:[%s6 + $0x168] sm:$0xff]
    %v5430 = vld [vmem:[%s6 + $0x170] sm:$0xff]
    %v5431 = vld [vmem:[%s6 + $0x178] sm:$0xff]
    %v5432 = vld [vmem:[%s6 + $0x180] sm:$0xff]
    %v5433 = vld [vmem:[%s6 + $0x188] sm:$0xff]
    %v5434 = vld [vmem:[%s6 + $0x190] sm:$0xff]
    %v5435 = vld [vmem:[%s6 + $0x198] sm:$0xff]
    %v5436 = vld [vmem:[%s6 + $0x1a0] sm:$0xff]
    %v5437 = vld [vmem:[%s6 + $0x1a8] sm:$0xff]
    %v5438 = vld [vmem:[%s6 + $0x1b0] sm:$0xff]
    %v5439 = vld [vmem:[%s6 + $0x1b8] sm:$0xff]
    %v5440 = vld [vmem:[%s6 + $0x1c0] sm:$0xff]
    %v5441 = vld [vmem:[%s6 + $0x1c8] sm:$0xff]
    %v5442 = vld [vmem:[%s6 + $0x1d0] sm:$0xff]
    %v5443 = vld [vmem:[%s6 + $0x1d8] sm:$0xff]
    %v5444 = vld [vmem:[%s6 + $0x1e0] sm:$0xff]
    %v5445 = vld [vmem:[%s6 + $0x1e8] sm:$0xff]
    %v5446 = vld [vmem:[%s6 + $0x1f0] sm:$0xff]
    %v5447 = vld [vmem:[%s6 + $0x1f8] sm:$0xff]
    %v5448 = vld [vmem:[%s6 + $0x200] sm:$0xff]
    %v5449 = vld [vmem:[%s6 + $0x208] sm:$0xff]
    %v5450 = vld [vmem:[%s6 + $0x210] sm:$0xff]
    %v5451 = vld [vmem:[%s6 + $0x218] sm:$0xff]
    %v5452 = vld [vmem:[%s6 + $0x220] sm:$0xff]
    %v5453 = vld [vmem:[%s6 + $0x228] sm:$0xff]
    %v5454 = vld [vmem:[%s6 + $0x230] sm:$0xff]
    %v5455 = vld [vmem:[%s6 + $0x238] sm:$0xff]
    %v5456 = vld [vmem:[%s6 + $0x240] sm:$0xff]
    %v5457 = vld [vmem:[%s6 + $0x248] sm:$0xff]
    %v5458 = vld [vmem:[%s6 + $0x250] sm:$0xff]
    %v5459 = vld [vmem:[%s6 + $0x258] sm:$0xff]
    %v5460 = vld [vmem:[%s6 + $0x260] sm:$0xff]
    %v5461 = vld [vmem:[%s6 + $0x268] sm:$0xff]
    %v5462 = vld [vmem:[%s6 + $0x270] sm:$0xff]
    %v5463 = vld [vmem:[%s6 + $0x278] sm:$0xff]
    %v5464 = vld [vmem:[%s6 + $0x280] sm:$0xff]
    %v5465 = vld [vmem:[%s6 + $0x288] sm:$0xff]
    %v5466 = vld [vmem:[%s6 + $0x290] sm:$0xff]
    %v5467 = vld [vmem:[%s6 + $0x298] sm:$0xff]
    %v5468 = vld [vmem:[%s6 + $0x2a0] sm:$0xff]
    %v5469 = vld [vmem:[%s6 + $0x2a8] sm:$0xff]
    %v5470 = vld [vmem:[%s6 + $0x2b0] sm:$0xff]
    %v5471 = vld [vmem:[%s6 + $0x2b8] sm:$0xff]
    %v5472 = vld [vmem:[%s6 + $0x2c0] sm:$0xff]
    %v5473 = vld [vmem:[%s6 + $0x2c8] sm:$0xff]
    %v5474 = vld [vmem:[%s6 + $0x2d0] sm:$0xff]
    %v5475 = vld [vmem:[%s6 + $0x2d8] sm:$0xff]
    %v5476 = vld [vmem:[%s6 + $0x2e0] sm:$0xff]
    %v5477 = vld [vmem:[%s6 + $0x2e8] sm:$0xff]
    %v5478 = vld [vmem:[%s6 + $0x2f0] sm:$0xff]
    %v5479 = vld [vmem:[%s6 + $0x2f8] sm:$0xff]
    %v5480 = vld [vmem:[%s6 + $0x300] sm:$0xff]
    %v5481 = vld [vmem:[%s6 + $0x308] sm:$0xff]
    %v5482 = vld [vmem:[%s6 + $0x310] sm:$0xff]
    %v5483 = vld [vmem:[%s6 + $0x318] sm:$0xff]
    %v5484 = vld [vmem:[%s6 + $0x320] sm:$0xff]
    %v5485 = vld [vmem:[%s6 + $0x328] sm:$0xff]
    %v5486 = vld [vmem:[%s6 + $0x330] sm:$0xff]
    %v5487 = vld [vmem:[%s6 + $0x338] sm:$0xff]
    %v5488 = vld [vmem:[%s6 + $0x340] sm:$0xff]
    %v5489 = vld [vmem:[%s6 + $0x348] sm:$0xff]
    %v5490 = vld [vmem:[%s6 + $0x350] sm:$0xff]
    %v5491 = vld [vmem:[%s6 + $0x358] sm:$0xff]
    %v5492 = vld [vmem:[%s6 + $0x360] sm:$0xff]
    %v5493 = vld [vmem:[%s6 + $0x368] sm:$0xff]
    %v5494 = vld [vmem:[%s6 + $0x370] sm:$0xff]
    %v5495 = vld [vmem:[%s6 + $0x378] sm:$0xff]
    %v5496 = vld [vmem:[%s6 + $0x380] sm:$0xff]
    %v5497 = vld [vmem:[%s6 + $0x388] sm:$0xff]
    %v5498 = vld [vmem:[%s6 + $0x390] sm:$0xff]
    %v5499 = vld [vmem:[%s6 + $0x398] sm:$0xff]
    %v5500 = vld [vmem:[%s6 + $0x3a0] sm:$0xff]
    %v5501 = vld [vmem:[%s6 + $0x3a8] sm:$0xff]
    %v5502 = vld [vmem:[%s6 + $0x3b0] sm:$0xff]
    %v5503 = vld [vmem:[%s6 + $0x3b8] sm:$0xff]
    %v5504 = vld [vmem:[%s6 + $0x3c0] sm:$0xff]
    %v5505 = vld [vmem:[%s6 + $0x3c8] sm:$0xff]
    %v5506 = vld [vmem:[%s6 + $0x3d0] sm:$0xff]
    %v5507 = vld [vmem:[%s6 + $0x3d8] sm:$0xff]
    %v5508 = vld [vmem:[%s6 + $0x3e0] sm:$0xff]
    %v5509 = vld [vmem:[%s6 + $0x3e8] sm:$0xff]
    %v5510 = vld [vmem:[%s6 + $0x3f0] sm:$0xff]
    %v5511 = vld [vmem:[%s6 + $0x3f8] sm:$0xff]
    %v5512 = vld [vmem:[%s6 + $0x400] sm:$0xff]
    %v5513 = vld [vmem:[%s6 + $0x408] sm:$0xff]
    %v5514 = vld [vmem:[%s6 + $0x410] sm:$0xff]
    %v5515 = vld [vmem:[%s6 + $0x418] sm:$0xff]
    %v5516 = vld [vmem:[%s6 + $0x420] sm:$0xff]
    %v5517 = vld [vmem:[%s6 + $0x428] sm:$0xff]
    %v5518 = vld [vmem:[%s6 + $0x430] sm:$0xff]
    %v5519 = vld [vmem:[%s6 + $0x438] sm:$0xff]
    %v5520 = vld [vmem:[%s6 + $0x440] sm:$0xff]
    %v5521 = vld [vmem:[%s6 + $0x448] sm:$0xff]
    %v5522 = vld [vmem:[%s6 + $0x450] sm:$0xff]
    %v5523 = vld [vmem:[%s6 + $0x458] sm:$0xff]
    %v5524 = vld [vmem:[%s6 + $0x460] sm:$0xff]
    %v5525 = vld [vmem:[%s6 + $0x468] sm:$0xff]
    %v5526 = vld [vmem:[%s6 + $0x470] sm:$0xff]
    %v5527 = vld [vmem:[%s6 + $0x478] sm:$0xff]
    %v5528 = vld [vmem:[%s12] sm:$0x7]
    %v5673 = vunpack.c.l.b16 %v5384
    %v5674 = vunpack.c.h.b16 %v5384
    %v5675 = vunpack.c.l.b16 %v5385
    %v5676 = vunpack.c.h.b16 %v5385
    %v5677 = vunpack.c.l.b16 %v5386
    %v5678 = vunpack.c.h.b16 %v5386
    %v5679 = vunpack.c.l.b16 %v5387
    %v5680 = vunpack.c.h.b16 %v5387
    %v5681 = vunpack.c.l.b16 %v5388
    %v5682 = vunpack.c.h.b16 %v5388
    %v5683 = vunpack.c.l.b16 %v5389
    %v5684 = vunpack.c.h.b16 %v5389
    %v5685 = vunpack.c.l.b16 %v5390
    %v5686 = vunpack.c.h.b16 %v5390
    %v5687 = vunpack.c.l.b16 %v5391
    %v5688 = vunpack.c.h.b16 %v5391
    %v5689 = vunpack.c.l.b16 %v5392
    %v5690 = vunpack.c.h.b16 %v5392
    %v5691 = vunpack.c.l.b16 %v5393
    %v5692 = vunpack.c.h.b16 %v5393
    %v5693 = vunpack.c.l.b16 %v5394
    %v5694 = vunpack.c.h.b16 %v5394
    %v5695 = vunpack.c.l.b16 %v5395
    %v5696 = vunpack.c.h.b16 %v5395
    %v5697 = vunpack.c.l.b16 %v5396
    %v5698 = vunpack.c.h.b16 %v5396
    %v5699 = vunpack.c.l.b16 %v5397
    %v5700 = vunpack.c.h.b16 %v5397
    %v5701 = vunpack.c.l.b16 %v5398
    %v5702 = vunpack.c.h.b16 %v5398
    %v5703 = vunpack.c.l.b16 %v5399
    %v5704 = vunpack.c.h.b16 %v5399
    %v5705 = vunpack.c.l.b16 %v5400
    %v5706 = vunpack.c.h.b16 %v5400
    %v5707 = vunpack.c.l.b16 %v5401
    %v5708 = vunpack.c.h.b16 %v5401
    %v5709 = vunpack.c.l.b16 %v5402
    %v5710 = vunpack.c.h.b16 %v5402
    %v5711 = vunpack.c.l.b16 %v5403
    %v5712 = vunpack.c.h.b16 %v5403
    %v5713 = vunpack.c.l.b16 %v5404
    %v5714 = vunpack.c.h.b16 %v5404
    %v5715 = vunpack.c.l.b16 %v5405
    %v5716 = vunpack.c.h.b16 %v5405
    %v5717 = vunpack.c.l.b16 %v5406
    %v5718 = vunpack.c.h.b16 %v5406
    %v5719 = vunpack.c.l.b16 %v5407
    %v5720 = vunpack.c.h.b16 %v5407
    %v5721 = vunpack.c.l.b16 %v5408
    %v5722 = vunpack.c.h.b16 %v5408
    %v5723 = vunpack.c.l.b16 %v5409
    %v5724 = vunpack.c.h.b16 %v5409
    %v5725 = vunpack.c.l.b16 %v5410
    %v5726 = vunpack.c.h.b16 %v5410
    %v5727 = vunpack.c.l.b16 %v5411
    %v5728 = vunpack.c.h.b16 %v5411
    %v5729 = vunpack.c.l.b16 %v5412
    %v5730 = vunpack.c.h.b16 %v5412
    %v5731 = vunpack.c.l.b16 %v5413
    %v5732 = vunpack.c.h.b16 %v5413
    %v5733 = vunpack.c.l.b16 %v5414
    %v5734 = vunpack.c.h.b16 %v5414
    %v5735 = vunpack.c.l.b16 %v5415
    %v5736 = vunpack.c.h.b16 %v5415
    %v5737 = vunpack.c.l.b16 %v5416
    %v5738 = vunpack.c.h.b16 %v5416
    %v5739 = vunpack.c.l.b16 %v5417
    %v5740 = vunpack.c.h.b16 %v5417
    %v5741 = vunpack.c.l.b16 %v5418
    %v5742 = vunpack.c.h.b16 %v5418
    %v5743 = vunpack.c.l.b16 %v5419
    %v5744 = vunpack.c.h.b16 %v5419
    %v5745 = vunpack.c.l.b16 %v5420
    %v5746 = vunpack.c.h.b16 %v5420
    %v5747 = vunpack.c.l.b16 %v5421
    %v5748 = vunpack.c.h.b16 %v5421
    %v5749 = vunpack.c.l.b16 %v5422
    %v5750 = vunpack.c.h.b16 %v5422
    %v5751 = vunpack.c.l.b16 %v5423
    %v5752 = vunpack.c.h.b16 %v5423
    %v5753 = vunpack.c.l.b16 %v5424
    %v5754 = vunpack.c.h.b16 %v5424
    %v5755 = vunpack.c.l.b16 %v5425
    %v5756 = vunpack.c.h.b16 %v5425
    %v5757 = vunpack.c.l.b16 %v5426
    %v5758 = vunpack.c.h.b16 %v5426
    %v5759 = vunpack.c.l.b16 %v5427
    %v5760 = vunpack.c.h.b16 %v5427
    %v5761 = vunpack.c.l.b16 %v5428
    %v5762 = vunpack.c.h.b16 %v5428
    %v5763 = vunpack.c.l.b16 %v5429
    %v5764 = vunpack.c.h.b16 %v5429
    %v5765 = vunpack.c.l.b16 %v5430
    %v5766 = vunpack.c.h.b16 %v5430
    %v5767 = vunpack.c.l.b16 %v5431
    %v5768 = vunpack.c.h.b16 %v5431
    %v5769 = vunpack.c.l.b16 %v5432
    %v5770 = vunpack.c.h.b16 %v5432
    %v5771 = vunpack.c.l.b16 %v5433
    %v5772 = vunpack.c.h.b16 %v5433
    %v5773 = vunpack.c.l.b16 %v5434
    %v5774 = vunpack.c.h.b16 %v5434
    %v5775 = vunpack.c.l.b16 %v5435
    %v5776 = vunpack.c.h.b16 %v5435
    %v5777 = vunpack.c.l.b16 %v5436
    %v5778 = vunpack.c.h.b16 %v5436
    %v5779 = vunpack.c.l.b16 %v5437
    %v5780 = vunpack.c.h.b16 %v5437
    %v5781 = vunpack.c.l.b16 %v5438
    %v5782 = vunpack.c.h.b16 %v5438
    %v5783 = vunpack.c.l.b16 %v5439
    %v5784 = vunpack.c.h.b16 %v5439
    %v5785 = vunpack.c.l.b16 %v5440
    %v5786 = vunpack.c.h.b16 %v5440
    %v5787 = vunpack.c.l.b16 %v5441
    %v5788 = vunpack.c.h.b16 %v5441
    %v5789 = vunpack.c.l.b16 %v5442
    %v5790 = vunpack.c.h.b16 %v5442
    %v5791 = vunpack.c.l.b16 %v5443
    %v5792 = vunpack.c.h.b16 %v5443
    %v5793 = vunpack.c.l.b16 %v5444
    %v5794 = vunpack.c.h.b16 %v5444
    %v5795 = vunpack.c.l.b16 %v5445
    %v5796 = vunpack.c.h.b16 %v5445
    %v5797 = vunpack.c.l.b16 %v5446
    %v5798 = vunpack.c.h.b16 %v5446
    %v5799 = vunpack.c.l.b16 %v5447
    %v5800 = vunpack.c.h.b16 %v5447
    %v5801 = vunpack.c.l.b16 %v5448
    %v5802 = vunpack.c.h.b16 %v5448
    %v5803 = vunpack.c.l.b16 %v5449
    %v5804 = vunpack.c.h.b16 %v5449
    %v5805 = vunpack.c.l.b16 %v5450
    %v5806 = vunpack.c.h.b16 %v5450
    %v5807 = vunpack.c.l.b16 %v5451
    %v5808 = vunpack.c.h.b16 %v5451
    %v5809 = vunpack.c.l.b16 %v5452
    %v5810 = vunpack.c.h.b16 %v5452
    %v5811 = vunpack.c.l.b16 %v5453
    %v5812 = vunpack.c.h.b16 %v5453
    %v5813 = vunpack.c.l.b16 %v5454
    %v5814 = vunpack.c.h.b16 %v5454
    %v5815 = vunpack.c.l.b16 %v5455
    %v5816 = vunpack.c.h.b16 %v5455
    %v5817 = vunpack.c.l.b16 %v5456
    %v5818 = vunpack.c.h.b16 %v5456
    %v5819 = vunpack.c.l.b16 %v5457
    %v5820 = vunpack.c.h.b16 %v5457
    %v5821 = vunpack.c.l.b16 %v5458
    %v5822 = vunpack.c.h.b16 %v5458
    %v5823 = vunpack.c.l.b16 %v5459
    %v5824 = vunpack.c.h.b16 %v5459
    %v5825 = vunpack.c.l.b16 %v5460
    %v5826 = vunpack.c.h.b16 %v5460
    %v5827 = vunpack.c.l.b16 %v5461
    %v5828 = vunpack.c.h.b16 %v5461
    %v5829 = vunpack.c.l.b16 %v5462
    %v5830 = vunpack.c.h.b16 %v5462
    %v5831 = vunpack.c.l.b16 %v5463
    %v5832 = vunpack.c.h.b16 %v5463
    %v5833 = vunpack.c.l.b16 %v5464
    %v5834 = vunpack.c.h.b16 %v5464
    %v5835 = vunpack.c.l.b16 %v5465
    %v5836 = vunpack.c.h.b16 %v5465
    %v5837 = vunpack.c.l.b16 %v5466
    %v5838 = vunpack.c.h.b16 %v5466
    %v5839 = vunpack.c.l.b16 %v5467
    %v5840 = vunpack.c.h.b16 %v5467
    %v5841 = vunpack.c.l.b16 %v5468
    %v5842 = vunpack.c.h.b16 %v5468
    %v5843 = vunpack.c.l.b16 %v5469
    %v5844 = vunpack.c.h.b16 %v5469
    %v5845 = vunpack.c.l.b16 %v5470
    %v5846 = vunpack.c.h.b16 %v5470
    %v5847 = vunpack.c.l.b16 %v5471
    %v5848 = vunpack.c.h.b16 %v5471
    %v5849 = vunpack.c.l.b16 %v5472
    %v5850 = vunpack.c.h.b16 %v5472
    %v5851 = vunpack.c.l.b16 %v5473
    %v5852 = vunpack.c.h.b16 %v5473
    %v5853 = vunpack.c.l.b16 %v5474
    %v5854 = vunpack.c.h.b16 %v5474
    %v5855 = vunpack.c.l.b16 %v5475
    %v5856 = vunpack.c.h.b16 %v5475
    %v5857 = vunpack.c.l.b16 %v5476
    %v5858 = vunpack.c.h.b16 %v5476
    %v5859 = vunpack.c.l.b16 %v5477
    %v5860 = vunpack.c.h.b16 %v5477
    %v5861 = vunpack.c.l.b16 %v5478
    %v5862 = vunpack.c.h.b16 %v5478
    %v5863 = vunpack.c.l.b16 %v5479
    %v5864 = vunpack.c.h.b16 %v5479
    %v5865 = vunpack.c.l.b16 %v5480
    %v5866 = vunpack.c.h.b16 %v5480
    %v5867 = vunpack.c.l.b16 %v5481
    %v5868 = vunpack.c.h.b16 %v5481
    %v5869 = vunpack.c.l.b16 %v5482
    %v5870 = vunpack.c.h.b16 %v5482
    %v5871 = vunpack.c.l.b16 %v5483
    %v5872 = vunpack.c.h.b16 %v5483
    %v5873 = vunpack.c.l.b16 %v5484
    %v5874 = vunpack.c.h.b16 %v5484
    %v5875 = vunpack.c.l.b16 %v5485
    %v5876 = vunpack.c.h.b16 %v5485
    %v5877 = vunpack.c.l.b16 %v5486
    %v5878 = vunpack.c.h.b16 %v5486
    %v5879 = vunpack.c.l.b16 %v5487
    %v5880 = vunpack.c.h.b16 %v5487
    %v5881 = vunpack.c.l.b16 %v5488
    %v5882 = vunpack.c.h.b16 %v5488
    %v5883 = vunpack.c.l.b16 %v5489
    %v5884 = vunpack.c.h.b16 %v5489
    %v5885 = vunpack.c.l.b16 %v5490
    %v5886 = vunpack.c.h.b16 %v5490
    %v5887 = vunpack.c.l.b16 %v5491
    %v5888 = vunpack.c.h.b16 %v5491
    %v5889 = vunpack.c.l.b16 %v5492
    %v5890 = vunpack.c.h.b16 %v5492
    %v5891 = vunpack.c.l.b16 %v5493
    %v5892 = vunpack.c.h.b16 %v5493
    %v5893 = vunpack.c.l.b16 %v5494
    %v5894 = vunpack.c.h.b16 %v5494
    %v5895 = vunpack.c.l.b16 %v5495
    %v5896 = vunpack.c.h.b16 %v5495
    %v5897 = vunpack.c.l.b16 %v5496
    %v5898 = vunpack.c.h.b16 %v5496
    %v5899 = vunpack.c.l.b16 %v5497
    %v5900 = vunpack.c.h.b16 %v5497
    %v5901 = vunpack.c.l.b16 %v5498
    %v5902 = vunpack.c.h.b16 %v5498
    %v5903 = vunpack.c.l.b16 %v5499
    %v5904 = vunpack.c.h.b16 %v5499
    %v5905 = vunpack.c.l.b16 %v5500
    %v5906 = vunpack.c.h.b16 %v5500
    %v5907 = vunpack.c.l.b16 %v5501
    %v5908 = vunpack.c.h.b16 %v5501
    %v5909 = vunpack.c.l.b16 %v5502
    %v5910 = vunpack.c.h.b16 %v5502
    %v5911 = vunpack.c.l.b16 %v5503
    %v5912 = vunpack.c.h.b16 %v5503
    %v5913 = vunpack.c.l.b16 %v5504
    %v5914 = vunpack.c.h.b16 %v5504
    %v5915 = vunpack.c.l.b16 %v5505
    %v5916 = vunpack.c.h.b16 %v5505
    %v5917 = vunpack.c.l.b16 %v5506
    %v5918 = vunpack.c.h.b16 %v5506
    %v5919 = vunpack.c.l.b16 %v5507
    %v5920 = vunpack.c.h.b16 %v5507
    %v5921 = vunpack.c.l.b16 %v5508
    %v5922 = vunpack.c.h.b16 %v5508
    %v5923 = vunpack.c.l.b16 %v5509
    %v5924 = vunpack.c.h.b16 %v5509
    %v5925 = vunpack.c.l.b16 %v5510
    %v5926 = vunpack.c.h.b16 %v5510
    %v5927 = vunpack.c.l.b16 %v5511
    %v5928 = vunpack.c.h.b16 %v5511
    %v5929 = vunpack.c.l.b16 %v5512
    %v5930 = vunpack.c.h.b16 %v5512
    %v5931 = vunpack.c.l.b16 %v5513
    %v5932 = vunpack.c.h.b16 %v5513
    %v5933 = vunpack.c.l.b16 %v5514
    %v5934 = vunpack.c.h.b16 %v5514
    %v5935 = vunpack.c.l.b16 %v5515
    %v5936 = vunpack.c.h.b16 %v5515
    %v5937 = vunpack.c.l.b16 %v5516
    %v5938 = vunpack.c.h.b16 %v5516
    %v5939 = vunpack.c.l.b16 %v5517
    %v5940 = vunpack.c.h.b16 %v5517
    %v5941 = vunpack.c.l.b16 %v5518
    %v5942 = vunpack.c.h.b16 %v5518
    %v5943 = vunpack.c.l.b16 %v5519
    %v5944 = vunpack.c.h.b16 %v5519
    %v5945 = vunpack.c.l.b16 %v5520
    %v5946 = vunpack.c.h.b16 %v5520
    %v5947 = vunpack.c.l.b16 %v5521
    %v5948 = vunpack.c.h.b16 %v5521
    %v5949 = vunpack.c.l.b16 %v5522
    %v5950 = vunpack.c.h.b16 %v5522
    %v5951 = vunpack.c.l.b16 %v5523
    %v5952 = vunpack.c.h.b16 %v5523
    %v5953 = vunpack.c.l.b16 %v5524
    %v5954 = vunpack.c.h.b16 %v5524
    %v5955 = vunpack.c.l.b16 %v5525
    %v5956 = vunpack.c.h.b16 %v5525
    %v5957 = vunpack.c.l.b16 %v5526
    %v5958 = vunpack.c.h.b16 %v5526
    %v5959 = vunpack.c.l.b16 %v5527
    %v5960 = vunpack.c.h.b16 %v5527
    %v5961 = vpack.c.b16 %v5691, %v5673
    %v5962 = vpack.c.b16 %v5692, %v5674
    %v5963 = vpack.c.b16 %v5693, %v5675
    %v5964 = vpack.c.b16 %v5694, %v5676
    %v5965 = vpack.c.b16 %v5695, %v5677
    %v5966 = vpack.c.b16 %v5696, %v5678
    %v5967 = vpack.c.b16 %v5697, %v5679
    %v5968 = vpack.c.b16 %v5698, %v5680
    %v5969 = vpack.c.b16 %v5699, %v5681
    %v5970 = vpack.c.b16 %v5700, %v5682
    %v5971 = vpack.c.b16 %v5701, %v5683
    %v5972 = vpack.c.b16 %v5702, %v5684
    %v5973 = vpack.c.b16 %v5703, %v5685
    %v5974 = vpack.c.b16 %v5704, %v5686
    %v5975 = vpack.c.b16 %v5705, %v5687
    %v5976 = vpack.c.b16 %v5706, %v5688
    %v5977 = vpack.c.b16 %v5707, %v5689
    %v5978 = vpack.c.b16 %v5708, %v5690
    %v5979 = vpack.c.b16 %v5727, %v5709
    %v5980 = vpack.c.b16 %v5728, %v5710
    %v5981 = vpack.c.b16 %v5729, %v5711
    %v5982 = vpack.c.b16 %v5730, %v5712
    %v5983 = vpack.c.b16 %v5731, %v5713
    %v5984 = vpack.c.b16 %v5732, %v5714
    %v5985 = vpack.c.b16 %v5733, %v5715
    %v5986 = vpack.c.b16 %v5734, %v5716
    %v5987 = vpack.c.b16 %v5735, %v5717
    %v5988 = vpack.c.b16 %v5736, %v5718
    %v5989 = vpack.c.b16 %v5737, %v5719
    %v5990 = vpack.c.b16 %v5738, %v5720
    %v5991 = vpack.c.b16 %v5739, %v5721
    %v5992 = vpack.c.b16 %v5740, %v5722
    %v5993 = vpack.c.b16 %v5741, %v5723
    %v5994 = vpack.c.b16 %v5742, %v5724
    %v5995 = vpack.c.b16 %v5743, %v5725
    %v5996 = vpack.c.b16 %v5744, %v5726
    %v5997 = vpack.c.b16 %v5763, %v5745
    %v5998 = vpack.c.b16 %v5764, %v5746
    %v5999 = vpack.c.b16 %v5765, %v5747
    %v6000 = vpack.c.b16 %v5766, %v5748
    %v6001 = vpack.c.b16 %v5767, %v5749
    %v6002 = vpack.c.b16 %v5768, %v5750
    %v6003 = vpack.c.b16 %v5769, %v5751
    %v6004 = vpack.c.b16 %v5770, %v5752
    %v6005 = vpack.c.b16 %v5771, %v5753
    %v6006 = vpack.c.b16 %v5772, %v5754
    %v6007 = vpack.c.b16 %v5773, %v5755
    %v6008 = vpack.c.b16 %v5774, %v5756
    %v6009 = vpack.c.b16 %v5775, %v5757
    %v6010 = vpack.c.b16 %v5776, %v5758
    %v6011 = vpack.c.b16 %v5777, %v5759
    %v6012 = vpack.c.b16 %v5778, %v5760
    %v6013 = vpack.c.b16 %v5779, %v5761
    %v6014 = vpack.c.b16 %v5780, %v5762
    %v6015 = vpack.c.b16 %v5799, %v5781
    %v6016 = vpack.c.b16 %v5800, %v5782
    %v6017 = vpack.c.b16 %v5801, %v5783
    %v6018 = vpack.c.b16 %v5802, %v5784
    %v6019 = vpack.c.b16 %v5803, %v5785
    %v6020 = vpack.c.b16 %v5804, %v5786
    %v6021 = vpack.c.b16 %v5805, %v5787
    %v6022 = vpack.c.b16 %v5806, %v5788
    %v6023 = vpack.c.b16 %v5807, %v5789
    %v6024 = vpack.c.b16 %v5808, %v5790
    %v6025 = vpack.c.b16 %v5809, %v5791
    %v6026 = vpack.c.b16 %v5810, %v5792
    %v6027 = vpack.c.b16 %v5811, %v5793
    %v6028 = vpack.c.b16 %v5812, %v5794
    %v6029 = vpack.c.b16 %v5813, %v5795
    %v6030 = vpack.c.b16 %v5814, %v5796
    %v6031 = vpack.c.b16 %v5815, %v5797
    %v6032 = vpack.c.b16 %v5816, %v5798
    %v6033 = vpack.c.b16 %v5835, %v5817
    %v6034 = vpack.c.b16 %v5836, %v5818
    %v6035 = vpack.c.b16 %v5837, %v5819
    %v6036 = vpack.c.b16 %v5838, %v5820
    %v6037 = vpack.c.b16 %v5839, %v5821
    %v6038 = vpack.c.b16 %v5840, %v5822
    %v6039 = vpack.c.b16 %v5841, %v5823
    %v6040 = vpack.c.b16 %v5842, %v5824
    %v6041 = vpack.c.b16 %v5843, %v5825
    %v6042 = vpack.c.b16 %v5844, %v5826
    %v6043 = vpack.c.b16 %v5845, %v5827
    %v6044 = vpack.c.b16 %v5846, %v5828
    %v6045 = vpack.c.b16 %v5847, %v5829
    %v6046 = vpack.c.b16 %v5848, %v5830
    %v6047 = vpack.c.b16 %v5849, %v5831
    %v6048 = vpack.c.b16 %v5850, %v5832
    %v6049 = vpack.c.b16 %v5851, %v5833
    %v6050 = vpack.c.b16 %v5852, %v5834
    %v6051 = vpack.c.b16 %v5871, %v5853
    %v6052 = vpack.c.b16 %v5872, %v5854
    %v6053 = vpack.c.b16 %v5873, %v5855
    %v6054 = vpack.c.b16 %v5874, %v5856
    %v6055 = vpack.c.b16 %v5875, %v5857
    %v6056 = vpack.c.b16 %v5876, %v5858
    %v6057 = vpack.c.b16 %v5877, %v5859
    %v6058 = vpack.c.b16 %v5878, %v5860
    %v6059 = vpack.c.b16 %v5879, %v5861
    %v6060 = vpack.c.b16 %v5880, %v5862
    %v6061 = vpack.c.b16 %v5881, %v5863
    %v6062 = vpack.c.b16 %v5882, %v5864
    %v6063 = vpack.c.b16 %v5883, %v5865
    %v6064 = vpack.c.b16 %v5884, %v5866
    %v6065 = vpack.c.b16 %v5885, %v5867
    %v6066 = vpack.c.b16 %v5886, %v5868
    %v6067 = vpack.c.b16 %v5887, %v5869
    %v6068 = vpack.c.b16 %v5888, %v5870
    %v6069 = vpack.c.b16 %v5907, %v5889
    %v6070 = vpack.c.b16 %v5908, %v5890
    %v6071 = vpack.c.b16 %v5909, %v5891
    %v6072 = vpack.c.b16 %v5910, %v5892
    %v6073 = vpack.c.b16 %v5911, %v5893
    %v6074 = vpack.c.b16 %v5912, %v5894
    %v6075 = vpack.c.b16 %v5913, %v5895
    %v6076 = vpack.c.b16 %v5914, %v5896
    %v6077 = vpack.c.b16 %v5915, %v5897
    %v6078 = vpack.c.b16 %v5916, %v5898
    %v6079 = vpack.c.b16 %v5917, %v5899
    %v6080 = vpack.c.b16 %v5918, %v5900
    %v6081 = vpack.c.b16 %v5919, %v5901
    %v6082 = vpack.c.b16 %v5920, %v5902
    %v6083 = vpack.c.b16 %v5921, %v5903
    %v6084 = vpack.c.b16 %v5922, %v5904
    %v6085 = vpack.c.b16 %v5923, %v5905
    %v6086 = vpack.c.b16 %v5924, %v5906
    %v6087 = vpack.c.b16 %v5943, %v5925
    %v6088 = vpack.c.b16 %v5944, %v5926
    %v6089 = vpack.c.b16 %v5945, %v5927
    %v6090 = vpack.c.b16 %v5946, %v5928
    %v6091 = vpack.c.b16 %v5947, %v5929
    %v6092 = vpack.c.b16 %v5948, %v5930
    %v6093 = vpack.c.b16 %v5949, %v5931
    %v6094 = vpack.c.b16 %v5950, %v5932
    %v6095 = vpack.c.b16 %v5951, %v5933
    %v6096 = vpack.c.b16 %v5952, %v5934
    %v6097 = vpack.c.b16 %v5953, %v5935
    %v6098 = vpack.c.b16 %v5954, %v5936
    %v6099 = vpack.c.b16 %v5955, %v5937
    %v6100 = vpack.c.b16 %v5956, %v5938
    %v6101 = vpack.c.b16 %v5957, %v5939
    %v6102 = vpack.c.b16 %v5958, %v5940
    %v6103 = vpack.c.b16 %v5959, %v5941
    %v6104 = vpack.c.b16 %v5960, %v5942
    %6249 = vmatprep.subr.bf16.mxu0 %v5962
    %6250 = vmatpush1.bf16.msra.mxu0 %v5961
    %6251 = vmatprep.subr.bf16.mxu0 %v5980
    %6252 = vmatpush1.bf16.msra.mxu0 %v5979
    %6253 = vmatprep.subr.bf16.mxu0 %v5998
    %6254 = vmatpush1.bf16.msra.mxu0 %v5997
    %6255 = vmatprep.subr.bf16.mxu0 %v6016
    %6256 = vmatpush1.bf16.msra.mxu0 %v6015
    %6257 = vmatprep.subr.bf16.mxu0 %v6034
    %6258 = vmatpush1.bf16.msra.mxu0 %v6033
    %6259 = vmatprep.subr.bf16.mxu0 %v6052
    %6260 = vmatpush1.bf16.msra.mxu0 %v6051
    %6261 = vmatprep.subr.bf16.mxu0 %v6070
    %6262 = vmatpush1.bf16.msra.mxu0 %v6069
    %6263 = vmatprep.subr.bf16.mxu0 %v6088
    %6264 = vmatpush1.bf16.msra.mxu0 %v6087
    %6265 = vmatprep.subr.bf16.mxu0 0
    %6266 = vmatpush1.bf16.msra.mxu0 0
    %6267 = vmatprep.subr.bf16.mxu0 0
    %6268 = vmatpush1.bf16.msra.mxu0 0
    %6269 = vmatprep.subr.bf16.mxu0 0
    %6270 = vmatpush1.bf16.msra.mxu0 0
    %6271 = vmatprep.subr.bf16.mxu0 0
    %6272 = vmatpush1.bf16.msra.mxu0 0
    %6273 = vmatprep.subr.bf16.mxu0 0
    %6274 = vmatpush1.bf16.msra.mxu0 0
    %6275 = vmatprep.subr.bf16.mxu0 0
    %6276 = vmatpush1.bf16.msra.mxu0 0
    %6277 = vmatprep.subr.bf16.mxu0 0
    %6278 = vmatpush1.bf16.msra.mxu0 0
    %6279 = vmatprep.subr.bf16.mxu0 0
    %6280 = vmatpush1.bf16.msra.mxu0 0
    %6281 = vmatprep.mubr.bf16.mxu0 0
    %6282 = vmatmul.mubr.bf16.gmra.mrb[0].mxu0 %v5382
    %v6283 = vpop.f32.mrb[0].mxu0
    %v6284 = vadd.f32 0.0, %v6283
    %v6285 = vpop.f32.mrb[0].mxu0
    %v6286 = vadd.f32 0.0, %v6285
    %v6287 = vpop.f32.mrb[0].mxu0
    %v6288 = vadd.f32 0.0, %v6287
    %v6289 = vpop.f32.mrb[0].mxu0
    %v6290 = vadd.f32 0.0, %v6289
    %6291 = vmatprep.mubr.bf16.mxu0 0
    %6292 = vmatmul.mubr.bf16.gmra.mrb[0].mxu0 %v5383
    %v6293 = vpop.f32.mrb[0].mxu0
    %v6294 = vadd.f32 0.0, %v6293
    %v6295 = vpop.f32.mrb[0].mxu0
    %v6296 = vadd.f32 0.0, %v6295
    %v6297 = vpop.f32.mrb[0].mxu0
    %v6298 = vadd.f32 0.0, %v6297
    %v6299 = vpop.f32.mrb[0].mxu0
    %v6300 = vadd.f32 0.0, %v6299
    %6301 = vdwg.mxu0
    %6302 = vmatprep.subr.bf16.mxu0 %v5964
    %6303 = vmatpush1.bf16.msra.mxu0 %v5963
    %6304 = vmatprep.subr.bf16.mxu0 %v5982
    %6305 = vmatpush1.bf16.msra.mxu0 %v5981
    %6306 = vmatprep.subr.bf16.mxu0 %v6000
    %6307 = vmatpush1.bf16.msra.mxu0 %v5999
    %6308 = vmatprep.subr.bf16.mxu0 %v6018
    %6309 = vmatpush1.bf16.msra.mxu0 %v6017
    %6310 = vmatprep.subr.bf16.mxu0 %v6036
    %6311 = vmatpush1.bf16.msra.mxu0 %v6035
    %6312 = vmatprep.subr.bf16.mxu0 %v6054
    %6313 = vmatpush1.bf16.msra.mxu0 %v6053
    %6314 = vmatprep.subr.bf16.mxu0 %v6072
    %6315 = vmatpush1.bf16.msra.mxu0 %v6071
    %6316 = vmatprep.subr.bf16.mxu0 %v6090
    %6317 = vmatpush1.bf16.msra.mxu0 %v6089
    %6318 = vmatprep.subr.bf16.mxu0 0
    %6319 = vmatpush1.bf16.msra.mxu0 0
    %6320 = vmatprep.subr.bf16.mxu0 0
    %6321 = vmatpush1.bf16.msra.mxu0 0
    %6322 = vmatprep.subr.bf16.mxu0 0
    %6323 = vmatpush1.bf16.msra.mxu0 0
    %6324 = vmatprep.subr.bf16.mxu0 0
    %6325 = vmatpush1.bf16.msra.mxu0 0
    %6326 = vmatprep.subr.bf16.mxu0 0
    %6327 = vmatpush1.bf16.msra.mxu0 0
    %6328 = vmatprep.subr.bf16.mxu0 0
    %6329 = vmatpush1.bf16.msra.mxu0 0
    %6330 = vmatprep.subr.bf16.mxu0 0
    %6331 = vmatpush1.bf16.msra.mxu0 0
    %6332 = vmatprep.subr.bf16.mxu0 0
    %6333 = vmatpush1.bf16.msra.mxu0 0
    %6334 = vmatprep.mubr.bf16.mxu0 0
    %6335 = vmatmul.mubr.bf16.gmra.mrb[0].mxu0 %v5382
    %v6336 = vpop.f32.mrb[0].mxu0
    %v6337 = vadd.f32 0.0, %v6336
    %v6338 = vpop.f32.mrb[0].mxu0
    %v6339 = vadd.f32 0.0, %v6338
    %v6340 = vpop.f32.mrb[0].mxu0
    %v6341 = vadd.f32 0.0, %v6340
    %v6342 = vpop.f32.mrb[0].mxu0
    %v6343 = vadd.f32 0.0, %v6342
    %6344 = vmatprep.mubr.bf16.mxu0 0
    %6345 = vmatmul.mubr.bf16.gmra.mrb[0].mxu0 %v5383
    %v6346 = vpop.f32.mrb[0].mxu0
    %v6347 = vadd.f32 0.0, %v6346
    %v6348 = vpop.f32.mrb[0].mxu0
    %v6349 = vadd.f32 0.0, %v6348
    %v6350 = vpop.f32.mrb[0].mxu0
    %v6351 = vadd.f32 0.0, %v6350
    %v6352 = vpop.f32.mrb[0].mxu0
    %v6353 = vadd.f32 0.0, %v6352
    %6354 = vdwg.mxu0
    %6355 = vmatprep.subr.bf16.mxu0 %v5966
    %6356 = vmatpush1.bf16.msra.mxu0 %v5965
    %6357 = vmatprep.subr.bf16.mxu0 %v5984
    %6358 = vmatpush1.bf16.msra.mxu0 %v5983
    %6359 = vmatprep.subr.bf16.mxu0 %v6002
    %6360 = vmatpush1.bf16.msra.mxu0 %v6001
    %6361 = vmatprep.subr.bf16.mxu0 %v6020
    %6362 = vmatpush1.bf16.msra.mxu0 %v6019
    %6363 = vmatprep.subr.bf16.mxu0 %v6038
    %6364 = vmatpush1.bf16.msra.mxu0 %v6037
    %6365 = vmatprep.subr.bf16.mxu0 %v6056
    %6366 = vmatpush1.bf16.msra.mxu0 %v6055
    %6367 = vmatprep.subr.bf16.mxu0 %v6074
    %6368 = vmatpush1.bf16.msra.mxu0 %v6073
    %6369 = vmatprep.subr.bf16.mxu0 %v6092
    %6370 = vmatpush1.bf16.msra.mxu0 %v6091
    %6371 = vmatprep.subr.bf16.mxu0 0
    %6372 = vmatpush1.bf16.msra.mxu0 0
    %6373 = vmatprep.subr.bf16.mxu0 0
    %6374 = vmatpush1.bf16.msra.mxu0 0
    %6375 = vmatprep.subr.bf16.mxu0 0
    %6376 = vmatpush1.bf16.msra.mxu0 0
    %6377 = vmatprep.subr.bf16.mxu0 0
    %6378 = vmatpush1.bf16.msra.mxu0 0
    %6379 = vmatprep.subr.bf16.mxu0 0
    %6380 = vmatpush1.bf16.msra.mxu0 0
    %6381 = vmatprep.subr.bf16.mxu0 0
    %6382 = vmatpush1.bf16.msra.mxu0 0
    %6383 = vmatprep.subr.bf16.mxu0 0
    %6384 = vmatpush1.bf16.msra.mxu0 0
    %6385 = vmatprep.subr.bf16.mxu0 0
    %6386 = vmatpush1.bf16.msra.mxu0 0
    %6387 = vmatprep.mubr.bf16.mxu0 0
    %6388 = vmatmul.mubr.bf16.gmra.mrb[0].mxu0 %v5382
    %v6389 = vpop.f32.mrb[0].mxu0
    %v6390 = vadd.f32 0.0, %v6389
    %v6391 = vpop.f32.mrb[0].mxu0
    %v6392 = vadd.f32 0.0, %v6391
    %v6393 = vpop.f32.mrb[0].mxu0
    %v6394 = vadd.f32 0.0, %v6393
    %v6395 = vpop.f32.mrb[0].mxu0
    %v6396 = vadd.f32 0.0, %v6395
    %6397 = vmatprep.mubr.bf16.mxu0 0
    %6398 = vmatmul.mubr.bf16.gmra.mrb[0].mxu0 %v5383
    %v6399 = vpop.f32.mrb[0].mxu0
    %v6400 = vadd.f32 0.0, %v6399
    %v6401 = vpop.f32.mrb[0].mxu0
    %v6402 = vadd.f32 0.0, %v6401
    %v6403 = vpop.f32.mrb[0].mxu0
    %v6404 = vadd.f32 0.0, %v6403
    %v6405 = vpop.f32.mrb[0].mxu0
    %v6406 = vadd.f32 0.0, %v6405
    %6407 = vdwg.mxu0
    %6408 = vmatprep.subr.bf16.mxu0 %v5968
    %6409 = vmatpush1.bf16.msra.mxu0 %v5967
    %6410 = vmatprep.subr.bf16.mxu0 %v5986
    %6411 = vmatpush1.bf16.msra.mxu0 %v5985
    %6412 = vmatprep.subr.bf16.mxu0 %v6004
    %6413 = vmatpush1.bf16.msra.mxu0 %v6003
    %6414 = vmatprep.subr.bf16.mxu0 %v6022
    %6415 = vmatpush1.bf16.msra.mxu0 %v6021
    %6416 = vmatprep.subr.bf16.mxu0 %v6040
    %6417 = vmatpush1.bf16.msra.mxu0 %v6039
    %6418 = vmatprep.subr.bf16.mxu0 %v6058
    %6419 = vmatpush1.bf16.msra.mxu0 %v6057
    %6420 = vmatprep.subr.bf16.mxu0 %v6076
    %6421 = vmatpush1.bf16.msra.mxu0 %v6075
    %6422 = vmatprep.subr.bf16.mxu0 %v6094
    %6423 = vmatpush1.bf16.msra.mxu0 %v6093
    %6424 = vmatprep.subr.bf16.mxu0 0
    %6425 = vmatpush1.bf16.msra.mxu0 0
    %6426 = vmatprep.subr.bf16.mxu0 0
    %6427 = vmatpush1.bf16.msra.mxu0 0
    %6428 = vmatprep.subr.bf16.mxu0 0
    %6429 = vmatpush1.bf16.msra.mxu0 0
    %6430 = vmatprep.subr.bf16.mxu0 0
    %6431 = vmatpush1.bf16.msra.mxu0 0
    %6432 = vmatprep.subr.bf16.mxu0 0
    %6433 = vmatpush1.bf16.msra.mxu0 0
    %6434 = vmatprep.subr.bf16.mxu0 0
    %6435 = vmatpush1.bf16.msra.mxu0 0
    %6436 = vmatprep.subr.bf16.mxu0 0
    %6437 = vmatpush1.bf16.msra.mxu0 0
    %6438 = vmatprep.subr.bf16.mxu0 0
    %6439 = vmatpush1.bf16.msra.mxu0 0
    %6440 = vmatprep.mubr.bf16.mxu0 0
    %6441 = vmatmul.mubr.bf16.gmra.mrb[0].mxu0 %v5382
    %v6442 = vpop.f32.mrb[0].mxu0
    %v6443 = vadd.f32 0.0, %v6442
    %v6444 = vpop.f32.mrb[0].mxu0
    %v6445 = vadd.f32 0.0, %v6444
    %v6446 = vpop.f32.mrb[0].mxu0
    %v6447 = vadd.f32 0.0, %v6446
    %v6448 = vpop.f32.mrb[0].mxu0
    %v6449 = vadd.f32 0.0, %v6448
    %6450 = vmatprep.mubr.bf16.mxu0 0
    %6451 = vmatmul.mubr.bf16.gmra.mrb[0].mxu0 %v5383
    %v6452 = vpop.f32.mrb[0].mxu0
    %v6453 = vadd.f32 0.0, %v6452
    %v6454 = vpop.f32.mrb[0].mxu0
    %v6455 = vadd.f32 0.0, %v6454
    %v6456 = vpop.f32.mrb[0].mxu0
    %v6457 = vadd.f32 0.0, %v6456
    %v6458 = vpop.f32.mrb[0].mxu0
    %v6459 = vadd.f32 0.0, %v6458
    %6460 = vdwg.mxu0
    %6461 = vmatprep.subr.bf16.mxu0 %v5970
    %6462 = vmatpush1.bf16.msra.mxu0 %v5969
    %6463 = vmatprep.subr.bf16.mxu0 %v5988
    %6464 = vmatpush1.bf16.msra.mxu0 %v5987
    %6465 = vmatprep.subr.bf16.mxu0 %v6006
    %6466 = vmatpush1.bf16.msra.mxu0 %v6005
    %6467 = vmatprep.subr.bf16.mxu0 %v6024
    %6468 = vmatpush1.bf16.msra.mxu0 %v6023
    %6469 = vmatprep.subr.bf16.mxu0 %v6042
    %6470 = vmatpush1.bf16.msra.mxu0 %v6041
    %6471 = vmatprep.subr.bf16.mxu0 %v6060
    %6472 = vmatpush1.bf16.msra.mxu0 %v6059
    %6473 = vmatprep.subr.bf16.mxu0 %v6078
    %6474 = vmatpush1.bf16.msra.mxu0 %v6077
    %6475 = vmatprep.subr.bf16.mxu0 %v6096
    %6476 = vmatpush1.bf16.msra.mxu0 %v6095
    %6477 = vmatprep.subr.bf16.mxu0 0
    %6478 = vmatpush1.bf16.msra.mxu0 0
    %6479 = vmatprep.subr.bf16.mxu0 0
    %6480 = vmatpush1.bf16.msra.mxu0 0
    %6481 = vmatprep.subr.bf16.mxu0 0
    %6482 = vmatpush1.bf16.msra.mxu0 0
    %6483 = vmatprep.subr.bf16.mxu0 0
    %6484 = vmatpush1.bf16.msra.mxu0 0
    %6485 = vmatprep.subr.bf16.mxu0 0
    %6486 = vmatpush1.bf16.msra.mxu0 0
    %6487 = vmatprep.subr.bf16.mxu0 0
    %6488 = vmatpush1.bf16.msra.mxu0 0
    %6489 = vmatprep.subr.bf16.mxu0 0
    %6490 = vmatpush1.bf16.msra.mxu0 0
    %6491 = vmatprep.subr.bf16.mxu0 0
    %6492 = vmatpush1.bf16.msra.mxu0 0
    %6493 = vmatprep.mubr.bf16.mxu0 0
    %6494 = vmatmul.mubr.bf16.gmra.mrb[0].mxu0 %v5382
    %v6495 = vpop.f32.mrb[0].mxu0
    %v6496 = vadd.f32 0.0, %v6495
    %v6497 = vpop.f32.mrb[0].mxu0
    %v6498 = vadd.f32 0.0, %v6497
    %v6499 = vpop.f32.mrb[0].mxu0
    %v6500 = vadd.f32 0.0, %v6499
    %v6501 = vpop.f32.mrb[0].mxu0
    %v6502 = vadd.f32 0.0, %v6501
    %6503 = vmatprep.mubr.bf16.mxu0 0
    %6504 = vmatmul.mubr.bf16.gmra.mrb[0].mxu0 %v5383
    %v6505 = vpop.f32.mrb[0].mxu0
    %v6506 = vadd.f32 0.0, %v6505
    %v6507 = vpop.f32.mrb[0].mxu0
    %v6508 = vadd.f32 0.0, %v6507
    %v6509 = vpop.f32.mrb[0].mxu0
    %v6510 = vadd.f32 0.0, %v6509
    %v6511 = vpop.f32.mrb[0].mxu0
    %v6512 = vadd.f32 0.0, %v6511
    %6513 = vdwg.mxu0
    %6514 = vmatprep.subr.bf16.mxu0 %v5972
    %6515 = vmatpush1.bf16.msra.mxu0 %v5971
    %6516 = vmatprep.subr.bf16.mxu0 %v5990
    %6517 = vmatpush1.bf16.msra.mxu0 %v5989
    %6518 = vmatprep.subr.bf16.mxu0 %v6008
    %6519 = vmatpush1.bf16.msra.mxu0 %v6007
    %6520 = vmatprep.subr.bf16.mxu0 %v6026
    %6521 = vmatpush1.bf16.msra.mxu0 %v6025
    %6522 = vmatprep.subr.bf16.mxu0 %v6044
    %6523 = vmatpush1.bf16.msra.mxu0 %v6043
    %6524 = vmatprep.subr.bf16.mxu0 %v6062
    %6525 = vmatpush1.bf16.msra.mxu0 %v6061
    %6526 = vmatprep.subr.bf16.mxu0 %v6080
    %6527 = vmatpush1.bf16.msra.mxu0 %v6079
    %6528 = vmatprep.subr.bf16.mxu0 %v6098
    %6529 = vmatpush1.bf16.msra.mxu0 %v6097
    %6530 = vmatprep.subr.bf16.mxu0 0
    %6531 = vmatpush1.bf16.msra.mxu0 0
    %6532 = vmatprep.subr.bf16.mxu0 0
    %6533 = vmatpush1.bf16.msra.mxu0 0
    %6534 = vmatprep.subr.bf16.mxu0 0
    %6535 = vmatpush1.bf16.msra.mxu0 0
    %6536 = vmatprep.subr.bf16.mxu0 0
    %6537 = vmatpush1.bf16.msra.mxu0 0
    %6538 = vmatprep.subr.bf16.mxu0 0
    %6539 = vmatpush1.bf16.msra.mxu0 0
    %6540 = vmatprep.subr.bf16.mxu0 0
    %6541 = vmatpush1.bf16.msra.mxu0 0
    %6542 = vmatprep.subr.bf16.mxu0 0
    %6543 = vmatpush1.bf16.msra.mxu0 0
    %6544 = vmatprep.subr.bf16.mxu0 0
    %6545 = vmatpush1.bf16.msra.mxu0 0
    %6546 = vmatprep.mubr.bf16.mxu0 0
    %6547 = vmatmul.mubr.bf16.gmra.mrb[0].mxu0 %v5382
    %v6548 = vpop.f32.mrb[0].mxu0
    %v6549 = vadd.f32 0.0, %v6548
    %v6550 = vpop.f32.mrb[0].mxu0
    %v6551 = vadd.f32 0.0, %v6550
    %v6552 = vpop.f32.mrb[0].mxu0
    %v6553 = vadd.f32 0.0, %v6552
    %v6554 = vpop.f32.mrb[0].mxu0
    %v6555 = vadd.f32 0.0, %v6554
    %6556 = vmatprep.mubr.bf16.mxu0 0
    %6557 = vmatmul.mubr.bf16.gmra.mrb[0].mxu0 %v5383
    %v6558 = vpop.f32.mrb[0].mxu0
    %v6559 = vadd.f32 0.0, %v6558
    %v6560 = vpop.f32.mrb[0].mxu0
    %v6561 = vadd.f32 0.0, %v6560
    %v6562 = vpop.f32.mrb[0].mxu0
    %v6563 = vadd.f32 0.0, %v6562
    %v6564 = vpop.f32.mrb[0].mxu0
    %v6565 = vadd.f32 0.0, %v6564
    %6566 = vdwg.mxu0
    %6567 = vmatprep.subr.bf16.mxu0 %v5974
    %6568 = vmatpush1.bf16.msra.mxu0 %v5973
    %6569 = vmatprep.subr.bf16.mxu0 %v5992
    %6570 = vmatpush1.bf16.msra.mxu0 %v5991
    %6571 = vmatprep.subr.bf16.mxu0 %v6010
    %6572 = vmatpush1.bf16.msra.mxu0 %v6009
    %6573 = vmatprep.subr.bf16.mxu0 %v6028
    %6574 = vmatpush1.bf16.msra.mxu0 %v6027
    %6575 = vmatprep.subr.bf16.mxu0 %v6046
    %6576 = vmatpush1.bf16.msra.mxu0 %v6045
    %6577 = vmatprep.subr.bf16.mxu0 %v6064
    %6578 = vmatpush1.bf16.msra.mxu0 %v6063
    %6579 = vmatprep.subr.bf16.mxu0 %v6082
    %6580 = vmatpush1.bf16.msra.mxu0 %v6081
    %6581 = vmatprep.subr.bf16.mxu0 %v6100
    %6582 = vmatpush1.bf16.msra.mxu0 %v6099
    %6583 = vmatprep.subr.bf16.mxu0 0
    %6584 = vmatpush1.bf16.msra.mxu0 0
    %6585 = vmatprep.subr.bf16.mxu0 0
    %6586 = vmatpush1.bf16.msra.mxu0 0
    %6587 = vmatprep.subr.bf16.mxu0 0
    %6588 = vmatpush1.bf16.msra.mxu0 0
    %6589 = vmatprep.subr.bf16.mxu0 0
    %6590 = vmatpush1.bf16.msra.mxu0 0
    %6591 = vmatprep.subr.bf16.mxu0 0
    %6592 = vmatpush1.bf16.msra.mxu0 0
    %6593 = vmatprep.subr.bf16.mxu0 0
    %6594 = vmatpush1.bf16.msra.mxu0 0
    %6595 = vmatprep.subr.bf16.mxu0 0
    %6596 = vmatpush1.bf16.msra.mxu0 0
    %6597 = vmatprep.subr.bf16.mxu0 0
    %6598 = vmatpush1.bf16.msra.mxu0 0
    %6599 = vmatprep.mubr.bf16.mxu0 0
    %6600 = vmatmul.mubr.bf16.gmra.mrb[0].mxu0 %v5382
    %v6601 = vpop.f32.mrb[0].mxu0
    %v6602 = vadd.f32 0.0, %v6601
    %v6603 = vpop.f32.mrb[0].mxu0
    %v6604 = vadd.f32 0.0, %v6603
    %v6605 = vpop.f32.mrb[0].mxu0
    %v6606 = vadd.f32 0.0, %v6605
    %v6607 = vpop.f32.mrb[0].mxu0
    %v6608 = vadd.f32 0.0, %v6607
    %6609 = vmatprep.mubr.bf16.mxu0 0
    %6610 = vmatmul.mubr.bf16.gmra.mrb[0].mxu0 %v5383
    %v6611 = vpop.f32.mrb[0].mxu0
    %v6612 = vadd.f32 0.0, %v6611
    %v6613 = vpop.f32.mrb[0].mxu0
    %v6614 = vadd.f32 0.0, %v6613
    %v6615 = vpop.f32.mrb[0].mxu0
    %v6616 = vadd.f32 0.0, %v6615
    %v6617 = vpop.f32.mrb[0].mxu0
    %v6618 = vadd.f32 0.0, %v6617
    %6619 = vdwg.mxu0
    %6620 = vmatprep.subr.bf16.mxu0 %v5976
    %6621 = vmatpush1.bf16.msra.mxu0 %v5975
    %6622 = vmatprep.subr.bf16.mxu0 %v5994
    %6623 = vmatpush1.bf16.msra.mxu0 %v5993
    %6624 = vmatprep.subr.bf16.mxu0 %v6012
    %6625 = vmatpush1.bf16.msra.mxu0 %v6011
    %6626 = vmatprep.subr.bf16.mxu0 %v6030
    %6627 = vmatpush1.bf16.msra.mxu0 %v6029
    %6628 = vmatprep.subr.bf16.mxu0 %v6048
    %6629 = vmatpush1.bf16.msra.mxu0 %v6047
    %6630 = vmatprep.subr.bf16.mxu0 %v6066
    %6631 = vmatpush1.bf16.msra.mxu0 %v6065
    %6632 = vmatprep.subr.bf16.mxu0 %v6084
    %6633 = vmatpush1.bf16.msra.mxu0 %v6083
    %6634 = vmatprep.subr.bf16.mxu0 %v6102
    %6635 = vmatpush1.bf16.msra.mxu0 %v6101
    %6636 = vmatprep.subr.bf16.mxu0 0
    %6637 = vmatpush1.bf16.msra.mxu0 0
    %6638 = vmatprep.subr.bf16.mxu0 0
    %6639 = vmatpush1.bf16.msra.mxu0 0
    %6640 = vmatprep.subr.bf16.mxu0 0
    %6641 = vmatpush1.bf16.msra.mxu0 0
    %6642 = vmatprep.subr.bf16.mxu0 0
    %6643 = vmatpush1.bf16.msra.mxu0 0
    %6644 = vmatprep.subr.bf16.mxu0 0
    %6645 = vmatpush1.bf16.msra.mxu0 0
    %6646 = vmatprep.subr.bf16.mxu0 0
    %6647 = vmatpush1.bf16.msra.mxu0 0
    %6648 = vmatprep.subr.bf16.mxu0 0
    %6649 = vmatpush1.bf16.msra.mxu0 0
    %6650 = vmatprep.subr.bf16.mxu0 0
    %6651 = vmatpush1.bf16.msra.mxu0 0
    %6652 = vmatprep.mubr.bf16.mxu0 0
    %6653 = vmatmul.mubr.bf16.gmra.mrb[0].mxu0 %v5382
    %v6654 = vpop.f32.mrb[0].mxu0
    %v6655 = vadd.f32 0.0, %v6654
    %v6656 = vpop.f32.mrb[0].mxu0
    %v6657 = vadd.f32 0.0, %v6656
    %v6658 = vpop.f32.mrb[0].mxu0
    %v6659 = vadd.f32 0.0, %v6658
    %v6660 = vpop.f32.mrb[0].mxu0
    %v6661 = vadd.f32 0.0, %v6660
    %6662 = vmatprep.mubr.bf16.mxu0 0
    %6663 = vmatmul.mubr.bf16.gmra.mrb[0].mxu0 %v5383
    %v6664 = vpop.f32.mrb[0].mxu0
    %v6665 = vadd.f32 0.0, %v6664
    %v6666 = vpop.f32.mrb[0].mxu0
    %v6667 = vadd.f32 0.0, %v6666
    %v6668 = vpop.f32.mrb[0].mxu0
    %v6669 = vadd.f32 0.0, %v6668
    %v6670 = vpop.f32.mrb[0].mxu0
    %v6671 = vadd.f32 0.0, %v6670
    %6672 = vdwg.mxu0
    %6673 = vmatprep.subr.bf16.mxu0 %v5978
    %6674 = vmatpush1.bf16.msra.mxu0 %v5977
    %6675 = vmatprep.subr.bf16.mxu0 %v5996
    %6676 = vmatpush1.bf16.msra.mxu0 %v5995
    %6677 = vmatprep.subr.bf16.mxu0 %v6014
    %6678 = vmatpush1.bf16.msra.mxu0 %v6013
    %6679 = vmatprep.subr.bf16.mxu0 %v6032
    %6680 = vmatpush1.bf16.msra.mxu0 %v6031
    %6681 = vmatprep.subr.bf16.mxu0 %v6050
    %6682 = vmatpush1.bf16.msra.mxu0 %v6049
    %6683 = vmatprep.subr.bf16.mxu0 %v6068
    %6684 = vmatpush1.bf16.msra.mxu0 %v6067
    %6685 = vmatprep.subr.bf16.mxu0 %v6086
    %6686 = vmatpush1.bf16.msra.mxu0 %v6085
    %6687 = vmatprep.subr.bf16.mxu0 %v6104
    %6688 = vmatpush1.bf16.msra.mxu0 %v6103
    %6689 = vmatprep.subr.bf16.mxu0 0
    %6690 = vmatpush1.bf16.msra.mxu0 0
    %6691 = vmatprep.subr.bf16.mxu0 0
    %6692 = vmatpush1.bf16.msra.mxu0 0
    %6693 = vmatprep.subr.bf16.mxu0 0
    %6694 = vmatpush1.bf16.msra.mxu0 0
    %6695 = vmatprep.subr.bf16.mxu0 0
    %6696 = vmatpush1.bf16.msra.mxu0 0
    %6697 = vmatprep.subr.bf16.mxu0 0
    %6698 = vmatpush1.bf16.msra.mxu0 0
    %6699 = vmatprep.subr.bf16.mxu0 0
    %6700 = vmatpush1.bf16.msra.mxu0 0
    %6701 = vmatprep.subr.bf16.mxu0 0
    %6702 = vmatpush1.bf16.msra.mxu0 0
    %6703 = vmatprep.subr.bf16.mxu0 0
    %6704 = vmatpush1.bf16.msra.mxu0 0
    %6705 = vmatprep.mubr.bf16.mxu0 0
    %6706 = vmatmul.mubr.bf16.gmra.mrb[0].mxu0 %v5382
    %v6707 = vpop.f32.mrb[0].mxu0
    %v6708 = vadd.f32 0.0, %v6707
    %v6709 = vpop.f32.mrb[0].mxu0
    %v6710 = vadd.f32 0.0, %v6709
    %v6711 = vpop.f32.mrb[0].mxu0
    %v6712 = vadd.f32 0.0, %v6711
    %v6713 = vpop.f32.mrb[0].mxu0
    %v6714 = vadd.f32 0.0, %v6713
    %6715 = vmatprep.mubr.bf16.mxu0 0
    %6716 = vmatmul.mubr.bf16.gmra.mrb[0].mxu0 %v5383
    %v6717 = vpop.f32.mrb[0].mxu0
    %v6718 = vadd.f32 0.0, %v6717
    %v6719 = vpop.f32.mrb[0].mxu0
    %v6720 = vadd.f32 0.0, %v6719
    %v6721 = vpop.f32.mrb[0].mxu0
    %v6722 = vadd.f32 0.0, %v6721
    %v6723 = vpop.f32.mrb[0].mxu0
    %v6724 = vadd.f32 0.0, %v6723
    %6725 = vdwg.mxu0
    %v6726 = vpack.c.bf16 %v6288, %v6284
    %v6727 = vpack.c.bf16 %v6290, %v6286
    %v6728 = vpack.c.bf16 %v6298, %v6294
    %v6729 = vpack.c.bf16 %v6300, %v6296
    %v6730 = vpack.c.bf16 %v6341, %v6337
    %v6731 = vpack.c.bf16 %v6343, %v6339
    %v6732 = vpack.c.bf16 %v6351, %v6347
    %v6733 = vpack.c.bf16 %v6353, %v6349
    %v6734 = vpack.c.bf16 %v6394, %v6390
    %v6735 = vpack.c.bf16 %v6396, %v6392
    %v6736 = vpack.c.bf16 %v6404, %v6400
    %v6737 = vpack.c.bf16 %v6406, %v6402
    %v6738 = vpack.c.bf16 %v6447, %v6443
    %v6739 = vpack.c.bf16 %v6449, %v6445
    %v6740 = vpack.c.bf16 %v6457, %v6453
    %v6741 = vpack.c.bf16 %v6459, %v6455
    %v6742 = vpack.c.bf16 %v6500, %v6496
    %v6743 = vpack.c.bf16 %v6502, %v6498
    %v6744 = vpack.c.bf16 %v6510, %v6506
    %v6745 = vpack.c.bf16 %v6512, %v6508
    %v6746 = vpack.c.bf16 %v6553, %v6549
    %v6747 = vpack.c.bf16 %v6555, %v6551
    %v6748 = vpack.c.bf16 %v6563, %v6559
    %v6749 = vpack.c.bf16 %v6565, %v6561
    %v6750 = vpack.c.bf16 %v6606, %v6602
    %v6751 = vpack.c.bf16 %v6608, %v6604
    %v6752 = vpack.c.bf16 %v6616, %v6612
    %v6753 = vpack.c.bf16 %v6618, %v6614
    %v6754 = vpack.c.bf16 %v6659, %v6655
    %v6755 = vpack.c.bf16 %v6661, %v6657
    %v6756 = vpack.c.bf16 %v6669, %v6665
    %v6757 = vpack.c.bf16 %v6671, %v6667
    %v6758 = vpack.c.bf16 %v6712, %v6708
    %v6759 = vpack.c.bf16 %v6714, %v6710
    %v6760 = vpack.c.bf16 %v6722, %v6718
    %v6761 = vpack.c.bf16 %v6724, %v6720
    %s6762 = scalar_lea.vmem %s13, 640
    %v6763 = vld [vmem:[%s6762] sm:$0x1]
    %6765 = vset.pattern.permute.xlu0 0
    %6766 = vperm.xlu0 %6765, %v6763
    %v6767 = vpop.permute.xlu0 %6766
    %v6771 = vunpack.c.l.s4 1966171168
    %v6772 = vunpack.c.0.s8 %v6771
    %v6773 = vlaneseq
    %v6774 = vshrl.u32 %v6773, 7
    %v6775 = vsub.s32 %v6772, %v6774
    %v6776 = vrot.slane %v5528, %v6775
    %v6777 = vcombine.high %v6776, %v6776
    %v6779 = vunpack.c.l.s4 1966171168
    %v6780 = vunpack.c.0.s8 %v6779
    %v6781 = vlaneseq
    %v6782 = vshrl.u32 %v6781, 7
    %v6783 = vsub.s32 %v6780, %v6782
    %v6784 = vrot.slane %v6776, %v6783
    %v6786 = vunpack.c.l.s4 1966171168
    %v6787 = vunpack.c.0.s8 %v6786
    %v6788 = vlaneseq
    %v6789 = vshrl.u32 %v6788, 7
    %v6790 = vsub.s32 %v6787, %v6789
    %v6791 = vrot.slane %v6777, %v6790
    %v6792 = vcombine.high %v6784, %v6784
    %v6796 = vsel %vm2952, %v6792, 0
    %6798 = vmatprep.subr.bf16.mxu0 %v6727
    %6799 = vmatpush1.bf16.msra.mxu0 %v6726
    %6800 = vmatprep.subr.bf16.mxu0 %v6729
    %6801 = vmatpush1.bf16.msra.mxu0 %v6728
    %6802 = vmatprep.subr.bf16.mxu0 %v6731
    %6803 = vmatpush1.bf16.msra.mxu0 %v6730
    %6804 = vmatprep.subr.bf16.mxu0 %v6733
    %6805 = vmatpush1.bf16.msra.mxu0 %v6732
    %6806 = vmatprep.subr.bf16.mxu0 %v6735
    %6807 = vmatpush1.bf16.msra.mxu0 %v6734
    %6808 = vmatprep.subr.bf16.mxu0 %v6737
    %6809 = vmatpush1.bf16.msra.mxu0 %v6736
    %6810 = vmatprep.subr.bf16.mxu0 %v6739
    %6811 = vmatpush1.bf16.msra.mxu0 %v6738
    %6812 = vmatprep.subr.bf16.mxu0 %v6741
    %6813 = vmatpush1.bf16.msra.mxu0 %v6740
    %6814 = vmatprep.subr.bf16.mxu0 %v6743
    %6815 = vmatpush1.bf16.msra.mxu0 %v6742
    %6816 = vmatprep.subr.bf16.mxu0 %v6745
    %6817 = vmatpush1.bf16.msra.mxu0 %v6744
    %6818 = vmatprep.subr.bf16.mxu0 %v6747
    %6819 = vmatpush1.bf16.msra.mxu0 %v6746
    %6820 = vmatprep.subr.bf16.mxu0 %v6749
    %6821 = vmatpush1.bf16.msra.mxu0 %v6748
    %6822 = vmatprep.subr.bf16.mxu0 %v6751
    %6823 = vmatpush1.bf16.msra.mxu0 %v6750
    %6824 = vmatprep.subr.bf16.mxu0 %v6753
    %6825 = vmatpush1.bf16.msra.mxu0 %v6752
    %6826 = vmatprep.subr.bf16.mxu0 %v6755
    %6827 = vmatpush1.bf16.msra.mxu0 %v6754
    %6828 = vmatprep.subr.bf16.mxu0 %v6757
    %6829 = vmatpush1.bf16.msra.mxu0 %v6756
    %6830 = vmatprep.mubr.bf16.mxu0 %v6791
    %6831 = vmatmul.mubr.bf16.gmra.mrb[0].mxu0 %v6784
    %v6832 = vpop.f32.mrb[0].mxu0
    %v6833 = vadd.f32 %v6767, %v6832
    %v6834 = vpop.f32.mrb[0].mxu0
    %v6835 = vadd.f32 %v6767, %v6834
    %v6836 = vpop.f32.mrb[0].mxu0
    %v6837 = vpop.f32.mrb[0].mxu0
    %6838 = vdwg.mxu0
    %6839 = vmatprep.subr.bf16.mxu0 %v6759
    %6840 = vmatpush1.bf16.msra.mxu0 %v6758
    %6841 = vmatprep.subr.bf16.mxu0 %v6761
    %6842 = vmatpush1.bf16.msra.mxu0 %v6760
    %6843 = vmatprep.subr.bf16.mxu0 0
    %6844 = vmatpush1.bf16.msra.mxu0 0
    %6845 = vmatprep.subr.bf16.mxu0 0
    %6846 = vmatpush1.bf16.msra.mxu0 0
    %6847 = vmatprep.subr.bf16.mxu0 0
    %6848 = vmatpush1.bf16.msra.mxu0 0
    %6849 = vmatprep.subr.bf16.mxu0 0
    %6850 = vmatpush1.bf16.msra.mxu0 0
    %6851 = vmatprep.subr.bf16.mxu0 0
    %6852 = vmatpush1.bf16.msra.mxu0 0
    %6853 = vmatprep.subr.bf16.mxu0 0
    %6854 = vmatpush1.bf16.msra.mxu0 0
    %6855 = vmatprep.subr.bf16.mxu0 0
    %6856 = vmatpush1.bf16.msra.mxu0 0
    %6857 = vmatprep.subr.bf16.mxu0 0
    %6858 = vmatpush1.bf16.msra.mxu0 0
    %6859 = vmatprep.subr.bf16.mxu0 0
    %6860 = vmatpush1.bf16.msra.mxu0 0
    %6861 = vmatprep.subr.bf16.mxu0 0
    %6862 = vmatpush1.bf16.msra.mxu0 0
    %6863 = vmatprep.subr.bf16.mxu0 0
    %6864 = vmatpush1.bf16.msra.mxu0 0
    %6865 = vmatprep.subr.bf16.mxu0 0
    %6866 = vmatpush1.bf16.msra.mxu0 0
    %6867 = vmatprep.subr.bf16.mxu0 0
    %6868 = vmatpush1.bf16.msra.mxu0 0
    %6869 = vmatprep.subr.bf16.mxu0 0
    %6870 = vmatpush1.bf16.msra.mxu0 0
    %6871 = vmatprep.mubr.bf16.mxu0 0
    %6872 = vmatmul.mubr.bf16.gmra.mrb[0].mxu0 %v6796
    %v6873 = vpop.f32.mrb[0].mxu0
    %v6874 = vadd.f32 %v6833, %v6873
    %v6875 = vpop.f32.mrb[0].mxu0
    %v6876 = vadd.f32 %v6835, %v6875
    %v6877 = vpop.f32.mrb[0].mxu0
    %v6878 = vpop.f32.mrb[0].mxu0
    %6879 = vdwg.mxu0
    %v6880 = vtanh.pop %v6874
    %v6881 = vtanh.pop %v6876
    %v6884 = vcombine.low %v6880, %v6881
    %v6886 = vunpack.c.l.s4 1966171168
    %v6887 = vunpack.c.0.s8 %v6886
    %v6888 = vlaneseq
    %v6889 = vshrl.u32 %v6888, 7
    %v6890 = vsub.s32 %v6887, %v6889
    %v6891 = vrot.slane %v6884, %v6890
    %v6893 = vunpack.c.l.s4 1966171168
    %v6894 = vunpack.c.0.s8 %v6893
    %v6895 = vlaneseq
    %v6896 = vshrl.u32 %v6895, 7
    %v6897 = vsub.s32 %v6894, %v6896
    %v6898 = vrot.slane %v6891, %v6897
    %v6900 = vlaneseq
    %vm6901 = vcmp.ge.s32.totalorder %v6900, 0
    %vm6902 = vcmp.lt.s32.totalorder %v6900, 256
    %vm6903 = vmand %vm6901, %vm6902
    %6904 = vst.msk [vmem:[#allocation2] sm:$0x3] %vm6903, %v6898
    // Predicated region
    $region58: #{autoencoder_forward.1} parent=1 // pred_check
      _
    $region59: #{autoencoder_forward.1} parent=1 // pred_check_branch
      %6906 = sbr.rel (0) target = $region61
    $region60: #{autoencoder_forward.1} parent=1 // pred_region
      %s6908 = ssub.s32 32, 32
      %6909 = vsyncadd [#allocation3], %s6908
      %s6911 = sshll.u32 [#allocation2], 4
      %s6912 = int_to_ptr.vmem [resolvable:$true] %s6911
      %6914 = dma.vmem_to_hbm [thread:$0]  %s6912, 32, %s14, [#allocation3]
    $region61: #{autoencoder_forward.1} parent=1 // pred_fallthru
      _
    // Predicated region
    $region62: #{autoencoder_forward.1} parent=1 // pred_check
      _
    $region63: #{autoencoder_forward.1} parent=1 // pred_check_branch
      %6916 = sbr.rel (0) target = $region65
    $region64: #{autoencoder_forward.1} parent=1 // pred_region
      %6917 = dma.done [#allocation3], 32
    $region65: #{autoencoder_forward.1} parent=1 // pred_fallthru
      _
    %6918 = vsyncpa [#allocation3], 1

</llo_original>
